<compile_context>
chip_gen: v5e
topology: v5e:2x2
jax: 0.10.0
libtpu: 0.0.40
codegen_flags: <defaults>
</compile_context>

<pallas_src>
import functools

import numpy as np
import jax
import jax.numpy as jnp
from jax.experimental import pallas as pl
from jax.experimental.pallas import tpu as pltpu


_CONV_CFG = ((8, 4, 32), (4, 2, 64), (3, 1, 64))   # (kernel, stride, cout)
_HIDDEN = 512
_LOGIT_PAD = 128                                   # lane-dense actor width
_OUT_W = 2 * _LOGIT_PAD                            # packed [actor | critic]
_NEG_INF = -1e30
_B_TILE = 8                                        # images per grid step


def _conv_out(size, k, s):
    return (size - k) // s + 1


# ----------------------------------------------------------------------------
# Fused forward kernel: 3 convs + fused actor/critic heads for one batch tile.
# All matmuls are 2-D MXU dots on VMEM-resident bf16 operands (f32 accumulate).
# ----------------------------------------------------------------------------
def _actor_critic_kernel(xp_ref,
                         s1_ref, w1_ref, b1_ref,
                         s2_ref, w2_ref, b2_ref,
                         s3_ref, w3_ref, b3_ref,
                         w4_ref, b4_ref, w5_ref, b5_ref,
                         out_ref):
    f32 = jnp.float32
    bf16 = jnp.bfloat16
    b_tile = xp_ref.shape[0]
    c1 = b1_ref.shape[1]          # 32 (conv1 out channels)

    feat_rows = []
    for b in range(b_tile):                               # static unroll
        x_b = xp_ref[b]                                   # (nb, 16*cin) bf16

        # ---- conv1: weights first (C_out < C_in), then 0/1 selection -------
        # hw[:, k*32:(k+1)*32] = x_b @ W1_k  (one full-width 128-lane matmul)
        hw = jnp.dot(x_b, w1_ref[...], preferred_element_type=f32)
        hw = hw.astype(bf16)                              # (nb, 4*32)
        acc = b1_ref[...]                                 # (1, 32) f32
        for k in range(s1_ref.shape[0]):
            acc = acc + jnp.dot(s1_ref[k], hw[:, k * c1:(k + 1) * c1],
                                preferred_element_type=f32)
        h = jnp.maximum(acc, 0.0).astype(bf16)            # (p1, 32)

        # ---- conv2 / conv3: selection first (C_out >= C_in), then weights --
        for s_ref, w_ref, bias_ref in ((s2_ref, w2_ref, b2_ref),
                                       (s3_ref, w3_ref, b3_ref)):
            acc = bias_ref[...]                           # (1, Cout) f32
            for k in range(s_ref.shape[0]):
                patch = jnp.dot(s_ref[k], h, preferred_element_type=f32)
                acc = acc + jnp.dot(patch.astype(bf16), w_ref[k],
                                    preferred_element_type=f32)
            h = jnp.maximum(acc, 0.0).astype(bf16)        # (p, Cout)

        # Flatten (p3, c3) -> (1, p3*c3) in (p, c) order; the fused first-FC
        # weight was permuted at init so this matches PyTorch's NCHW flatten.
        feat_rows.append(h.reshape(1, h.shape[0] * h.shape[1]))

    feat = feat_rows[0] if b_tile == 1 else jnp.concatenate(feat_rows, axis=0)

    # ---- fused heads: one (B, feat) @ (feat, 1024) and one (B,1024)@(1024,256)
    hid = jnp.dot(feat, w4_ref[...], preferred_element_type=f32) + b4_ref[...]
    hid = jnp.maximum(hid, 0.0).astype(bf16)              # (B, 1024)
    out = jnp.dot(hid, w5_ref[...], preferred_element_type=f32) + b5_ref[...]

    # ---- actor softmax over the first 128 lanes (padding biased to -1e30
    #      so exp underflows to exactly 0).  Exact f32 division (bugfix).
    logits = out[:, :_LOGIT_PAD]
    m = jnp.max(logits, axis=-1, keepdims=True)
    e = jnp.exp(logits - m)
    denom = jnp.sum(e, axis=-1, keepdims=True)
    probs = e / denom

    # single lane-dense (B, 256) store: [probs | critic value (col 128)]
    out_ref[...] = jnp.concatenate([probs, out[:, _LOGIT_PAD:]],
                                   axis=-1).astype(out_ref.dtype)


# ----------------------------------------------------------------------------
# Parameter construction: PyTorch-layout weights (reference) + kernel layout.
# ----------------------------------------------------------------------------
def init_params(key, in_shape, n_actions):
    """in_shape = (Cin, H, W), mirroring the PyTorch ctor's `in_channels`."""
    cin, H, W = in_shape
    assert H % 4 == 0 and W % 4 == 0, "spatial dims must be multiples of 4"
    assert n_actions <= _LOGIT_PAD
    (k1, st1, c1), (k2, st2, c2), (k3, st3, c3) = _CONV_CFG
    oh1, ow1 = _conv_out(H, k1, st1), _conv_out(W, k1, st1)
    oh2, ow2 = _conv_out(oh1, k2, st2), _conv_out(ow1, k2, st2)
    oh3, ow3 = _conv_out(oh2, k3, st3), _conv_out(ow2, k3, st3)
    assert oh3 >= 1 and ow3 >= 1, "input too small for the conv stack"
    p1, p2, p3 = oh1 * ow1, oh2 * ow2, oh3 * ow3
    nbh, nbw = H // 4, W // 4
    feat = c3 * p3                         # cnn_out_size (PyTorch NCHW flatten)

    ks = jax.random.split(key, 16)
    scale = 0.05

    def rnd(k, shape):
        return scale * jax.random.normal(k, shape, jnp.float32)

    # ---- PyTorch-layout parameters (kept for the plain-JAX reference) -------
    w1_t = rnd(ks[0], (c1, cin, k1, k1));     b1_t = rnd(ks[1], (c1,))
    w2_t = rnd(ks[2], (c2, c1, k2, k2));      b2_t = rnd(ks[3], (c2,))
    w3_t = rnd(ks[4], (c3, c2, k3, k3));      b3_t = rnd(ks[5], (c3,))
    w4a_t = rnd(ks[6], (_HIDDEN, feat));      b4a_t = rnd(ks[7], (_HIDDEN,))
    w5a_t = rnd(ks[8], (n_actions, _HIDDEN)); b5a_t = rnd(ks[9], (n_actions,))
    w4c_t = rnd(ks[10], (_HIDDEN, feat));     b4c_t = rnd(ks[11], (_HIDDEN,))
    w5c_t = rnd(ks[12], (1, _HIDDEN));        b5c_t = rnd(ks[13], (1,))

    ref_params = dict(w1=w1_t, b1=b1_t, w2=w2_t, b2=b2_t, w3=w3_t, b3=b3_t,
                      w4a=w4a_t, b4a=b4a_t, w5a=w5a_t, b5a=b5a_t,
                      w4c=w4c_t, b4c=b4c_t, w5c=w5c_t, b5c=b5c_t)

    # ---- conv1 weights per 4x4 offset block (qi,qj), rows ordered (ri,rj,cin),
    #      concatenated along output lanes -> (16*cin, 4*32) single matmul.
    a = jnp.transpose(w1_t, (2, 3, 1, 0)).reshape(2, 4, 2, 4, cin, c1)
    w1_off = jnp.transpose(a, (0, 2, 1, 3, 4, 5)).reshape(4, 16 * cin, c1)
    w1cat = jnp.transpose(w1_off, (1, 0, 2)).reshape(16 * cin, 4 * c1)

    # ---- conv2 / conv3 weights per (di, dj) offset
    w2_off = jnp.transpose(w2_t, (2, 3, 1, 0)).reshape(k2 * k2, c1, c2)
    w3_off = jnp.transpose(w3_t, (2, 3, 1, 0)).reshape(k3 * k3, c2, c3)

    # ---- 0/1 shift-selection matrices (constant, tiny; exact in bf16) -------
    S1 = np.zeros((4, p1, nbh * nbw), np.float32)
    for qi in range(2):
        for qj in range(2):
            kk = qi * 2 + qj
            for oy in range(oh1):
                for ox in range(ow1):
                    S1[kk, oy * ow1 + ox, (oy + qi) * nbw + (ox + qj)] = 1.0

    S2 = np.zeros((k2 * k2, p2, p1), np.float32)
    for di in range(k2):
        for dj in range(k2):
            kk = di * k2 + dj
            for oy in range(oh2):
                for ox in range(ow2):
                    S2[kk, oy * ow2 + ox,
                       (st2 * oy + di) * ow1 + (st2 * ox + dj)] = 1.0

    S3 = np.zeros((k3 * k3, p3, p2), np.float32)
    for di in range(k3):
        for dj in range(k3):
            kk = di * k3 + dj
            for oy in range(oh3):
                for ox in range(ow3):
                    S3[kk, oy * ow3 + ox,
                       (st3 * oy + di) * ow2 + (st3 * ox + dj)] = 1.0

    # ---- fused first FC: NCHW flatten folded into a (p3*c3, 1024) weight ----
    w4a_k = jnp.transpose(w4a_t.reshape(_HIDDEN, c3, p3), (2, 1, 0)).reshape(feat, _HIDDEN)
    w4c_k = jnp.transpose(w4c_t.reshape(_HIDDEN, c3, p3), (2, 1, 0)).reshape(feat, _HIDDEN)
    w4 = jnp.concatenate([w4a_k, w4c_k], axis=1)           # (feat, 1024)
    b4 = jnp.concatenate([b4a_t, b4c_t]).reshape(1, 2 * _HIDDEN)

    # ---- fused second FC: block-diagonal (1024, 256), lane-dense output -----
    w5 = jnp.zeros((2 * _HIDDEN, _OUT_W), jnp.float32)
    w5 = w5.at[:_HIDDEN, :n_actions].set(w5a_t.T)
    w5 = w5.at[_HIDDEN:, _LOGIT_PAD].set(w5c_t[0])
    b5 = jnp.zeros((1, _OUT_W), jnp.float32)                # bias stays f32
    b5 = b5.at[0, :n_actions].set(b5a_t)
    b5 = b5.at[0, n_actions:_LOGIT_PAD].set(_NEG_INF)       # kill padded lanes
    b5 = b5.at[0, _LOGIT_PAD].set(b5c_t[0])

    bf16 = jnp.bfloat16
    params = dict(
        s1=jnp.asarray(S1, bf16), s2=jnp.asarray(S2, bf16), s3=jnp.asarray(S3, bf16),
        w1=w1cat.astype(bf16), b1=b1_t.reshape(1, -1),
        w2=w2_off.astype(bf16), b2=b2_t.reshape(1, -1),
        w3=w3_off.astype(bf16), b3=b3_t.reshape(1, -1),
        w4=w4.astype(bf16), b4=b4,
        w5=w5.astype(bf16), b5=b5,
    )
    return params, ref_params


# ----------------------------------------------------------------------------
# Forward pass: one fused pallas_call, grid over batch tiles.
# ----------------------------------------------------------------------------
@functools.partial(jax.jit, static_argnums=(2,))
def actor_critic_forward(params, x_nchw, n_actions):
    """x_nchw: (N, Cin, H, W) f32 -> (prob_dist (N, n_actions), value (N, 1))."""
    n, cin, H, W = x_nchw.shape
    nbh, nbw = H // 4, W // 4
    nb = nbh * nbw

    # Space-to-depth(4) repack (no duplication) + bf16 cast (halves input DMA).
    xp = x_nchw.reshape(n, cin, nbh, 4, nbw, 4)
    xp = jnp.transpose(xp, (0, 2, 4, 3, 5, 1)).reshape(n, nb, 16 * cin)
    xp = xp.astype(jnp.bfloat16)

    b_tile = min(_B_TILE, n)
    n_pad = pl.cdiv(n, b_tile) * b_tile
    if n_pad != n:
        xp = jnp.pad(xp, ((0, n_pad - n), (0, 0), (0, 0)))

    order = ("s1", "w1", "b1", "s2", "w2", "b2", "s3", "w3", "b3",
             "w4", "b4", "w5", "b5")
    consts = [params[k] for k in order]

    def resident_spec(arr):
        zeros = (0,) * arr.ndim                   # block index never changes
        return pl.BlockSpec(tuple(arr.shape), lambda t, z=zeros: z)

    in_specs = [pl.BlockSpec((b_tile, nb, 16 * cin), lambda t: (t, 0, 0))]
    in_specs += [resident_spec(a) for a in consts]
    out_specs = pl.BlockSpec((b_tile, _OUT_W), lambda t: (t, 0))
    out_shape = jax.ShapeDtypeStruct((n_pad, _OUT_W), jnp.float32)

    # ---- rough cost estimate (helps XLA schedule around the custom call) ----
    p1, p2, p3 = params["s1"].shape[1], params["s2"].shape[1], params["s3"].shape[1]
    c1o, c2o, c3o = params["b1"].shape[1], params["b2"].shape[1], params["b3"].shape[1]
    feat = params["w4"].shape[0]
    macs = (nb * (16 * cin) * (4 * c1o) + 4 * p1 * nb * c1o
            + 16 * (p2 * p1 * c1o + p2 * c1o * c2o)
            + 9 * (p3 * p2 * c2o + p3 * c2o * c3o)
            + feat * (2 * _HIDDEN) + (2 * _HIDDEN) * _OUT_W)
    resident_bytes = sum(int(a.size) * a.dtype.itemsize for a in consts)
    per_step_io = b_tile * (nb * 16 * cin * 2 + _OUT_W * 4)
    cost = pl.CostEstimate(
        flops=int(2 * n_pad * macs),
        transcendentals=int(n_pad * _LOGIT_PAD),
        bytes_accessed=int(xp.size * 2 + resident_bytes + n_pad * _OUT_W * 4))

    # VMEM limit from actual footprint (resident weights ~1 MiB) + headroom.
    vmem_limit = int(min(96 << 20,
                         max(16 << 20,
                             4 * resident_bytes + 8 * per_step_io + (8 << 20))))

    res = pl.pallas_call(
        _actor_critic_kernel,
        out_shape=out_shape,
        grid_spec=pltpu.PrefetchScalarGridSpec(
            num_scalar_prefetch=0,
            grid=(n_pad // b_tile,),
            in_specs=in_specs,
            out_specs=out_specs),
        compiler_params=pltpu.CompilerParams(
            dimension_semantics=("parallel",),
            vmem_limit_bytes=vmem_limit),
        cost_estimate=cost,
    )(xp, *consts)

    probs = res[:n, :n_actions]
    value = res[:n, _LOGIT_PAD:_LOGIT_PAD + 1]
    return probs, value


# ----------------------------------------------------------------------------
# Plain-JAX (f32) reference of the PyTorch module, for a correctness check.
# ----------------------------------------------------------------------------
def reference_forward(ref, x_nchw):
    dn = ("NCHW", "OIHW", "NCHW")
    h = x_nchw
    for wname, bname, stride in (("w1", "b1", 4), ("w2", "b2", 2), ("w3", "b3", 1)):
        h = jax.lax.conv_general_dilated(h, ref[wname], (stride, stride),
                                         "VALID", dimension_numbers=dn)
        h = jnp.maximum(h + ref[bname].reshape(1, -1, 1, 1), 0.0)
    flat = h.reshape(h.shape[0], -1)                      # PyTorch NCHW flatten
    a1 = jnp.maximum(flat @ ref["w4a"].T + ref["b4a"], 0.0)
    probs = jax.nn.softmax(a1 @ ref["w5a"].T + ref["b5a"], axis=-1)
    c1h = jnp.maximum(flat @ ref["w4c"].T + ref["b4c"], 0.0)
    value = c1h @ ref["w5c"].T + ref["b5c"]
    return probs, value


if __name__ == "__main__":
    # Smallest shapes consistent with the module: the conv stack (k8/s4, k4/s2,
    # k3/s1) needs spatial >= 36, so use (Cin=4, 36, 36), batch=2, 6 actions.
    batch = 2
    in_shape = (4, 36, 36)
    n_actions = 6

    key = jax.random.PRNGKey(0)
    pkey, xkey = jax.random.split(key)
    params, ref_params = init_params(pkey, in_shape, n_actions)
    x = jax.random.normal(xkey, (batch,) + in_shape, jnp.float32)

    probs, value = actor_critic_forward(params, x, n_actions)
    probs, value = jax.block_until_ready((probs, value))

    assert probs.shape == (batch, n_actions), probs.shape
    assert value.shape == (batch, 1), value.shape
    assert bool(jnp.all(probs >= 0.0))
    # Exact f32 softmax division -> rows sum to 1 within f32 rounding.
    assert bool(jnp.allclose(jnp.sum(probs, axis=-1), 1.0, atol=1e-3))

    # Compare against the f32 reference (bf16 weights/activations give ~1e-3
    # level deviations, well within tolerance).
    ref_probs, ref_value = reference_forward(ref_params, x)
    assert bool(jnp.allclose(probs, ref_probs, atol=1e-2)), "actor mismatch"
    assert bool(jnp.allclose(value, ref_value, atol=1e-2)), "critic mismatch"

    print("KERNEL_OK")
</pallas_src>

<mosaic_0001>
module attributes {stable_mosaic.version = 11 : i64} {
  func.func @_actor_critic_kernel(%arg0: i32, %arg1: memref<2x81x64xbf16, #tpu.memory_space<vmem>>, %arg2: memref<4x64x81xbf16, #tpu.memory_space<vmem>>, %arg3: memref<64x128xbf16, #tpu.memory_space<vmem>>, %arg4: memref<1x32xf32, #tpu.memory_space<vmem>>, %arg5: memref<16x9x64xbf16, #tpu.memory_space<vmem>>, %arg6: memref<16x32x64xbf16, #tpu.memory_space<vmem>>, %arg7: memref<1x64xf32, #tpu.memory_space<vmem>>, %arg8: memref<9x1x9xbf16, #tpu.memory_space<vmem>>, %arg9: memref<9x64x64xbf16, #tpu.memory_space<vmem>>, %arg10: memref<1x64xf32, #tpu.memory_space<vmem>>, %arg11: memref<64x1024xbf16, #tpu.memory_space<vmem>>, %arg12: memref<1x1024xf32, #tpu.memory_space<vmem>>, %arg13: memref<1024x256xbf16, #tpu.memory_space<vmem>>, %arg14: memref<1x256xf32, #tpu.memory_space<vmem>>, %arg15: memref<2x256xf32, #tpu.memory_space<vmem>>) attributes {dimension_semantics = [#tpu.dimension_semantics<parallel>], iteration_bounds = array<i64: 1>, scalar_prefetch = 0 : i64, scratch_operands = 0 : i64, tpu.core_type = #tpu.core_type<tc>, window_params = [{transform_indices = @transform_0, window_bounds = array<i64: 2, 81, 64>}, {pipeline_mode = #tpu.pipeline_mode<synchronous>, transform_indices = @transform_1, window_bounds = array<i64: 4, 64, 81>}, {pipeline_mode = #tpu.pipeline_mode<synchronous>, transform_indices = @transform_2, window_bounds = array<i64: 64, 128>}, {pipeline_mode = #tpu.pipeline_mode<synchronous>, transform_indices = @transform_3, window_bounds = array<i64: 1, 32>}, {pipeline_mode = #tpu.pipeline_mode<synchronous>, transform_indices = @transform_4, window_bounds = array<i64: 16, 9, 64>}, {pipeline_mode = #tpu.pipeline_mode<synchronous>, transform_indices = @transform_5, window_bounds = array<i64: 16, 32, 64>}, {pipeline_mode = #tpu.pipeline_mode<synchronous>, transform_indices = @transform_6, window_bounds = array<i64: 1, 64>}, {pipeline_mode = #tpu.pipeline_mode<synchronous>, transform_indices = @transform_7, window_bounds = array<i64: 9, 1, 9>}, {pipeline_mode = #tpu.pipeline_mode<synchronous>, transform_indices = @transform_8, window_bounds = array<i64: 9, 64, 64>}, {pipeline_mode = #tpu.pipeline_mode<synchronous>, transform_indices = @transform_9, window_bounds = array<i64: 1, 64>}, {pipeline_mode = #tpu.pipeline_mode<synchronous>, transform_indices = @transform_10, window_bounds = array<i64: 64, 1024>}, {pipeline_mode = #tpu.pipeline_mode<synchronous>, transform_indices = @transform_11, window_bounds = array<i64: 1, 1024>}, {pipeline_mode = #tpu.pipeline_mode<synchronous>, transform_indices = @transform_12, window_bounds = array<i64: 1024, 256>}, {pipeline_mode = #tpu.pipeline_mode<synchronous>, transform_indices = @transform_13, window_bounds = array<i64: 1, 256>}, {transform_indices = @transform_14, window_bounds = array<i64: 2, 256>}]} {
    %c0 = arith.constant 0 : index
    %c0_0 = arith.constant 0 : index
    %c0_1 = arith.constant 0 : index
    %0 = vector.load %arg1[%c0, %c0_0, %c0_1] : memref<2x81x64xbf16, #tpu.memory_space<vmem>>, vector<1x81x64xbf16>
    %1 = vector.shape_cast %0 : vector<1x81x64xbf16> to vector<81x64xbf16>
    %c0_2 = arith.constant 0 : index
    %c0_3 = arith.constant 0 : index
    %2 = vector.load %arg3[%c0_2, %c0_3] : memref<64x128xbf16, #tpu.memory_space<vmem>>, vector<64x128xbf16>
    %cst = arith.constant dense<0.000000e+00> : vector<81x128xf32>
    %3 = tpu.matmul %1, %2, %cst {dimension_numbers = #tpu.dot_dimension_numbers<[1], [0], [0], [1], [0, 0, 1, 1], [], []>} : vector<81x64xbf16>, vector<64x128xbf16>, vector<81x128xf32> -> vector<81x128xf32>
    %4 = arith.truncf %3 : vector<81x128xf32> to vector<81x128xbf16>
    %c0_4 = arith.constant 0 : index
    %c0_5 = arith.constant 0 : index
    %5 = vector.load %arg4[%c0_4, %c0_5] : memref<1x32xf32, #tpu.memory_space<vmem>>, vector<1x32xf32>
    %c0_6 = arith.constant 0 : index
    %c0_7 = arith.constant 0 : index
    %c0_8 = arith.constant 0 : index
    %6 = vector.load %arg2[%c0_6, %c0_7, %c0_8] : memref<4x64x81xbf16, #tpu.memory_space<vmem>>, vector<1x64x81xbf16>
    %7 = vector.shape_cast %6 : vector<1x64x81xbf16> to vector<64x81xbf16>
    %8 = vector.extract_strided_slice %4 {offsets = [0, 0], sizes = [81, 32], strides = [1, 1]} : vector<81x128xbf16> to vector<81x32xbf16>
    %cst_9 = arith.constant dense<0.000000e+00> : vector<64x32xf32>
    %9 = tpu.matmul %7, %8, %cst_9 {dimension_numbers = #tpu.dot_dimension_numbers<[1], [0], [0], [1], [0, 0, 1, 1], [], []>} : vector<64x81xbf16>, vector<81x32xbf16>, vector<64x32xf32> -> vector<64x32xf32>
    %10 = vector.broadcast %5 : vector<1x32xf32> to vector<64x32xf32>
    %11 = arith.addf %10, %9 : vector<64x32xf32>
    %c1 = arith.constant 1 : index
    %c0_10 = arith.constant 0 : index
    %c0_11 = arith.constant 0 : index
    %12 = vector.load %arg2[%c1, %c0_10, %c0_11] : memref<4x64x81xbf16, #tpu.memory_space<vmem>>, vector<1x64x81xbf16>
    %13 = vector.shape_cast %12 : vector<1x64x81xbf16> to vector<64x81xbf16>
    %14 = vector.extract_strided_slice %4 {offsets = [0, 32], sizes = [81, 32], strides = [1, 1]} : vector<81x128xbf16> to vector<81x32xbf16>
    %cst_12 = arith.constant dense<0.000000e+00> : vector<64x32xf32>
    %15 = tpu.matmul %13, %14, %cst_12 {dimension_numbers = #tpu.dot_dimension_numbers<[1], [0], [0], [1], [0, 0, 1, 1], [], []>} : vector<64x81xbf16>, vector<81x32xbf16>, vector<64x32xf32> -> vector<64x32xf32>
    %16 = arith.addf %11, %15 : vector<64x32xf32>
    %c2 = arith.constant 2 : index
    %c0_13 = arith.constant 0 : index
    %c0_14 = arith.constant 0 : index
    %17 = vector.load %arg2[%c2, %c0_13, %c0_14] : memref<4x64x81xbf16, #tpu.memory_space<vmem>>, vector<1x64x81xbf16>
    %18 = vector.shape_cast %17 : vector<1x64x81xbf16> to vector<64x81xbf16>
    %19 = vector.extract_strided_slice %4 {offsets = [0, 64], sizes = [81, 32], strides = [1, 1]} : vector<81x128xbf16> to vector<81x32xbf16>
    %cst_15 = arith.constant dense<0.000000e+00> : vector<64x32xf32>
    %20 = tpu.matmul %18, %19, %cst_15 {dimension_numbers = #tpu.dot_dimension_numbers<[1], [0], [0], [1], [0, 0, 1, 1], [], []>} : vector<64x81xbf16>, vector<81x32xbf16>, vector<64x32xf32> -> vector<64x32xf32>
    %21 = arith.addf %16, %20 : vector<64x32xf32>
    %c3 = arith.constant 3 : index
    %c0_16 = arith.constant 0 : index
    %c0_17 = arith.constant 0 : index
    %22 = vector.load %arg2[%c3, %c0_16, %c0_17] : memref<4x64x81xbf16, #tpu.memory_space<vmem>>, vector<1x64x81xbf16>
    %23 = vector.shape_cast %22 : vector<1x64x81xbf16> to vector<64x81xbf16>
    %24 = vector.extract_strided_slice %4 {offsets = [0, 96], sizes = [81, 32], strides = [1, 1]} : vector<81x128xbf16> to vector<81x32xbf16>
    %cst_18 = arith.constant dense<0.000000e+00> : vector<64x32xf32>
    %25 = tpu.matmul %23, %24, %cst_18 {dimension_numbers = #tpu.dot_dimension_numbers<[1], [0], [0], [1], [0, 0, 1, 1], [], []>} : vector<64x81xbf16>, vector<81x32xbf16>, vector<64x32xf32> -> vector<64x32xf32>
    %26 = arith.addf %21, %25 : vector<64x32xf32>
    %cst_19 = arith.constant 0.000000e+00 : f32
    %27 = vector.broadcast %cst_19 : f32 to vector<64x32xf32>
    %28 = arith.maximumf %26, %27 : vector<64x32xf32>
    %29 = arith.truncf %28 : vector<64x32xf32> to vector<64x32xbf16>
    %c0_20 = arith.constant 0 : index
    %c0_21 = arith.constant 0 : index
    %30 = vector.load %arg7[%c0_20, %c0_21] : memref<1x64xf32, #tpu.memory_space<vmem>>, vector<1x64xf32>
    %c0_22 = arith.constant 0 : index
    %c0_23 = arith.constant 0 : index
    %c0_24 = arith.constant 0 : index
    %31 = vector.load %arg5[%c0_22, %c0_23, %c0_24] : memref<16x9x64xbf16, #tpu.memory_space<vmem>>, vector<1x9x64xbf16>
    %32 = vector.shape_cast %31 : vector<1x9x64xbf16> to vector<9x64xbf16>
    %cst_25 = arith.constant dense<0.000000e+00> : vector<9x32xf32>
    %33 = tpu.matmul %32, %29, %cst_25 {dimension_numbers = #tpu.dot_dimension_numbers<[1], [0], [0], [1], [0, 0, 1, 1], [], []>} : vector<9x64xbf16>, vector<64x32xbf16>, vector<9x32xf32> -> vector<9x32xf32>
    %34 = arith.truncf %33 : vector<9x32xf32> to vector<9x32xbf16>
    %c0_26 = arith.constant 0 : index
    %c0_27 = arith.constant 0 : index
    %c0_28 = arith.constant 0 : index
    %35 = vector.load %arg6[%c0_26, %c0_27, %c0_28] : memref<16x32x64xbf16, #tpu.memory_space<vmem>>, vector<1x32x64xbf16>
    %36 = vector.shape_cast %35 : vector<1x32x64xbf16> to vector<32x64xbf16>
    %cst_29 = arith.constant dense<0.000000e+00> : vector<9x64xf32>
    %37 = tpu.matmul %34, %36, %cst_29 {dimension_numbers = #tpu.dot_dimension_numbers<[1], [0], [0], [1], [0, 0, 1, 1], [], []>} : vector<9x32xbf16>, vector<32x64xbf16>, vector<9x64xf32> -> vector<9x64xf32>
    %38 = vector.broadcast %30 : vector<1x64xf32> to vector<9x64xf32>
    %39 = arith.addf %38, %37 : vector<9x64xf32>
    %c1_30 = arith.constant 1 : index
    %c0_31 = arith.constant 0 : index
    %c0_32 = arith.constant 0 : index
    %40 = vector.load %arg5[%c1_30, %c0_31, %c0_32] : memref<16x9x64xbf16, #tpu.memory_space<vmem>>, vector<1x9x64xbf16>
    %41 = vector.shape_cast %40 : vector<1x9x64xbf16> to vector<9x64xbf16>
    %cst_33 = arith.constant dense<0.000000e+00> : vector<9x32xf32>
    %42 = tpu.matmul %41, %29, %cst_33 {dimension_numbers = #tpu.dot_dimension_numbers<[1], [0], [0], [1], [0, 0, 1, 1], [], []>} : vector<9x64xbf16>, vector<64x32xbf16>, vector<9x32xf32> -> vector<9x32xf32>
    %43 = arith.truncf %42 : vector<9x32xf32> to vector<9x32xbf16>
    %c1_34 = arith.constant 1 : index
    %c0_35 = arith.constant 0 : index
    %c0_36 = arith.constant 0 : index
    %44 = vector.load %arg6[%c1_34, %c0_35, %c0_36] : memref<16x32x64xbf16, #tpu.memory_space<vmem>>, vector<1x32x64xbf16>
    %45 = vector.shape_cast %44 : vector<1x32x64xbf16> to vector<32x64xbf16>
    %cst_37 = arith.constant dense<0.000000e+00> : vector<9x64xf32>
    %46 = tpu.matmul %43, %45, %cst_37 {dimension_numbers = #tpu.dot_dimension_numbers<[1], [0], [0], [1], [0, 0, 1, 1], [], []>} : vector<9x32xbf16>, vector<32x64xbf16>, vector<9x64xf32> -> vector<9x64xf32>
    %47 = arith.addf %39, %46 : vector<9x64xf32>
    %c2_38 = arith.constant 2 : index
    %c0_39 = arith.constant 0 : index
    %c0_40 = arith.constant 0 : index
    %48 = vector.load %arg5[%c2_38, %c0_39, %c0_40] : memref<16x9x64xbf16, #tpu.memory_space<vmem>>, vector<1x9x64xbf16>
    %49 = vector.shape_cast %48 : vector<1x9x64xbf16> to vector<9x64xbf16>
    %cst_41 = arith.constant dense<0.000000e+00> : vector<9x32xf32>
    %50 = tpu.matmul %49, %29, %cst_41 {dimension_numbers = #tpu.dot_dimension_numbers<[1], [0], [0], [1], [0, 0, 1, 1], [], []>} : vector<9x64xbf16>, vector<64x32xbf16>, vector<9x32xf32> -> vector<9x32xf32>
    %51 = arith.truncf %50 : vector<9x32xf32> to vector<9x32xbf16>
    %c2_42 = arith.constant 2 : index
    %c0_43 = arith.constant 0 : index
    %c0_44 = arith.constant 0 : index
    %52 = vector.load %arg6[%c2_42, %c0_43, %c0_44] : memref<16x32x64xbf16, #tpu.memory_space<vmem>>, vector<1x32x64xbf16>
    %53 = vector.shape_cast %52 : vector<1x32x64xbf16> to vector<32x64xbf16>
    %cst_45 = arith.constant dense<0.000000e+00> : vector<9x64xf32>
    %54 = tpu.matmul %51, %53, %cst_45 {dimension_numbers = #tpu.dot_dimension_numbers<[1], [0], [0], [1], [0, 0, 1, 1], [], []>} : vector<9x32xbf16>, vector<32x64xbf16>, vector<9x64xf32> -> vector<9x64xf32>
    %55 = arith.addf %47, %54 : vector<9x64xf32>
    %c3_46 = arith.constant 3 : index
    %c0_47 = arith.constant 0 : index
    %c0_48 = arith.constant 0 : index
    %56 = vector.load %arg5[%c3_46, %c0_47, %c0_48] : memref<16x9x64xbf16, #tpu.memory_space<vmem>>, vector<1x9x64xbf16>
    %57 = vector.shape_cast %56 : vector<1x9x64xbf16> to vector<9x64xbf16>
    %cst_49 = arith.constant dense<0.000000e+00> : vector<9x32xf32>
    %58 = tpu.matmul %57, %29, %cst_49 {dimension_numbers = #tpu.dot_dimension_numbers<[1], [0], [0], [1], [0, 0, 1, 1], [], []>} : vector<9x64xbf16>, vector<64x32xbf16>, vector<9x32xf32> -> vector<9x32xf32>
    %59 = arith.truncf %58 : vector<9x32xf32> to vector<9x32xbf16>
    %c3_50 = arith.constant 3 : index
    %c0_51 = arith.constant 0 : index
    %c0_52 = arith.constant 0 : index
    %60 = vector.load %arg6[%c3_50, %c0_51, %c0_52] : memref<16x32x64xbf16, #tpu.memory_space<vmem>>, vector<1x32x64xbf16>
    %61 = vector.shape_cast %60 : vector<1x32x64xbf16> to vector<32x64xbf16>
    %cst_53 = arith.constant dense<0.000000e+00> : vector<9x64xf32>
    %62 = tpu.matmul %59, %61, %cst_53 {dimension_numbers = #tpu.dot_dimension_numbers<[1], [0], [0], [1], [0, 0, 1, 1], [], []>} : vector<9x32xbf16>, vector<32x64xbf16>, vector<9x64xf32> -> vector<9x64xf32>
    %63 = arith.addf %55, %62 : vector<9x64xf32>
    %c4 = arith.constant 4 : index
    %c0_54 = arith.constant 0 : index
    %c0_55 = arith.constant 0 : index
    %64 = vector.load %arg5[%c4, %c0_54, %c0_55] : memref<16x9x64xbf16, #tpu.memory_space<vmem>>, vector<1x9x64xbf16>
    %65 = vector.shape_cast %64 : vector<1x9x64xbf16> to vector<9x64xbf16>
    %cst_56 = arith.constant dense<0.000000e+00> : vector<9x32xf32>
    %66 = tpu.matmul %65, %29, %cst_56 {dimension_numbers = #tpu.dot_dimension_numbers<[1], [0], [0], [1], [0, 0, 1, 1], [], []>} : vector<9x64xbf16>, vector<64x32xbf16>, vector<9x32xf32> -> vector<9x32xf32>
    %67 = arith.truncf %66 : vector<9x32xf32> to vector<9x32xbf16>
    %c4_57 = arith.constant 4 : index
    %c0_58 = arith.constant 0 : index
    %c0_59 = arith.constant 0 : index
    %68 = vector.load %arg6[%c4_57, %c0_58, %c0_59] : memref<16x32x64xbf16, #tpu.memory_space<vmem>>, vector<1x32x64xbf16>
    %69 = vector.shape_cast %68 : vector<1x32x64xbf16> to vector<32x64xbf16>
    %cst_60 = arith.constant dense<0.000000e+00> : vector<9x64xf32>
    %70 = tpu.matmul %67, %69, %cst_60 {dimension_numbers = #tpu.dot_dimension_numbers<[1], [0], [0], [1], [0, 0, 1, 1], [], []>} : vector<9x32xbf16>, vector<32x64xbf16>, vector<9x64xf32> -> vector<9x64xf32>
    %71 = arith.addf %63, %70 : vector<9x64xf32>
    %c5 = arith.constant 5 : index
    %c0_61 = arith.constant 0 : index
    %c0_62 = arith.constant 0 : index
    %72 = vector.load %arg5[%c5, %c0_61, %c0_62] : memref<16x9x64xbf16, #tpu.memory_space<vmem>>, vector<1x9x64xbf16>
    %73 = vector.shape_cast %72 : vector<1x9x64xbf16> to vector<9x64xbf16>
    %cst_63 = arith.constant dense<0.000000e+00> : vector<9x32xf32>
    %74 = tpu.matmul %73, %29, %cst_63 {dimension_numbers = #tpu.dot_dimension_numbers<[1], [0], [0], [1], [0, 0, 1, 1], [], []>} : vector<9x64xbf16>, vector<64x32xbf16>, vector<9x32xf32> -> vector<9x32xf32>
    %75 = arith.truncf %74 : vector<9x32xf32> to vector<9x32xbf16>
    %c5_64 = arith.constant 5 : index
    %c0_65 = arith.constant 0 : index
    %c0_66 = arith.constant 0 : index
    %76 = vector.load %arg6[%c5_64, %c0_65, %c0_66] : memref<16x32x64xbf16, #tpu.memory_space<vmem>>, vector<1x32x64xbf16>
    %77 = vector.shape_cast %76 : vector<1x32x64xbf16> to vector<32x64xbf16>
    %cst_67 = arith.constant dense<0.000000e+00> : vector<9x64xf32>
    %78 = tpu.matmul %75, %77, %cst_67 {dimension_numbers = #tpu.dot_dimension_numbers<[1], [0], [0], [1], [0, 0, 1, 1], [], []>} : vector<9x32xbf16>, vector<32x64xbf16>, vector<9x64xf32> -> vector<9x64xf32>
    %79 = arith.addf %71, %78 : vector<9x64xf32>
    %c6 = arith.constant 6 : index
    %c0_68 = arith.constant 0 : index
    %c0_69 = arith.constant 0 : index
    %80 = vector.load %arg5[%c6, %c0_68, %c0_69] : memref<16x9x64xbf16, #tpu.memory_space<vmem>>, vector<1x9x64xbf16>
    %81 = vector.shape_cast %80 : vector<1x9x64xbf16> to vector<9x64xbf16>
    %cst_70 = arith.constant dense<0.000000e+00> : vector<9x32xf32>
    %82 = tpu.matmul %81, %29, %cst_70 {dimension_numbers = #tpu.dot_dimension_numbers<[1], [0], [0], [1], [0, 0, 1, 1], [], []>} : vector<9x64xbf16>, vector<64x32xbf16>, vector<9x32xf32> -> vector<9x32xf32>
    %83 = arith.truncf %82 : vector<9x32xf32> to vector<9x32xbf16>
    %c6_71 = arith.constant 6 : index
    %c0_72 = arith.constant 0 : index
    %c0_73 = arith.constant 0 : index
    %84 = vector.load %arg6[%c6_71, %c0_72, %c0_73] : memref<16x32x64xbf16, #tpu.memory_space<vmem>>, vector<1x32x64xbf16>
    %85 = vector.shape_cast %84 : vector<1x32x64xbf16> to vector<32x64xbf16>
    %cst_74 = arith.constant dense<0.000000e+00> : vector<9x64xf32>
    %86 = tpu.matmul %83, %85, %cst_74 {dimension_numbers = #tpu.dot_dimension_numbers<[1], [0], [0], [1], [0, 0, 1, 1], [], []>} : vector<9x32xbf16>, vector<32x64xbf16>, vector<9x64xf32> -> vector<9x64xf32>
    %87 = arith.addf %79, %86 : vector<9x64xf32>
    %c7 = arith.constant 7 : index
    %c0_75 = arith.constant 0 : index
    %c0_76 = arith.constant 0 : index
    %88 = vector.load %arg5[%c7, %c0_75, %c0_76] : memref<16x9x64xbf16, #tpu.memory_space<vmem>>, vector<1x9x64xbf16>
    %89 = vector.shape_cast %88 : vector<1x9x64xbf16> to vector<9x64xbf16>
    %cst_77 = arith.constant dense<0.000000e+00> : vector<9x32xf32>
    %90 = tpu.matmul %89, %29, %cst_77 {dimension_numbers = #tpu.dot_dimension_numbers<[1], [0], [0], [1], [0, 0, 1, 1], [], []>} : vector<9x64xbf16>, vector<64x32xbf16>, vector<9x32xf32> -> vector<9x32xf32>
    %91 = arith.truncf %90 : vector<9x32xf32> to vector<9x32xbf16>
    %c7_78 = arith.constant 7 : index
    %c0_79 = arith.constant 0 : index
    %c0_80 = arith.constant 0 : index
    %92 = vector.load %arg6[%c7_78, %c0_79, %c0_80] : memref<16x32x64xbf16, #tpu.memory_space<vmem>>, vector<1x32x64xbf16>
    %93 = vector.shape_cast %92 : vector<1x32x64xbf16> to vector<32x64xbf16>
    %cst_81 = arith.constant dense<0.000000e+00> : vector<9x64xf32>
    %94 = tpu.matmul %91, %93, %cst_81 {dimension_numbers = #tpu.dot_dimension_numbers<[1], [0], [0], [1], [0, 0, 1, 1], [], []>} : vector<9x32xbf16>, vector<32x64xbf16>, vector<9x64xf32> -> vector<9x64xf32>
    %95 = arith.addf %87, %94 : vector<9x64xf32>
    %c8 = arith.constant 8 : index
    %c0_82 = arith.constant 0 : index
    %c0_83 = arith.constant 0 : index
    %96 = vector.load %arg5[%c8, %c0_82, %c0_83] : memref<16x9x64xbf16, #tpu.memory_space<vmem>>, vector<1x9x64xbf16>
    %97 = vector.shape_cast %96 : vector<1x9x64xbf16> to vector<9x64xbf16>
    %cst_84 = arith.constant dense<0.000000e+00> : vector<9x32xf32>
    %98 = tpu.matmul %97, %29, %cst_84 {dimension_numbers = #tpu.dot_dimension_numbers<[1], [0], [0], [1], [0, 0, 1, 1], [], []>} : vector<9x64xbf16>, vector<64x32xbf16>, vector<9x32xf32> -> vector<9x32xf32>
    %99 = arith.truncf %98 : vector<9x32xf32> to vector<9x32xbf16>
    %c8_85 = arith.constant 8 : index
    %c0_86 = arith.constant 0 : index
    %c0_87 = arith.constant 0 : index
    %100 = vector.load %arg6[%c8_85, %c0_86, %c0_87] : memref<16x32x64xbf16, #tpu.memory_space<vmem>>, vector<1x32x64xbf16>
    %101 = vector.shape_cast %100 : vector<1x32x64xbf16> to vector<32x64xbf16>
    %cst_88 = arith.constant dense<0.000000e+00> : vector<9x64xf32>
    %102 = tpu.matmul %99, %101, %cst_88 {dimension_numbers = #tpu.dot_dimension_numbers<[1], [0], [0], [1], [0, 0, 1, 1], [], []>} : vector<9x32xbf16>, vector<32x64xbf16>, vector<9x64xf32> -> vector<9x64xf32>
    %103 = arith.addf %95, %102 : vector<9x64xf32>
    %c9 = arith.constant 9 : index
    %c0_89 = arith.constant 0 : index
    %c0_90 = arith.constant 0 : index
    %104 = vector.load %arg5[%c9, %c0_89, %c0_90] : memref<16x9x64xbf16, #tpu.memory_space<vmem>>, vector<1x9x64xbf16>
    %105 = vector.shape_cast %104 : vector<1x9x64xbf16> to vector<9x64xbf16>
    %cst_91 = arith.constant dense<0.000000e+00> : vector<9x32xf32>
    %106 = tpu.matmul %105, %29, %cst_91 {dimension_numbers = #tpu.dot_dimension_numbers<[1], [0], [0], [1], [0, 0, 1, 1], [], []>} : vector<9x64xbf16>, vector<64x32xbf16>, vector<9x32xf32> -> vector<9x32xf32>
    %107 = arith.truncf %106 : vector<9x32xf32> to vector<9x32xbf16>
    %c9_92 = arith.constant 9 : index
    %c0_93 = arith.constant 0 : index
    %c0_94 = arith.constant 0 : index
    %108 = vector.load %arg6[%c9_92, %c0_93, %c0_94] : memref<16x32x64xbf16, #tpu.memory_space<vmem>>, vector<1x32x64xbf16>
    %109 = vector.shape_cast %108 : vector<1x32x64xbf16> to vector<32x64xbf16>
    %cst_95 = arith.constant dense<0.000000e+00> : vector<9x64xf32>
    %110 = tpu.matmul %107, %109, %cst_95 {dimension_numbers = #tpu.dot_dimension_numbers<[1], [0], [0], [1], [0, 0, 1, 1], [], []>} : vector<9x32xbf16>, vector<32x64xbf16>, vector<9x64xf32> -> vector<9x64xf32>
    %111 = arith.addf %103, %110 : vector<9x64xf32>
    %c10 = arith.constant 10 : index
    %c0_96 = arith.constant 0 : index
    %c0_97 = arith.constant 0 : index
    %112 = vector.load %arg5[%c10, %c0_96, %c0_97] : memref<16x9x64xbf16, #tpu.memory_space<vmem>>, vector<1x9x64xbf16>
    %113 = vector.shape_cast %112 : vector<1x9x64xbf16> to vector<9x64xbf16>
    %cst_98 = arith.constant dense<0.000000e+00> : vector<9x32xf32>
    %114 = tpu.matmul %113, %29, %cst_98 {dimension_numbers = #tpu.dot_dimension_numbers<[1], [0], [0], [1], [0, 0, 1, 1], [], []>} : vector<9x64xbf16>, vector<64x32xbf16>, vector<9x32xf32> -> vector<9x32xf32>
    %115 = arith.truncf %114 : vector<9x32xf32> to vector<9x32xbf16>
    %c10_99 = arith.constant 10 : index
    %c0_100 = arith.constant 0 : index
    %c0_101 = arith.constant 0 : index
    %116 = vector.load %arg6[%c10_99, %c0_100, %c0_101] : memref<16x32x64xbf16, #tpu.memory_space<vmem>>, vector<1x32x64xbf16>
    %117 = vector.shape_cast %116 : vector<1x32x64xbf16> to vector<32x64xbf16>
    %cst_102 = arith.constant dense<0.000000e+00> : vector<9x64xf32>
    %118 = tpu.matmul %115, %117, %cst_102 {dimension_numbers = #tpu.dot_dimension_numbers<[1], [0], [0], [1], [0, 0, 1, 1], [], []>} : vector<9x32xbf16>, vector<32x64xbf16>, vector<9x64xf32> -> vector<9x64xf32>
    %119 = arith.addf %111, %118 : vector<9x64xf32>
    %c11 = arith.constant 11 : index
    %c0_103 = arith.constant 0 : index
    %c0_104 = arith.constant 0 : index
    %120 = vector.load %arg5[%c11, %c0_103, %c0_104] : memref<16x9x64xbf16, #tpu.memory_space<vmem>>, vector<1x9x64xbf16>
    %121 = vector.shape_cast %120 : vector<1x9x64xbf16> to vector<9x64xbf16>
    %cst_105 = arith.constant dense<0.000000e+00> : vector<9x32xf32>
    %122 = tpu.matmul %121, %29, %cst_105 {dimension_numbers = #tpu.dot_dimension_numbers<[1], [0], [0], [1], [0, 0, 1, 1], [], []>} : vector<9x64xbf16>, vector<64x32xbf16>, vector<9x32xf32> -> vector<9x32xf32>
    %123 = arith.truncf %122 : vector<9x32xf32> to vector<9x32xbf16>
    %c11_106 = arith.constant 11 : index
    %c0_107 = arith.constant 0 : index
    %c0_108 = arith.constant 0 : index
    %124 = vector.load %arg6[%c11_106, %c0_107, %c0_108] : memref<16x32x64xbf16, #tpu.memory_space<vmem>>, vector<1x32x64xbf16>
    %125 = vector.shape_cast %124 : vector<1x32x64xbf16> to vector<32x64xbf16>
    %cst_109 = arith.constant dense<0.000000e+00> : vector<9x64xf32>
    %126 = tpu.matmul %123, %125, %cst_109 {dimension_numbers = #tpu.dot_dimension_numbers<[1], [0], [0], [1], [0, 0, 1, 1], [], []>} : vector<9x32xbf16>, vector<32x64xbf16>, vector<9x64xf32> -> vector<9x64xf32>
    %127 = arith.addf %119, %126 : vector<9x64xf32>
    %c12 = arith.constant 12 : index
    %c0_110 = arith.constant 0 : index
    %c0_111 = arith.constant 0 : index
    %128 = vector.load %arg5[%c12, %c0_110, %c0_111] : memref<16x9x64xbf16, #tpu.memory_space<vmem>>, vector<1x9x64xbf16>
    %129 = vector.shape_cast %128 : vector<1x9x64xbf16> to vector<9x64xbf16>
    %cst_112 = arith.constant dense<0.000000e+00> : vector<9x32xf32>
    %130 = tpu.matmul %129, %29, %cst_112 {dimension_numbers = #tpu.dot_dimension_numbers<[1], [0], [0], [1], [0, 0, 1, 1], [], []>} : vector<9x64xbf16>, vector<64x32xbf16>, vector<9x32xf32> -> vector<9x32xf32>
    %131 = arith.truncf %130 : vector<9x32xf32> to vector<9x32xbf16>
    %c12_113 = arith.constant 12 : index
    %c0_114 = arith.constant 0 : index
    %c0_115 = arith.constant 0 : index
    %132 = vector.load %arg6[%c12_113, %c0_114, %c0_115] : memref<16x32x64xbf16, #tpu.memory_space<vmem>>, vector<1x32x64xbf16>
    %133 = vector.shape_cast %132 : vector<1x32x64xbf16> to vector<32x64xbf16>
    %cst_116 = arith.constant dense<0.000000e+00> : vector<9x64xf32>
    %134 = tpu.matmul %131, %133, %cst_116 {dimension_numbers = #tpu.dot_dimension_numbers<[1], [0], [0], [1], [0, 0, 1, 1], [], []>} : vector<9x32xbf16>, vector<32x64xbf16>, vector<9x64xf32> -> vector<9x64xf32>
    %135 = arith.addf %127, %134 : vector<9x64xf32>
    %c13 = arith.constant 13 : index
    %c0_117 = arith.constant 0 : index
    %c0_118 = arith.constant 0 : index
    %136 = vector.load %arg5[%c13, %c0_117, %c0_118] : memref<16x9x64xbf16, #tpu.memory_space<vmem>>, vector<1x9x64xbf16>
    %137 = vector.shape_cast %136 : vector<1x9x64xbf16> to vector<9x64xbf16>
    %cst_119 = arith.constant dense<0.000000e+00> : vector<9x32xf32>
    %138 = tpu.matmul %137, %29, %cst_119 {dimension_numbers = #tpu.dot_dimension_numbers<[1], [0], [0], [1], [0, 0, 1, 1], [], []>} : vector<9x64xbf16>, vector<64x32xbf16>, vector<9x32xf32> -> vector<9x32xf32>
    %139 = arith.truncf %138 : vector<9x32xf32> to vector<9x32xbf16>
    %c13_120 = arith.constant 13 : index
    %c0_121 = arith.constant 0 : index
    %c0_122 = arith.constant 0 : index
    %140 = vector.load %arg6[%c13_120, %c0_121, %c0_122] : memref<16x32x64xbf16, #tpu.memory_space<vmem>>, vector<1x32x64xbf16>
    %141 = vector.shape_cast %140 : vector<1x32x64xbf16> to vector<32x64xbf16>
    %cst_123 = arith.constant dense<0.000000e+00> : vector<9x64xf32>
    %142 = tpu.matmul %139, %141, %cst_123 {dimension_numbers = #tpu.dot_dimension_numbers<[1], [0], [0], [1], [0, 0, 1, 1], [], []>} : vector<9x32xbf16>, vector<32x64xbf16>, vector<9x64xf32> -> vector<9x64xf32>
    %143 = arith.addf %135, %142 : vector<9x64xf32>
    %c14 = arith.constant 14 : index
    %c0_124 = arith.constant 0 : index
    %c0_125 = arith.constant 0 : index
    %144 = vector.load %arg5[%c14, %c0_124, %c0_125] : memref<16x9x64xbf16, #tpu.memory_space<vmem>>, vector<1x9x64xbf16>
    %145 = vector.shape_cast %144 : vector<1x9x64xbf16> to vector<9x64xbf16>
    %cst_126 = arith.constant dense<0.000000e+00> : vector<9x32xf32>
    %146 = tpu.matmul %145, %29, %cst_126 {dimension_numbers = #tpu.dot_dimension_numbers<[1], [0], [0], [1], [0, 0, 1, 1], [], []>} : vector<9x64xbf16>, vector<64x32xbf16>, vector<9x32xf32> -> vector<9x32xf32>
    %147 = arith.truncf %146 : vector<9x32xf32> to vector<9x32xbf16>
    %c14_127 = arith.constant 14 : index
    %c0_128 = arith.constant 0 : index
    %c0_129 = arith.constant 0 : index
    %148 = vector.load %arg6[%c14_127, %c0_128, %c0_129] : memref<16x32x64xbf16, #tpu.memory_space<vmem>>, vector<1x32x64xbf16>
    %149 = vector.shape_cast %148 : vector<1x32x64xbf16> to vector<32x64xbf16>
    %cst_130 = arith.constant dense<0.000000e+00> : vector<9x64xf32>
    %150 = tpu.matmul %147, %149, %cst_130 {dimension_numbers = #tpu.dot_dimension_numbers<[1], [0], [0], [1], [0, 0, 1, 1], [], []>} : vector<9x32xbf16>, vector<32x64xbf16>, vector<9x64xf32> -> vector<9x64xf32>
    %151 = arith.addf %143, %150 : vector<9x64xf32>
    %c15 = arith.constant 15 : index
    %c0_131 = arith.constant 0 : index
    %c0_132 = arith.constant 0 : index
    %152 = vector.load %arg5[%c15, %c0_131, %c0_132] : memref<16x9x64xbf16, #tpu.memory_space<vmem>>, vector<1x9x64xbf16>
    %153 = vector.shape_cast %152 : vector<1x9x64xbf16> to vector<9x64xbf16>
    %cst_133 = arith.constant dense<0.000000e+00> : vector<9x32xf32>
    %154 = tpu.matmul %153, %29, %cst_133 {dimension_numbers = #tpu.dot_dimension_numbers<[1], [0], [0], [1], [0, 0, 1, 1], [], []>} : vector<9x64xbf16>, vector<64x32xbf16>, vector<9x32xf32> -> vector<9x32xf32>
    %155 = arith.truncf %154 : vector<9x32xf32> to vector<9x32xbf16>
    %c15_134 = arith.constant 15 : index
    %c0_135 = arith.constant 0 : index
    %c0_136 = arith.constant 0 : index
    %156 = vector.load %arg6[%c15_134, %c0_135, %c0_136] : memref<16x32x64xbf16, #tpu.memory_space<vmem>>, vector<1x32x64xbf16>
    %157 = vector.shape_cast %156 : vector<1x32x64xbf16> to vector<32x64xbf16>
    %cst_137 = arith.constant dense<0.000000e+00> : vector<9x64xf32>
    %158 = tpu.matmul %155, %157, %cst_137 {dimension_numbers = #tpu.dot_dimension_numbers<[1], [0], [0], [1], [0, 0, 1, 1], [], []>} : vector<9x32xbf16>, vector<32x64xbf16>, vector<9x64xf32> -> vector<9x64xf32>
    %159 = arith.addf %151, %158 : vector<9x64xf32>
    %cst_138 = arith.constant 0.000000e+00 : f32
    %160 = vector.broadcast %cst_138 : f32 to vector<9x64xf32>
    %161 = arith.maximumf %159, %160 : vector<9x64xf32>
    %162 = arith.truncf %161 : vector<9x64xf32> to vector<9x64xbf16>
    %c0_139 = arith.constant 0 : index
    %c0_140 = arith.constant 0 : index
    %163 = vector.load %arg10[%c0_139, %c0_140] : memref<1x64xf32, #tpu.memory_space<vmem>>, vector<1x64xf32>
    %c0_141 = arith.constant 0 : index
    %c0_142 = arith.constant 0 : index
    %c0_143 = arith.constant 0 : index
    %164 = vector.load %arg8[%c0_141, %c0_142, %c0_143] : memref<9x1x9xbf16, #tpu.memory_space<vmem>>, vector<1x1x9xbf16>
    %165 = vector.shape_cast %164 : vector<1x1x9xbf16> to vector<1x9xbf16>
    %cst_144 = arith.constant dense<0.000000e+00> : vector<1x64xf32>
    %166 = tpu.matmul %165, %162, %cst_144 {dimension_numbers = #tpu.dot_dimension_numbers<[1], [0], [0], [1], [0, 0, 1, 1], [], []>} : vector<1x9xbf16>, vector<9x64xbf16>, vector<1x64xf32> -> vector<1x64xf32>
    %167 = arith.truncf %166 : vector<1x64xf32> to vector<1x64xbf16>
    %c0_145 = arith.constant 0 : index
    %c0_146 = arith.constant 0 : index
    %c0_147 = arith.constant 0 : index
    %168 = vector.load %arg9[%c0_145, %c0_146, %c0_147] : memref<9x64x64xbf16, #tpu.memory_space<vmem>>, vector<1x64x64xbf16>
    %169 = vector.shape_cast %168 : vector<1x64x64xbf16> to vector<64x64xbf16>
    %cst_148 = arith.constant dense<0.000000e+00> : vector<1x64xf32>
    %170 = tpu.matmul %167, %169, %cst_148 {dimension_numbers = #tpu.dot_dimension_numbers<[1], [0], [0], [1], [0, 0, 1, 1], [], []>} : vector<1x64xbf16>, vector<64x64xbf16>, vector<1x64xf32> -> vector<1x64xf32>
    %171 = arith.addf %163, %170 : vector<1x64xf32>
    %c1_149 = arith.constant 1 : index
    %c0_150 = arith.constant 0 : index
    %c0_151 = arith.constant 0 : index
    %172 = vector.load %arg8[%c1_149, %c0_150, %c0_151] : memref<9x1x9xbf16, #tpu.memory_space<vmem>>, vector<1x1x9xbf16>
    %173 = vector.shape_cast %172 : vector<1x1x9xbf16> to vector<1x9xbf16>
    %cst_152 = arith.constant dense<0.000000e+00> : vector<1x64xf32>
    %174 = tpu.matmul %173, %162, %cst_152 {dimension_numbers = #tpu.dot_dimension_numbers<[1], [0], [0], [1], [0, 0, 1, 1], [], []>} : vector<1x9xbf16>, vector<9x64xbf16>, vector<1x64xf32> -> vector<1x64xf32>
    %175 = arith.truncf %174 : vector<1x64xf32> to vector<1x64xbf16>
    %c1_153 = arith.constant 1 : index
    %c0_154 = arith.constant 0 : index
    %c0_155 = arith.constant 0 : index
    %176 = vector.load %arg9[%c1_153, %c0_154, %c0_155] : memref<9x64x64xbf16, #tpu.memory_space<vmem>>, vector<1x64x64xbf16>
    %177 = vector.shape_cast %176 : vector<1x64x64xbf16> to vector<64x64xbf16>
    %cst_156 = arith.constant dense<0.000000e+00> : vector<1x64xf32>
    %178 = tpu.matmul %175, %177, %cst_156 {dimension_numbers = #tpu.dot_dimension_numbers<[1], [0], [0], [1], [0, 0, 1, 1], [], []>} : vector<1x64xbf16>, vector<64x64xbf16>, vector<1x64xf32> -> vector<1x64xf32>
    %179 = arith.addf %171, %178 : vector<1x64xf32>
    %c2_157 = arith.constant 2 : index
    %c0_158 = arith.constant 0 : index
    %c0_159 = arith.constant 0 : index
    %180 = vector.load %arg8[%c2_157, %c0_158, %c0_159] : memref<9x1x9xbf16, #tpu.memory_space<vmem>>, vector<1x1x9xbf16>
    %181 = vector.shape_cast %180 : vector<1x1x9xbf16> to vector<1x9xbf16>
    %cst_160 = arith.constant dense<0.000000e+00> : vector<1x64xf32>
    %182 = tpu.matmul %181, %162, %cst_160 {dimension_numbers = #tpu.dot_dimension_numbers<[1], [0], [0], [1], [0, 0, 1, 1], [], []>} : vector<1x9xbf16>, vector<9x64xbf16>, vector<1x64xf32> -> vector<1x64xf32>
    %183 = arith.truncf %182 : vector<1x64xf32> to vector<1x64xbf16>
    %c2_161 = arith.constant 2 : index
    %c0_162 = arith.constant 0 : index
    %c0_163 = arith.constant 0 : index
    %184 = vector.load %arg9[%c2_161, %c0_162, %c0_163] : memref<9x64x64xbf16, #tpu.memory_space<vmem>>, vector<1x64x64xbf16>
    %185 = vector.shape_cast %184 : vector<1x64x64xbf16> to vector<64x64xbf16>
    %cst_164 = arith.constant dense<0.000000e+00> : vector<1x64xf32>
    %186 = tpu.matmul %183, %185, %cst_164 {dimension_numbers = #tpu.dot_dimension_numbers<[1], [0], [0], [1], [0, 0, 1, 1], [], []>} : vector<1x64xbf16>, vector<64x64xbf16>, vector<1x64xf32> -> vector<1x64xf32>
    %187 = arith.addf %179, %186 : vector<1x64xf32>
    %c3_165 = arith.constant 3 : index
    %c0_166 = arith.constant 0 : index
    %c0_167 = arith.constant 0 : index
    %188 = vector.load %arg8[%c3_165, %c0_166, %c0_167] : memref<9x1x9xbf16, #tpu.memory_space<vmem>>, vector<1x1x9xbf16>
    %189 = vector.shape_cast %188 : vector<1x1x9xbf16> to vector<1x9xbf16>
    %cst_168 = arith.constant dense<0.000000e+00> : vector<1x64xf32>
    %190 = tpu.matmul %189, %162, %cst_168 {dimension_numbers = #tpu.dot_dimension_numbers<[1], [0], [0], [1], [0, 0, 1, 1], [], []>} : vector<1x9xbf16>, vector<9x64xbf16>, vector<1x64xf32> -> vector<1x64xf32>
    %191 = arith.truncf %190 : vector<1x64xf32> to vector<1x64xbf16>
    %c3_169 = arith.constant 3 : index
    %c0_170 = arith.constant 0 : index
    %c0_171 = arith.constant 0 : index
    %192 = vector.load %arg9[%c3_169, %c0_170, %c0_171] : memref<9x64x64xbf16, #tpu.memory_space<vmem>>, vector<1x64x64xbf16>
    %193 = vector.shape_cast %192 : vector<1x64x64xbf16> to vector<64x64xbf16>
    %cst_172 = arith.constant dense<0.000000e+00> : vector<1x64xf32>
    %194 = tpu.matmul %191, %193, %cst_172 {dimension_numbers = #tpu.dot_dimension_numbers<[1], [0], [0], [1], [0, 0, 1, 1], [], []>} : vector<1x64xbf16>, vector<64x64xbf16>, vector<1x64xf32> -> vector<1x64xf32>
    %195 = arith.addf %187, %194 : vector<1x64xf32>
    %c4_173 = arith.constant 4 : index
    %c0_174 = arith.constant 0 : index
    %c0_175 = arith.constant 0 : index
    %196 = vector.load %arg8[%c4_173, %c0_174, %c0_175] : memref<9x1x9xbf16, #tpu.memory_space<vmem>>, vector<1x1x9xbf16>
    %197 = vector.shape_cast %196 : vector<1x1x9xbf16> to vector<1x9xbf16>
    %cst_176 = arith.constant dense<0.000000e+00> : vector<1x64xf32>
    %198 = tpu.matmul %197, %162, %cst_176 {dimension_numbers = #tpu.dot_dimension_numbers<[1], [0], [0], [1], [0, 0, 1, 1], [], []>} : vector<1x9xbf16>, vector<9x64xbf16>, vector<1x64xf32> -> vector<1x64xf32>
    %199 = arith.truncf %198 : vector<1x64xf32> to vector<1x64xbf16>
    %c4_177 = arith.constant 4 : index
    %c0_178 = arith.constant 0 : index
    %c0_179 = arith.constant 0 : index
    %200 = vector.load %arg9[%c4_177, %c0_178, %c0_179] : memref<9x64x64xbf16, #tpu.memory_space<vmem>>, vector<1x64x64xbf16>
    %201 = vector.shape_cast %200 : vector<1x64x64xbf16> to vector<64x64xbf16>
    %cst_180 = arith.constant dense<0.000000e+00> : vector<1x64xf32>
    %202 = tpu.matmul %199, %201, %cst_180 {dimension_numbers = #tpu.dot_dimension_numbers<[1], [0], [0], [1], [0, 0, 1, 1], [], []>} : vector<1x64xbf16>, vector<64x64xbf16>, vector<1x64xf32> -> vector<1x64xf32>
    %203 = arith.addf %195, %202 : vector<1x64xf32>
    %c5_181 = arith.constant 5 : index
    %c0_182 = arith.constant 0 : index
    %c0_183 = arith.constant 0 : index
    %204 = vector.load %arg8[%c5_181, %c0_182, %c0_183] : memref<9x1x9xbf16, #tpu.memory_space<vmem>>, vector<1x1x9xbf16>
    %205 = vector.shape_cast %204 : vector<1x1x9xbf16> to vector<1x9xbf16>
    %cst_184 = arith.constant dense<0.000000e+00> : vector<1x64xf32>
    %206 = tpu.matmul %205, %162, %cst_184 {dimension_numbers = #tpu.dot_dimension_numbers<[1], [0], [0], [1], [0, 0, 1, 1], [], []>} : vector<1x9xbf16>, vector<9x64xbf16>, vector<1x64xf32> -> vector<1x64xf32>
    %207 = arith.truncf %206 : vector<1x64xf32> to vector<1x64xbf16>
    %c5_185 = arith.constant 5 : index
    %c0_186 = arith.constant 0 : index
    %c0_187 = arith.constant 0 : index
    %208 = vector.load %arg9[%c5_185, %c0_186, %c0_187] : memref<9x64x64xbf16, #tpu.memory_space<vmem>>, vector<1x64x64xbf16>
    %209 = vector.shape_cast %208 : vector<1x64x64xbf16> to vector<64x64xbf16>
    %cst_188 = arith.constant dense<0.000000e+00> : vector<1x64xf32>
    %210 = tpu.matmul %207, %209, %cst_188 {dimension_numbers = #tpu.dot_dimension_numbers<[1], [0], [0], [1], [0, 0, 1, 1], [], []>} : vector<1x64xbf16>, vector<64x64xbf16>, vector<1x64xf32> -> vector<1x64xf32>
    %211 = arith.addf %203, %210 : vector<1x64xf32>
    %c6_189 = arith.constant 6 : index
    %c0_190 = arith.constant 0 : index
    %c0_191 = arith.constant 0 : index
    %212 = vector.load %arg8[%c6_189, %c0_190, %c0_191] : memref<9x1x9xbf16, #tpu.memory_space<vmem>>, vector<1x1x9xbf16>
    %213 = vector.shape_cast %212 : vector<1x1x9xbf16> to vector<1x9xbf16>
    %cst_192 = arith.constant dense<0.000000e+00> : vector<1x64xf32>
    %214 = tpu.matmul %213, %162, %cst_192 {dimension_numbers = #tpu.dot_dimension_numbers<[1], [0], [0], [1], [0, 0, 1, 1], [], []>} : vector<1x9xbf16>, vector<9x64xbf16>, vector<1x64xf32> -> vector<1x64xf32>
    %215 = arith.truncf %214 : vector<1x64xf32> to vector<1x64xbf16>
    %c6_193 = arith.constant 6 : index
    %c0_194 = arith.constant 0 : index
    %c0_195 = arith.constant 0 : index
    %216 = vector.load %arg9[%c6_193, %c0_194, %c0_195] : memref<9x64x64xbf16, #tpu.memory_space<vmem>>, vector<1x64x64xbf16>
    %217 = vector.shape_cast %216 : vector<1x64x64xbf16> to vector<64x64xbf16>
    %cst_196 = arith.constant dense<0.000000e+00> : vector<1x64xf32>
    %218 = tpu.matmul %215, %217, %cst_196 {dimension_numbers = #tpu.dot_dimension_numbers<[1], [0], [0], [1], [0, 0, 1, 1], [], []>} : vector<1x64xbf16>, vector<64x64xbf16>, vector<1x64xf32> -> vector<1x64xf32>
    %219 = arith.addf %211, %218 : vector<1x64xf32>
    %c7_197 = arith.constant 7 : index
    %c0_198 = arith.constant 0 : index
    %c0_199 = arith.constant 0 : index
    %220 = vector.load %arg8[%c7_197, %c0_198, %c0_199] : memref<9x1x9xbf16, #tpu.memory_space<vmem>>, vector<1x1x9xbf16>
    %221 = vector.shape_cast %220 : vector<1x1x9xbf16> to vector<1x9xbf16>
    %cst_200 = arith.constant dense<0.000000e+00> : vector<1x64xf32>
    %222 = tpu.matmul %221, %162, %cst_200 {dimension_numbers = #tpu.dot_dimension_numbers<[1], [0], [0], [1], [0, 0, 1, 1], [], []>} : vector<1x9xbf16>, vector<9x64xbf16>, vector<1x64xf32> -> vector<1x64xf32>
    %223 = arith.truncf %222 : vector<1x64xf32> to vector<1x64xbf16>
    %c7_201 = arith.constant 7 : index
    %c0_202 = arith.constant 0 : index
    %c0_203 = arith.constant 0 : index
    %224 = vector.load %arg9[%c7_201, %c0_202, %c0_203] : memref<9x64x64xbf16, #tpu.memory_space<vmem>>, vector<1x64x64xbf16>
    %225 = vector.shape_cast %224 : vector<1x64x64xbf16> to vector<64x64xbf16>
    %cst_204 = arith.constant dense<0.000000e+00> : vector<1x64xf32>
    %226 = tpu.matmul %223, %225, %cst_204 {dimension_numbers = #tpu.dot_dimension_numbers<[1], [0], [0], [1], [0, 0, 1, 1], [], []>} : vector<1x64xbf16>, vector<64x64xbf16>, vector<1x64xf32> -> vector<1x64xf32>
    %227 = arith.addf %219, %226 : vector<1x64xf32>
    %c8_205 = arith.constant 8 : index
    %c0_206 = arith.constant 0 : index
    %c0_207 = arith.constant 0 : index
    %228 = vector.load %arg8[%c8_205, %c0_206, %c0_207] : memref<9x1x9xbf16, #tpu.memory_space<vmem>>, vector<1x1x9xbf16>
    %229 = vector.shape_cast %228 : vector<1x1x9xbf16> to vector<1x9xbf16>
    %cst_208 = arith.constant dense<0.000000e+00> : vector<1x64xf32>
    %230 = tpu.matmul %229, %162, %cst_208 {dimension_numbers = #tpu.dot_dimension_numbers<[1], [0], [0], [1], [0, 0, 1, 1], [], []>} : vector<1x9xbf16>, vector<9x64xbf16>, vector<1x64xf32> -> vector<1x64xf32>
    %231 = arith.truncf %230 : vector<1x64xf32> to vector<1x64xbf16>
    %c8_209 = arith.constant 8 : index
    %c0_210 = arith.constant 0 : index
    %c0_211 = arith.constant 0 : index
    %232 = vector.load %arg9[%c8_209, %c0_210, %c0_211] : memref<9x64x64xbf16, #tpu.memory_space<vmem>>, vector<1x64x64xbf16>
    %233 = vector.shape_cast %232 : vector<1x64x64xbf16> to vector<64x64xbf16>
    %cst_212 = arith.constant dense<0.000000e+00> : vector<1x64xf32>
    %234 = tpu.matmul %231, %233, %cst_212 {dimension_numbers = #tpu.dot_dimension_numbers<[1], [0], [0], [1], [0, 0, 1, 1], [], []>} : vector<1x64xbf16>, vector<64x64xbf16>, vector<1x64xf32> -> vector<1x64xf32>
    %235 = arith.addf %227, %234 : vector<1x64xf32>
    %cst_213 = arith.constant 0.000000e+00 : f32
    %236 = vector.broadcast %cst_213 : f32 to vector<1x64xf32>
    %237 = arith.maximumf %235, %236 : vector<1x64xf32>
    %238 = arith.truncf %237 : vector<1x64xf32> to vector<1x64xbf16>
    %c1_214 = arith.constant 1 : index
    %c0_215 = arith.constant 0 : index
    %c0_216 = arith.constant 0 : index
    %239 = vector.load %arg1[%c1_214, %c0_215, %c0_216] : memref<2x81x64xbf16, #tpu.memory_space<vmem>>, vector<1x81x64xbf16>
    %240 = vector.shape_cast %239 : vector<1x81x64xbf16> to vector<81x64xbf16>
    %c0_217 = arith.constant 0 : index
    %c0_218 = arith.constant 0 : index
    %241 = vector.load %arg3[%c0_217, %c0_218] : memref<64x128xbf16, #tpu.memory_space<vmem>>, vector<64x128xbf16>
    %cst_219 = arith.constant dense<0.000000e+00> : vector<81x128xf32>
    %242 = tpu.matmul %240, %241, %cst_219 {dimension_numbers = #tpu.dot_dimension_numbers<[1], [0], [0], [1], [0, 0, 1, 1], [], []>} : vector<81x64xbf16>, vector<64x128xbf16>, vector<81x128xf32> -> vector<81x128xf32>
    %243 = arith.truncf %242 : vector<81x128xf32> to vector<81x128xbf16>
    %c0_220 = arith.constant 0 : index
    %c0_221 = arith.constant 0 : index
    %244 = vector.load %arg4[%c0_220, %c0_221] : memref<1x32xf32, #tpu.memory_space<vmem>>, vector<1x32xf32>
    %c0_222 = arith.constant 0 : index
    %c0_223 = arith.constant 0 : index
    %c0_224 = arith.constant 0 : index
    %245 = vector.load %arg2[%c0_222, %c0_223, %c0_224] : memref<4x64x81xbf16, #tpu.memory_space<vmem>>, vector<1x64x81xbf16>
    %246 = vector.shape_cast %245 : vector<1x64x81xbf16> to vector<64x81xbf16>
    %247 = vector.extract_strided_slice %243 {offsets = [0, 0], sizes = [81, 32], strides = [1, 1]} : vector<81x128xbf16> to vector<81x32xbf16>
    %cst_225 = arith.constant dense<0.000000e+00> : vector<64x32xf32>
    %248 = tpu.matmul %246, %247, %cst_225 {dimension_numbers = #tpu.dot_dimension_numbers<[1], [0], [0], [1], [0, 0, 1, 1], [], []>} : vector<64x81xbf16>, vector<81x32xbf16>, vector<64x32xf32> -> vector<64x32xf32>
    %249 = vector.broadcast %244 : vector<1x32xf32> to vector<64x32xf32>
    %250 = arith.addf %249, %248 : vector<64x32xf32>
    %c1_226 = arith.constant 1 : index
    %c0_227 = arith.constant 0 : index
    %c0_228 = arith.constant 0 : index
    %251 = vector.load %arg2[%c1_226, %c0_227, %c0_228] : memref<4x64x81xbf16, #tpu.memory_space<vmem>>, vector<1x64x81xbf16>
    %252 = vector.shape_cast %251 : vector<1x64x81xbf16> to vector<64x81xbf16>
    %253 = vector.extract_strided_slice %243 {offsets = [0, 32], sizes = [81, 32], strides = [1, 1]} : vector<81x128xbf16> to vector<81x32xbf16>
    %cst_229 = arith.constant dense<0.000000e+00> : vector<64x32xf32>
    %254 = tpu.matmul %252, %253, %cst_229 {dimension_numbers = #tpu.dot_dimension_numbers<[1], [0], [0], [1], [0, 0, 1, 1], [], []>} : vector<64x81xbf16>, vector<81x32xbf16>, vector<64x32xf32> -> vector<64x32xf32>
    %255 = arith.addf %250, %254 : vector<64x32xf32>
    %c2_230 = arith.constant 2 : index
    %c0_231 = arith.constant 0 : index
    %c0_232 = arith.constant 0 : index
    %256 = vector.load %arg2[%c2_230, %c0_231, %c0_232] : memref<4x64x81xbf16, #tpu.memory_space<vmem>>, vector<1x64x81xbf16>
    %257 = vector.shape_cast %256 : vector<1x64x81xbf16> to vector<64x81xbf16>
    %258 = vector.extract_strided_slice %243 {offsets = [0, 64], sizes = [81, 32], strides = [1, 1]} : vector<81x128xbf16> to vector<81x32xbf16>
    %cst_233 = arith.constant dense<0.000000e+00> : vector<64x32xf32>
    %259 = tpu.matmul %257, %258, %cst_233 {dimension_numbers = #tpu.dot_dimension_numbers<[1], [0], [0], [1], [0, 0, 1, 1], [], []>} : vector<64x81xbf16>, vector<81x32xbf16>, vector<64x32xf32> -> vector<64x32xf32>
    %260 = arith.addf %255, %259 : vector<64x32xf32>
    %c3_234 = arith.constant 3 : index
    %c0_235 = arith.constant 0 : index
    %c0_236 = arith.constant 0 : index
    %261 = vector.load %arg2[%c3_234, %c0_235, %c0_236] : memref<4x64x81xbf16, #tpu.memory_space<vmem>>, vector<1x64x81xbf16>
    %262 = vector.shape_cast %261 : vector<1x64x81xbf16> to vector<64x81xbf16>
    %263 = vector.extract_strided_slice %243 {offsets = [0, 96], sizes = [81, 32], strides = [1, 1]} : vector<81x128xbf16> to vector<81x32xbf16>
    %cst_237 = arith.constant dense<0.000000e+00> : vector<64x32xf32>
    %264 = tpu.matmul %262, %263, %cst_237 {dimension_numbers = #tpu.dot_dimension_numbers<[1], [0], [0], [1], [0, 0, 1, 1], [], []>} : vector<64x81xbf16>, vector<81x32xbf16>, vector<64x32xf32> -> vector<64x32xf32>
    %265 = arith.addf %260, %264 : vector<64x32xf32>
    %cst_238 = arith.constant 0.000000e+00 : f32
    %266 = vector.broadcast %cst_238 : f32 to vector<64x32xf32>
    %267 = arith.maximumf %265, %266 : vector<64x32xf32>
    %268 = arith.truncf %267 : vector<64x32xf32> to vector<64x32xbf16>
    %c0_239 = arith.constant 0 : index
    %c0_240 = arith.constant 0 : index
    %269 = vector.load %arg7[%c0_239, %c0_240] : memref<1x64xf32, #tpu.memory_space<vmem>>, vector<1x64xf32>
    %c0_241 = arith.constant 0 : index
    %c0_242 = arith.constant 0 : index
    %c0_243 = arith.constant 0 : index
    %270 = vector.load %arg5[%c0_241, %c0_242, %c0_243] : memref<16x9x64xbf16, #tpu.memory_space<vmem>>, vector<1x9x64xbf16>
    %271 = vector.shape_cast %270 : vector<1x9x64xbf16> to vector<9x64xbf16>
    %cst_244 = arith.constant dense<0.000000e+00> : vector<9x32xf32>
    %272 = tpu.matmul %271, %268, %cst_244 {dimension_numbers = #tpu.dot_dimension_numbers<[1], [0], [0], [1], [0, 0, 1, 1], [], []>} : vector<9x64xbf16>, vector<64x32xbf16>, vector<9x32xf32> -> vector<9x32xf32>
    %273 = arith.truncf %272 : vector<9x32xf32> to vector<9x32xbf16>
    %c0_245 = arith.constant 0 : index
    %c0_246 = arith.constant 0 : index
    %c0_247 = arith.constant 0 : index
    %274 = vector.load %arg6[%c0_245, %c0_246, %c0_247] : memref<16x32x64xbf16, #tpu.memory_space<vmem>>, vector<1x32x64xbf16>
    %275 = vector.shape_cast %274 : vector<1x32x64xbf16> to vector<32x64xbf16>
    %cst_248 = arith.constant dense<0.000000e+00> : vector<9x64xf32>
    %276 = tpu.matmul %273, %275, %cst_248 {dimension_numbers = #tpu.dot_dimension_numbers<[1], [0], [0], [1], [0, 0, 1, 1], [], []>} : vector<9x32xbf16>, vector<32x64xbf16>, vector<9x64xf32> -> vector<9x64xf32>
    %277 = vector.broadcast %269 : vector<1x64xf32> to vector<9x64xf32>
    %278 = arith.addf %277, %276 : vector<9x64xf32>
    %c1_249 = arith.constant 1 : index
    %c0_250 = arith.constant 0 : index
    %c0_251 = arith.constant 0 : index
    %279 = vector.load %arg5[%c1_249, %c0_250, %c0_251] : memref<16x9x64xbf16, #tpu.memory_space<vmem>>, vector<1x9x64xbf16>
    %280 = vector.shape_cast %279 : vector<1x9x64xbf16> to vector<9x64xbf16>
    %cst_252 = arith.constant dense<0.000000e+00> : vector<9x32xf32>
    %281 = tpu.matmul %280, %268, %cst_252 {dimension_numbers = #tpu.dot_dimension_numbers<[1], [0], [0], [1], [0, 0, 1, 1], [], []>} : vector<9x64xbf16>, vector<64x32xbf16>, vector<9x32xf32> -> vector<9x32xf32>
    %282 = arith.truncf %281 : vector<9x32xf32> to vector<9x32xbf16>
    %c1_253 = arith.constant 1 : index
    %c0_254 = arith.constant 0 : index
    %c0_255 = arith.constant 0 : index
    %283 = vector.load %arg6[%c1_253, %c0_254, %c0_255] : memref<16x32x64xbf16, #tpu.memory_space<vmem>>, vector<1x32x64xbf16>
    %284 = vector.shape_cast %283 : vector<1x32x64xbf16> to vector<32x64xbf16>
    %cst_256 = arith.constant dense<0.000000e+00> : vector<9x64xf32>
    %285 = tpu.matmul %282, %284, %cst_256 {dimension_numbers = #tpu.dot_dimension_numbers<[1], [0], [0], [1], [0, 0, 1, 1], [], []>} : vector<9x32xbf16>, vector<32x64xbf16>, vector<9x64xf32> -> vector<9x64xf32>
    %286 = arith.addf %278, %285 : vector<9x64xf32>
    %c2_257 = arith.constant 2 : index
    %c0_258 = arith.constant 0 : index
    %c0_259 = arith.constant 0 : index
    %287 = vector.load %arg5[%c2_257, %c0_258, %c0_259] : memref<16x9x64xbf16, #tpu.memory_space<vmem>>, vector<1x9x64xbf16>
    %288 = vector.shape_cast %287 : vector<1x9x64xbf16> to vector<9x64xbf16>
    %cst_260 = arith.constant dense<0.000000e+00> : vector<9x32xf32>
    %289 = tpu.matmul %288, %268, %cst_260 {dimension_numbers = #tpu.dot_dimension_numbers<[1], [0], [0], [1], [0, 0, 1, 1], [], []>} : vector<9x64xbf16>, vector<64x32xbf16>, vector<9x32xf32> -> vector<9x32xf32>
    %290 = arith.truncf %289 : vector<9x32xf32> to vector<9x32xbf16>
    %c2_261 = arith.constant 2 : index
    %c0_262 = arith.constant 0 : index
    %c0_263 = arith.constant 0 : index
    %291 = vector.load %arg6[%c2_261, %c0_262, %c0_263] : memref<16x32x64xbf16, #tpu.memory_space<vmem>>, vector<1x32x64xbf16>
    %292 = vector.shape_cast %291 : vector<1x32x64xbf16> to vector<32x64xbf16>
    %cst_264 = arith.constant dense<0.000000e+00> : vector<9x64xf32>
    %293 = tpu.matmul %290, %292, %cst_264 {dimension_numbers = #tpu.dot_dimension_numbers<[1], [0], [0], [1], [0, 0, 1, 1], [], []>} : vector<9x32xbf16>, vector<32x64xbf16>, vector<9x64xf32> -> vector<9x64xf32>
    %294 = arith.addf %286, %293 : vector<9x64xf32>
    %c3_265 = arith.constant 3 : index
    %c0_266 = arith.constant 0 : index
    %c0_267 = arith.constant 0 : index
    %295 = vector.load %arg5[%c3_265, %c0_266, %c0_267] : memref<16x9x64xbf16, #tpu.memory_space<vmem>>, vector<1x9x64xbf16>
    %296 = vector.shape_cast %295 : vector<1x9x64xbf16> to vector<9x64xbf16>
    %cst_268 = arith.constant dense<0.000000e+00> : vector<9x32xf32>
    %297 = tpu.matmul %296, %268, %cst_268 {dimension_numbers = #tpu.dot_dimension_numbers<[1], [0], [0], [1], [0, 0, 1, 1], [], []>} : vector<9x64xbf16>, vector<64x32xbf16>, vector<9x32xf32> -> vector<9x32xf32>
    %298 = arith.truncf %297 : vector<9x32xf32> to vector<9x32xbf16>
    %c3_269 = arith.constant 3 : index
    %c0_270 = arith.constant 0 : index
    %c0_271 = arith.constant 0 : index
    %299 = vector.load %arg6[%c3_269, %c0_270, %c0_271] : memref<16x32x64xbf16, #tpu.memory_space<vmem>>, vector<1x32x64xbf16>
    %300 = vector.shape_cast %299 : vector<1x32x64xbf16> to vector<32x64xbf16>
    %cst_272 = arith.constant dense<0.000000e+00> : vector<9x64xf32>
    %301 = tpu.matmul %298, %300, %cst_272 {dimension_numbers = #tpu.dot_dimension_numbers<[1], [0], [0], [1], [0, 0, 1, 1], [], []>} : vector<9x32xbf16>, vector<32x64xbf16>, vector<9x64xf32> -> vector<9x64xf32>
    %302 = arith.addf %294, %301 : vector<9x64xf32>
    %c4_273 = arith.constant 4 : index
    %c0_274 = arith.constant 0 : index
    %c0_275 = arith.constant 0 : index
    %303 = vector.load %arg5[%c4_273, %c0_274, %c0_275] : memref<16x9x64xbf16, #tpu.memory_space<vmem>>, vector<1x9x64xbf16>
    %304 = vector.shape_cast %303 : vector<1x9x64xbf16> to vector<9x64xbf16>
    %cst_276 = arith.constant dense<0.000000e+00> : vector<9x32xf32>
    %305 = tpu.matmul %304, %268, %cst_276 {dimension_numbers = #tpu.dot_dimension_numbers<[1], [0], [0], [1], [0, 0, 1, 1], [], []>} : vector<9x64xbf16>, vector<64x32xbf16>, vector<9x32xf32> -> vector<9x32xf32>
    %306 = arith.truncf %305 : vector<9x32xf32> to vector<9x32xbf16>
    %c4_277 = arith.constant 4 : index
    %c0_278 = arith.constant 0 : index
    %c0_279 = arith.constant 0 : index
    %307 = vector.load %arg6[%c4_277, %c0_278, %c0_279] : memref<16x32x64xbf16, #tpu.memory_space<vmem>>, vector<1x32x64xbf16>
    %308 = vector.shape_cast %307 : vector<1x32x64xbf16> to vector<32x64xbf16>
    %cst_280 = arith.constant dense<0.000000e+00> : vector<9x64xf32>
    %309 = tpu.matmul %306, %308, %cst_280 {dimension_numbers = #tpu.dot_dimension_numbers<[1], [0], [0], [1], [0, 0, 1, 1], [], []>} : vector<9x32xbf16>, vector<32x64xbf16>, vector<9x64xf32> -> vector<9x64xf32>
    %310 = arith.addf %302, %309 : vector<9x64xf32>
    %c5_281 = arith.constant 5 : index
    %c0_282 = arith.constant 0 : index
    %c0_283 = arith.constant 0 : index
    %311 = vector.load %arg5[%c5_281, %c0_282, %c0_283] : memref<16x9x64xbf16, #tpu.memory_space<vmem>>, vector<1x9x64xbf16>
    %312 = vector.shape_cast %311 : vector<1x9x64xbf16> to vector<9x64xbf16>
    %cst_284 = arith.constant dense<0.000000e+00> : vector<9x32xf32>
    %313 = tpu.matmul %312, %268, %cst_284 {dimension_numbers = #tpu.dot_dimension_numbers<[1], [0], [0], [1], [0, 0, 1, 1], [], []>} : vector<9x64xbf16>, vector<64x32xbf16>, vector<9x32xf32> -> vector<9x32xf32>
    %314 = arith.truncf %313 : vector<9x32xf32> to vector<9x32xbf16>
    %c5_285 = arith.constant 5 : index
    %c0_286 = arith.constant 0 : index
    %c0_287 = arith.constant 0 : index
    %315 = vector.load %arg6[%c5_285, %c0_286, %c0_287] : memref<16x32x64xbf16, #tpu.memory_space<vmem>>, vector<1x32x64xbf16>
    %316 = vector.shape_cast %315 : vector<1x32x64xbf16> to vector<32x64xbf16>
    %cst_288 = arith.constant dense<0.000000e+00> : vector<9x64xf32>
    %317 = tpu.matmul %314, %316, %cst_288 {dimension_numbers = #tpu.dot_dimension_numbers<[1], [0], [0], [1], [0, 0, 1, 1], [], []>} : vector<9x32xbf16>, vector<32x64xbf16>, vector<9x64xf32> -> vector<9x64xf32>
    %318 = arith.addf %310, %317 : vector<9x64xf32>
    %c6_289 = arith.constant 6 : index
    %c0_290 = arith.constant 0 : index
    %c0_291 = arith.constant 0 : index
    %319 = vector.load %arg5[%c6_289, %c0_290, %c0_291] : memref<16x9x64xbf16, #tpu.memory_space<vmem>>, vector<1x9x64xbf16>
    %320 = vector.shape_cast %319 : vector<1x9x64xbf16> to vector<9x64xbf16>
    %cst_292 = arith.constant dense<0.000000e+00> : vector<9x32xf32>
    %321 = tpu.matmul %320, %268, %cst_292 {dimension_numbers = #tpu.dot_dimension_numbers<[1], [0], [0], [1], [0, 0, 1, 1], [], []>} : vector<9x64xbf16>, vector<64x32xbf16>, vector<9x32xf32> -> vector<9x32xf32>
    %322 = arith.truncf %321 : vector<9x32xf32> to vector<9x32xbf16>
    %c6_293 = arith.constant 6 : index
    %c0_294 = arith.constant 0 : index
    %c0_295 = arith.constant 0 : index
    %323 = vector.load %arg6[%c6_293, %c0_294, %c0_295] : memref<16x32x64xbf16, #tpu.memory_space<vmem>>, vector<1x32x64xbf16>
    %324 = vector.shape_cast %323 : vector<1x32x64xbf16> to vector<32x64xbf16>
    %cst_296 = arith.constant dense<0.000000e+00> : vector<9x64xf32>
    %325 = tpu.matmul %322, %324, %cst_296 {dimension_numbers = #tpu.dot_dimension_numbers<[1], [0], [0], [1], [0, 0, 1, 1], [], []>} : vector<9x32xbf16>, vector<32x64xbf16>, vector<9x64xf32> -> vector<9x64xf32>
    %326 = arith.addf %318, %325 : vector<9x64xf32>
    %c7_297 = arith.constant 7 : index
    %c0_298 = arith.constant 0 : index
    %c0_299 = arith.constant 0 : index
    %327 = vector.load %arg5[%c7_297, %c0_298, %c0_299] : memref<16x9x64xbf16, #tpu.memory_space<vmem>>, vector<1x9x64xbf16>
    %328 = vector.shape_cast %327 : vector<1x9x64xbf16> to vector<9x64xbf16>
    %cst_300 = arith.constant dense<0.000000e+00> : vector<9x32xf32>
    %329 = tpu.matmul %328, %268, %cst_300 {dimension_numbers = #tpu.dot_dimension_numbers<[1], [0], [0], [1], [0, 0, 1, 1], [], []>} : vector<9x64xbf16>, vector<64x32xbf16>, vector<9x32xf32> -> vector<9x32xf32>
    %330 = arith.truncf %329 : vector<9x32xf32> to vector<9x32xbf16>
    %c7_301 = arith.constant 7 : index
    %c0_302 = arith.constant 0 : index
    %c0_303 = arith.constant 0 : index
    %331 = vector.load %arg6[%c7_301, %c0_302, %c0_303] : memref<16x32x64xbf16, #tpu.memory_space<vmem>>, vector<1x32x64xbf16>
    %332 = vector.shape_cast %331 : vector<1x32x64xbf16> to vector<32x64xbf16>
    %cst_304 = arith.constant dense<0.000000e+00> : vector<9x64xf32>
    %333 = tpu.matmul %330, %332, %cst_304 {dimension_numbers = #tpu.dot_dimension_numbers<[1], [0], [0], [1], [0, 0, 1, 1], [], []>} : vector<9x32xbf16>, vector<32x64xbf16>, vector<9x64xf32> -> vector<9x64xf32>
    %334 = arith.addf %326, %333 : vector<9x64xf32>
    %c8_305 = arith.constant 8 : index
    %c0_306 = arith.constant 0 : index
    %c0_307 = arith.constant 0 : index
    %335 = vector.load %arg5[%c8_305, %c0_306, %c0_307] : memref<16x9x64xbf16, #tpu.memory_space<vmem>>, vector<1x9x64xbf16>
    %336 = vector.shape_cast %335 : vector<1x9x64xbf16> to vector<9x64xbf16>
    %cst_308 = arith.constant dense<0.000000e+00> : vector<9x32xf32>
    %337 = tpu.matmul %336, %268, %cst_308 {dimension_numbers = #tpu.dot_dimension_numbers<[1], [0], [0], [1], [0, 0, 1, 1], [], []>} : vector<9x64xbf16>, vector<64x32xbf16>, vector<9x32xf32> -> vector<9x32xf32>
    %338 = arith.truncf %337 : vector<9x32xf32> to vector<9x32xbf16>
    %c8_309 = arith.constant 8 : index
    %c0_310 = arith.constant 0 : index
    %c0_311 = arith.constant 0 : index
    %339 = vector.load %arg6[%c8_309, %c0_310, %c0_311] : memref<16x32x64xbf16, #tpu.memory_space<vmem>>, vector<1x32x64xbf16>
    %340 = vector.shape_cast %339 : vector<1x32x64xbf16> to vector<32x64xbf16>
    %cst_312 = arith.constant dense<0.000000e+00> : vector<9x64xf32>
    %341 = tpu.matmul %338, %340, %cst_312 {dimension_numbers = #tpu.dot_dimension_numbers<[1], [0], [0], [1], [0, 0, 1, 1], [], []>} : vector<9x32xbf16>, vector<32x64xbf16>, vector<9x64xf32> -> vector<9x64xf32>
    %342 = arith.addf %334, %341 : vector<9x64xf32>
    %c9_313 = arith.constant 9 : index
    %c0_314 = arith.constant 0 : index
    %c0_315 = arith.constant 0 : index
    %343 = vector.load %arg5[%c9_313, %c0_314, %c0_315] : memref<16x9x64xbf16, #tpu.memory_space<vmem>>, vector<1x9x64xbf16>
    %344 = vector.shape_cast %343 : vector<1x9x64xbf16> to vector<9x64xbf16>
    %cst_316 = arith.constant dense<0.000000e+00> : vector<9x32xf32>
    %345 = tpu.matmul %344, %268, %cst_316 {dimension_numbers = #tpu.dot_dimension_numbers<[1], [0], [0], [1], [0, 0, 1, 1], [], []>} : vector<9x64xbf16>, vector<64x32xbf16>, vector<9x32xf32> -> vector<9x32xf32>
    %346 = arith.truncf %345 : vector<9x32xf32> to vector<9x32xbf16>
    %c9_317 = arith.constant 9 : index
    %c0_318 = arith.constant 0 : index
    %c0_319 = arith.constant 0 : index
    %347 = vector.load %arg6[%c9_317, %c0_318, %c0_319] : memref<16x32x64xbf16, #tpu.memory_space<vmem>>, vector<1x32x64xbf16>
    %348 = vector.shape_cast %347 : vector<1x32x64xbf16> to vector<32x64xbf16>
    %cst_320 = arith.constant dense<0.000000e+00> : vector<9x64xf32>
    %349 = tpu.matmul %346, %348, %cst_320 {dimension_numbers = #tpu.dot_dimension_numbers<[1], [0], [0], [1], [0, 0, 1, 1], [], []>} : vector<9x32xbf16>, vector<32x64xbf16>, vector<9x64xf32> -> vector<9x64xf32>
    %350 = arith.addf %342, %349 : vector<9x64xf32>
    %c10_321 = arith.constant 10 : index
    %c0_322 = arith.constant 0 : index
    %c0_323 = arith.constant 0 : index
    %351 = vector.load %arg5[%c10_321, %c0_322, %c0_323] : memref<16x9x64xbf16, #tpu.memory_space<vmem>>, vector<1x9x64xbf16>
    %352 = vector.shape_cast %351 : vector<1x9x64xbf16> to vector<9x64xbf16>
    %cst_324 = arith.constant dense<0.000000e+00> : vector<9x32xf32>
    %353 = tpu.matmul %352, %268, %cst_324 {dimension_numbers = #tpu.dot_dimension_numbers<[1], [0], [0], [1], [0, 0, 1, 1], [], []>} : vector<9x64xbf16>, vector<64x32xbf16>, vector<9x32xf32> -> vector<9x32xf32>
    %354 = arith.truncf %353 : vector<9x32xf32> to vector<9x32xbf16>
    %c10_325 = arith.constant 10 : index
    %c0_326 = arith.constant 0 : index
    %c0_327 = arith.constant 0 : index
    %355 = vector.load %arg6[%c10_325, %c0_326, %c0_327] : memref<16x32x64xbf16, #tpu.memory_space<vmem>>, vector<1x32x64xbf16>
    %356 = vector.shape_cast %355 : vector<1x32x64xbf16> to vector<32x64xbf16>
    %cst_328 = arith.constant dense<0.000000e+00> : vector<9x64xf32>
    %357 = tpu.matmul %354, %356, %cst_328 {dimension_numbers = #tpu.dot_dimension_numbers<[1], [0], [0], [1], [0, 0, 1, 1], [], []>} : vector<9x32xbf16>, vector<32x64xbf16>, vector<9x64xf32> -> vector<9x64xf32>
    %358 = arith.addf %350, %357 : vector<9x64xf32>
    %c11_329 = arith.constant 11 : index
    %c0_330 = arith.constant 0 : index
    %c0_331 = arith.constant 0 : index
    %359 = vector.load %arg5[%c11_329, %c0_330, %c0_331] : memref<16x9x64xbf16, #tpu.memory_space<vmem>>, vector<1x9x64xbf16>
    %360 = vector.shape_cast %359 : vector<1x9x64xbf16> to vector<9x64xbf16>
    %cst_332 = arith.constant dense<0.000000e+00> : vector<9x32xf32>
    %361 = tpu.matmul %360, %268, %cst_332 {dimension_numbers = #tpu.dot_dimension_numbers<[1], [0], [0], [1], [0, 0, 1, 1], [], []>} : vector<9x64xbf16>, vector<64x32xbf16>, vector<9x32xf32> -> vector<9x32xf32>
    %362 = arith.truncf %361 : vector<9x32xf32> to vector<9x32xbf16>
    %c11_333 = arith.constant 11 : index
    %c0_334 = arith.constant 0 : index
    %c0_335 = arith.constant 0 : index
    %363 = vector.load %arg6[%c11_333, %c0_334, %c0_335] : memref<16x32x64xbf16, #tpu.memory_space<vmem>>, vector<1x32x64xbf16>
    %364 = vector.shape_cast %363 : vector<1x32x64xbf16> to vector<32x64xbf16>
    %cst_336 = arith.constant dense<0.000000e+00> : vector<9x64xf32>
    %365 = tpu.matmul %362, %364, %cst_336 {dimension_numbers = #tpu.dot_dimension_numbers<[1], [0], [0], [1], [0, 0, 1, 1], [], []>} : vector<9x32xbf16>, vector<32x64xbf16>, vector<9x64xf32> -> vector<9x64xf32>
    %366 = arith.addf %358, %365 : vector<9x64xf32>
    %c12_337 = arith.constant 12 : index
    %c0_338 = arith.constant 0 : index
    %c0_339 = arith.constant 0 : index
    %367 = vector.load %arg5[%c12_337, %c0_338, %c0_339] : memref<16x9x64xbf16, #tpu.memory_space<vmem>>, vector<1x9x64xbf16>
    %368 = vector.shape_cast %367 : vector<1x9x64xbf16> to vector<9x64xbf16>
    %cst_340 = arith.constant dense<0.000000e+00> : vector<9x32xf32>
    %369 = tpu.matmul %368, %268, %cst_340 {dimension_numbers = #tpu.dot_dimension_numbers<[1], [0], [0], [1], [0, 0, 1, 1], [], []>} : vector<9x64xbf16>, vector<64x32xbf16>, vector<9x32xf32> -> vector<9x32xf32>
    %370 = arith.truncf %369 : vector<9x32xf32> to vector<9x32xbf16>
    %c12_341 = arith.constant 12 : index
    %c0_342 = arith.constant 0 : index
    %c0_343 = arith.constant 0 : index
    %371 = vector.load %arg6[%c12_341, %c0_342, %c0_343] : memref<16x32x64xbf16, #tpu.memory_space<vmem>>, vector<1x32x64xbf16>
    %372 = vector.shape_cast %371 : vector<1x32x64xbf16> to vector<32x64xbf16>
    %cst_344 = arith.constant dense<0.000000e+00> : vector<9x64xf32>
    %373 = tpu.matmul %370, %372, %cst_344 {dimension_numbers = #tpu.dot_dimension_numbers<[1], [0], [0], [1], [0, 0, 1, 1], [], []>} : vector<9x32xbf16>, vector<32x64xbf16>, vector<9x64xf32> -> vector<9x64xf32>
    %374 = arith.addf %366, %373 : vector<9x64xf32>
    %c13_345 = arith.constant 13 : index
    %c0_346 = arith.constant 0 : index
    %c0_347 = arith.constant 0 : index
    %375 = vector.load %arg5[%c13_345, %c0_346, %c0_347] : memref<16x9x64xbf16, #tpu.memory_space<vmem>>, vector<1x9x64xbf16>
    %376 = vector.shape_cast %375 : vector<1x9x64xbf16> to vector<9x64xbf16>
    %cst_348 = arith.constant dense<0.000000e+00> : vector<9x32xf32>
    %377 = tpu.matmul %376, %268, %cst_348 {dimension_numbers = #tpu.dot_dimension_numbers<[1], [0], [0], [1], [0, 0, 1, 1], [], []>} : vector<9x64xbf16>, vector<64x32xbf16>, vector<9x32xf32> -> vector<9x32xf32>
    %378 = arith.truncf %377 : vector<9x32xf32> to vector<9x32xbf16>
    %c13_349 = arith.constant 13 : index
    %c0_350 = arith.constant 0 : index
    %c0_351 = arith.constant 0 : index
    %379 = vector.load %arg6[%c13_349, %c0_350, %c0_351] : memref<16x32x64xbf16, #tpu.memory_space<vmem>>, vector<1x32x64xbf16>
    %380 = vector.shape_cast %379 : vector<1x32x64xbf16> to vector<32x64xbf16>
    %cst_352 = arith.constant dense<0.000000e+00> : vector<9x64xf32>
    %381 = tpu.matmul %378, %380, %cst_352 {dimension_numbers = #tpu.dot_dimension_numbers<[1], [0], [0], [1], [0, 0, 1, 1], [], []>} : vector<9x32xbf16>, vector<32x64xbf16>, vector<9x64xf32> -> vector<9x64xf32>
    %382 = arith.addf %374, %381 : vector<9x64xf32>
    %c14_353 = arith.constant 14 : index
    %c0_354 = arith.constant 0 : index
    %c0_355 = arith.constant 0 : index
    %383 = vector.load %arg5[%c14_353, %c0_354, %c0_355] : memref<16x9x64xbf16, #tpu.memory_space<vmem>>, vector<1x9x64xbf16>
    %384 = vector.shape_cast %383 : vector<1x9x64xbf16> to vector<9x64xbf16>
    %cst_356 = arith.constant dense<0.000000e+00> : vector<9x32xf32>
    %385 = tpu.matmul %384, %268, %cst_356 {dimension_numbers = #tpu.dot_dimension_numbers<[1], [0], [0], [1], [0, 0, 1, 1], [], []>} : vector<9x64xbf16>, vector<64x32xbf16>, vector<9x32xf32> -> vector<9x32xf32>
    %386 = arith.truncf %385 : vector<9x32xf32> to vector<9x32xbf16>
    %c14_357 = arith.constant 14 : index
    %c0_358 = arith.constant 0 : index
    %c0_359 = arith.constant 0 : index
    %387 = vector.load %arg6[%c14_357, %c0_358, %c0_359] : memref<16x32x64xbf16, #tpu.memory_space<vmem>>, vector<1x32x64xbf16>
    %388 = vector.shape_cast %387 : vector<1x32x64xbf16> to vector<32x64xbf16>
    %cst_360 = arith.constant dense<0.000000e+00> : vector<9x64xf32>
    %389 = tpu.matmul %386, %388, %cst_360 {dimension_numbers = #tpu.dot_dimension_numbers<[1], [0], [0], [1], [0, 0, 1, 1], [], []>} : vector<9x32xbf16>, vector<32x64xbf16>, vector<9x64xf32> -> vector<9x64xf32>
    %390 = arith.addf %382, %389 : vector<9x64xf32>
    %c15_361 = arith.constant 15 : index
    %c0_362 = arith.constant 0 : index
    %c0_363 = arith.constant 0 : index
    %391 = vector.load %arg5[%c15_361, %c0_362, %c0_363] : memref<16x9x64xbf16, #tpu.memory_space<vmem>>, vector<1x9x64xbf16>
    %392 = vector.shape_cast %391 : vector<1x9x64xbf16> to vector<9x64xbf16>
    %cst_364 = arith.constant dense<0.000000e+00> : vector<9x32xf32>
    %393 = tpu.matmul %392, %268, %cst_364 {dimension_numbers = #tpu.dot_dimension_numbers<[1], [0], [0], [1], [0, 0, 1, 1], [], []>} : vector<9x64xbf16>, vector<64x32xbf16>, vector<9x32xf32> -> vector<9x32xf32>
    %394 = arith.truncf %393 : vector<9x32xf32> to vector<9x32xbf16>
    %c15_365 = arith.constant 15 : index
    %c0_366 = arith.constant 0 : index
    %c0_367 = arith.constant 0 : index
    %395 = vector.load %arg6[%c15_365, %c0_366, %c0_367] : memref<16x32x64xbf16, #tpu.memory_space<vmem>>, vector<1x32x64xbf16>
    %396 = vector.shape_cast %395 : vector<1x32x64xbf16> to vector<32x64xbf16>
    %cst_368 = arith.constant dense<0.000000e+00> : vector<9x64xf32>
    %397 = tpu.matmul %394, %396, %cst_368 {dimension_numbers = #tpu.dot_dimension_numbers<[1], [0], [0], [1], [0, 0, 1, 1], [], []>} : vector<9x32xbf16>, vector<32x64xbf16>, vector<9x64xf32> -> vector<9x64xf32>
    %398 = arith.addf %390, %397 : vector<9x64xf32>
    %cst_369 = arith.constant 0.000000e+00 : f32
    %399 = vector.broadcast %cst_369 : f32 to vector<9x64xf32>
    %400 = arith.maximumf %398, %399 : vector<9x64xf32>
    %401 = arith.truncf %400 : vector<9x64xf32> to vector<9x64xbf16>
    %c0_370 = arith.constant 0 : index
    %c0_371 = arith.constant 0 : index
    %402 = vector.load %arg10[%c0_370, %c0_371] : memref<1x64xf32, #tpu.memory_space<vmem>>, vector<1x64xf32>
    %c0_372 = arith.constant 0 : index
    %c0_373 = arith.constant 0 : index
    %c0_374 = arith.constant 0 : index
    %403 = vector.load %arg8[%c0_372, %c0_373, %c0_374] : memref<9x1x9xbf16, #tpu.memory_space<vmem>>, vector<1x1x9xbf16>
    %404 = vector.shape_cast %403 : vector<1x1x9xbf16> to vector<1x9xbf16>
    %cst_375 = arith.constant dense<0.000000e+00> : vector<1x64xf32>
    %405 = tpu.matmul %404, %401, %cst_375 {dimension_numbers = #tpu.dot_dimension_numbers<[1], [0], [0], [1], [0, 0, 1, 1], [], []>} : vector<1x9xbf16>, vector<9x64xbf16>, vector<1x64xf32> -> vector<1x64xf32>
    %406 = arith.truncf %405 : vector<1x64xf32> to vector<1x64xbf16>
    %c0_376 = arith.constant 0 : index
    %c0_377 = arith.constant 0 : index
    %c0_378 = arith.constant 0 : index
    %407 = vector.load %arg9[%c0_376, %c0_377, %c0_378] : memref<9x64x64xbf16, #tpu.memory_space<vmem>>, vector<1x64x64xbf16>
    %408 = vector.shape_cast %407 : vector<1x64x64xbf16> to vector<64x64xbf16>
    %cst_379 = arith.constant dense<0.000000e+00> : vector<1x64xf32>
    %409 = tpu.matmul %406, %408, %cst_379 {dimension_numbers = #tpu.dot_dimension_numbers<[1], [0], [0], [1], [0, 0, 1, 1], [], []>} : vector<1x64xbf16>, vector<64x64xbf16>, vector<1x64xf32> -> vector<1x64xf32>
    %410 = arith.addf %402, %409 : vector<1x64xf32>
    %c1_380 = arith.constant 1 : index
    %c0_381 = arith.constant 0 : index
    %c0_382 = arith.constant 0 : index
    %411 = vector.load %arg8[%c1_380, %c0_381, %c0_382] : memref<9x1x9xbf16, #tpu.memory_space<vmem>>, vector<1x1x9xbf16>
    %412 = vector.shape_cast %411 : vector<1x1x9xbf16> to vector<1x9xbf16>
    %cst_383 = arith.constant dense<0.000000e+00> : vector<1x64xf32>
    %413 = tpu.matmul %412, %401, %cst_383 {dimension_numbers = #tpu.dot_dimension_numbers<[1], [0], [0], [1], [0, 0, 1, 1], [], []>} : vector<1x9xbf16>, vector<9x64xbf16>, vector<1x64xf32> -> vector<1x64xf32>
    %414 = arith.truncf %413 : vector<1x64xf32> to vector<1x64xbf16>
    %c1_384 = arith.constant 1 : index
    %c0_385 = arith.constant 0 : index
    %c0_386 = arith.constant 0 : index
    %415 = vector.load %arg9[%c1_384, %c0_385, %c0_386] : memref<9x64x64xbf16, #tpu.memory_space<vmem>>, vector<1x64x64xbf16>
    %416 = vector.shape_cast %415 : vector<1x64x64xbf16> to vector<64x64xbf16>
    %cst_387 = arith.constant dense<0.000000e+00> : vector<1x64xf32>
    %417 = tpu.matmul %414, %416, %cst_387 {dimension_numbers = #tpu.dot_dimension_numbers<[1], [0], [0], [1], [0, 0, 1, 1], [], []>} : vector<1x64xbf16>, vector<64x64xbf16>, vector<1x64xf32> -> vector<1x64xf32>
    %418 = arith.addf %410, %417 : vector<1x64xf32>
    %c2_388 = arith.constant 2 : index
    %c0_389 = arith.constant 0 : index
    %c0_390 = arith.constant 0 : index
    %419 = vector.load %arg8[%c2_388, %c0_389, %c0_390] : memref<9x1x9xbf16, #tpu.memory_space<vmem>>, vector<1x1x9xbf16>
    %420 = vector.shape_cast %419 : vector<1x1x9xbf16> to vector<1x9xbf16>
    %cst_391 = arith.constant dense<0.000000e+00> : vector<1x64xf32>
    %421 = tpu.matmul %420, %401, %cst_391 {dimension_numbers = #tpu.dot_dimension_numbers<[1], [0], [0], [1], [0, 0, 1, 1], [], []>} : vector<1x9xbf16>, vector<9x64xbf16>, vector<1x64xf32> -> vector<1x64xf32>
    %422 = arith.truncf %421 : vector<1x64xf32> to vector<1x64xbf16>
    %c2_392 = arith.constant 2 : index
    %c0_393 = arith.constant 0 : index
    %c0_394 = arith.constant 0 : index
    %423 = vector.load %arg9[%c2_392, %c0_393, %c0_394] : memref<9x64x64xbf16, #tpu.memory_space<vmem>>, vector<1x64x64xbf16>
    %424 = vector.shape_cast %423 : vector<1x64x64xbf16> to vector<64x64xbf16>
    %cst_395 = arith.constant dense<0.000000e+00> : vector<1x64xf32>
    %425 = tpu.matmul %422, %424, %cst_395 {dimension_numbers = #tpu.dot_dimension_numbers<[1], [0], [0], [1], [0, 0, 1, 1], [], []>} : vector<1x64xbf16>, vector<64x64xbf16>, vector<1x64xf32> -> vector<1x64xf32>
    %426 = arith.addf %418, %425 : vector<1x64xf32>
    %c3_396 = arith.constant 3 : index
    %c0_397 = arith.constant 0 : index
    %c0_398 = arith.constant 0 : index
    %427 = vector.load %arg8[%c3_396, %c0_397, %c0_398] : memref<9x1x9xbf16, #tpu.memory_space<vmem>>, vector<1x1x9xbf16>
    %428 = vector.shape_cast %427 : vector<1x1x9xbf16> to vector<1x9xbf16>
    %cst_399 = arith.constant dense<0.000000e+00> : vector<1x64xf32>
    %429 = tpu.matmul %428, %401, %cst_399 {dimension_numbers = #tpu.dot_dimension_numbers<[1], [0], [0], [1], [0, 0, 1, 1], [], []>} : vector<1x9xbf16>, vector<9x64xbf16>, vector<1x64xf32> -> vector<1x64xf32>
    %430 = arith.truncf %429 : vector<1x64xf32> to vector<1x64xbf16>
    %c3_400 = arith.constant 3 : index
    %c0_401 = arith.constant 0 : index
    %c0_402 = arith.constant 0 : index
    %431 = vector.load %arg9[%c3_400, %c0_401, %c0_402] : memref<9x64x64xbf16, #tpu.memory_space<vmem>>, vector<1x64x64xbf16>
    %432 = vector.shape_cast %431 : vector<1x64x64xbf16> to vector<64x64xbf16>
    %cst_403 = arith.constant dense<0.000000e+00> : vector<1x64xf32>
    %433 = tpu.matmul %430, %432, %cst_403 {dimension_numbers = #tpu.dot_dimension_numbers<[1], [0], [0], [1], [0, 0, 1, 1], [], []>} : vector<1x64xbf16>, vector<64x64xbf16>, vector<1x64xf32> -> vector<1x64xf32>
    %434 = arith.addf %426, %433 : vector<1x64xf32>
    %c4_404 = arith.constant 4 : index
    %c0_405 = arith.constant 0 : index
    %c0_406 = arith.constant 0 : index
    %435 = vector.load %arg8[%c4_404, %c0_405, %c0_406] : memref<9x1x9xbf16, #tpu.memory_space<vmem>>, vector<1x1x9xbf16>
    %436 = vector.shape_cast %435 : vector<1x1x9xbf16> to vector<1x9xbf16>
    %cst_407 = arith.constant dense<0.000000e+00> : vector<1x64xf32>
    %437 = tpu.matmul %436, %401, %cst_407 {dimension_numbers = #tpu.dot_dimension_numbers<[1], [0], [0], [1], [0, 0, 1, 1], [], []>} : vector<1x9xbf16>, vector<9x64xbf16>, vector<1x64xf32> -> vector<1x64xf32>
    %438 = arith.truncf %437 : vector<1x64xf32> to vector<1x64xbf16>
    %c4_408 = arith.constant 4 : index
    %c0_409 = arith.constant 0 : index
    %c0_410 = arith.constant 0 : index
    %439 = vector.load %arg9[%c4_408, %c0_409, %c0_410] : memref<9x64x64xbf16, #tpu.memory_space<vmem>>, vector<1x64x64xbf16>
    %440 = vector.shape_cast %439 : vector<1x64x64xbf16> to vector<64x64xbf16>
    %cst_411 = arith.constant dense<0.000000e+00> : vector<1x64xf32>
    %441 = tpu.matmul %438, %440, %cst_411 {dimension_numbers = #tpu.dot_dimension_numbers<[1], [0], [0], [1], [0, 0, 1, 1], [], []>} : vector<1x64xbf16>, vector<64x64xbf16>, vector<1x64xf32> -> vector<1x64xf32>
    %442 = arith.addf %434, %441 : vector<1x64xf32>
    %c5_412 = arith.constant 5 : index
    %c0_413 = arith.constant 0 : index
    %c0_414 = arith.constant 0 : index
    %443 = vector.load %arg8[%c5_412, %c0_413, %c0_414] : memref<9x1x9xbf16, #tpu.memory_space<vmem>>, vector<1x1x9xbf16>
    %444 = vector.shape_cast %443 : vector<1x1x9xbf16> to vector<1x9xbf16>
    %cst_415 = arith.constant dense<0.000000e+00> : vector<1x64xf32>
    %445 = tpu.matmul %444, %401, %cst_415 {dimension_numbers = #tpu.dot_dimension_numbers<[1], [0], [0], [1], [0, 0, 1, 1], [], []>} : vector<1x9xbf16>, vector<9x64xbf16>, vector<1x64xf32> -> vector<1x64xf32>
    %446 = arith.truncf %445 : vector<1x64xf32> to vector<1x64xbf16>
    %c5_416 = arith.constant 5 : index
    %c0_417 = arith.constant 0 : index
    %c0_418 = arith.constant 0 : index
    %447 = vector.load %arg9[%c5_416, %c0_417, %c0_418] : memref<9x64x64xbf16, #tpu.memory_space<vmem>>, vector<1x64x64xbf16>
    %448 = vector.shape_cast %447 : vector<1x64x64xbf16> to vector<64x64xbf16>
    %cst_419 = arith.constant dense<0.000000e+00> : vector<1x64xf32>
    %449 = tpu.matmul %446, %448, %cst_419 {dimension_numbers = #tpu.dot_dimension_numbers<[1], [0], [0], [1], [0, 0, 1, 1], [], []>} : vector<1x64xbf16>, vector<64x64xbf16>, vector<1x64xf32> -> vector<1x64xf32>
    %450 = arith.addf %442, %449 : vector<1x64xf32>
    %c6_420 = arith.constant 6 : index
    %c0_421 = arith.constant 0 : index
    %c0_422 = arith.constant 0 : index
    %451 = vector.load %arg8[%c6_420, %c0_421, %c0_422] : memref<9x1x9xbf16, #tpu.memory_space<vmem>>, vector<1x1x9xbf16>
    %452 = vector.shape_cast %451 : vector<1x1x9xbf16> to vector<1x9xbf16>
    %cst_423 = arith.constant dense<0.000000e+00> : vector<1x64xf32>
    %453 = tpu.matmul %452, %401, %cst_423 {dimension_numbers = #tpu.dot_dimension_numbers<[1], [0], [0], [1], [0, 0, 1, 1], [], []>} : vector<1x9xbf16>, vector<9x64xbf16>, vector<1x64xf32> -> vector<1x64xf32>
    %454 = arith.truncf %453 : vector<1x64xf32> to vector<1x64xbf16>
    %c6_424 = arith.constant 6 : index
    %c0_425 = arith.constant 0 : index
    %c0_426 = arith.constant 0 : index
    %455 = vector.load %arg9[%c6_424, %c0_425, %c0_426] : memref<9x64x64xbf16, #tpu.memory_space<vmem>>, vector<1x64x64xbf16>
    %456 = vector.shape_cast %455 : vector<1x64x64xbf16> to vector<64x64xbf16>
    %cst_427 = arith.constant dense<0.000000e+00> : vector<1x64xf32>
    %457 = tpu.matmul %454, %456, %cst_427 {dimension_numbers = #tpu.dot_dimension_numbers<[1], [0], [0], [1], [0, 0, 1, 1], [], []>} : vector<1x64xbf16>, vector<64x64xbf16>, vector<1x64xf32> -> vector<1x64xf32>
    %458 = arith.addf %450, %457 : vector<1x64xf32>
    %c7_428 = arith.constant 7 : index
    %c0_429 = arith.constant 0 : index
    %c0_430 = arith.constant 0 : index
    %459 = vector.load %arg8[%c7_428, %c0_429, %c0_430] : memref<9x1x9xbf16, #tpu.memory_space<vmem>>, vector<1x1x9xbf16>
    %460 = vector.shape_cast %459 : vector<1x1x9xbf16> to vector<1x9xbf16>
    %cst_431 = arith.constant dense<0.000000e+00> : vector<1x64xf32>
    %461 = tpu.matmul %460, %401, %cst_431 {dimension_numbers = #tpu.dot_dimension_numbers<[1], [0], [0], [1], [0, 0, 1, 1], [], []>} : vector<1x9xbf16>, vector<9x64xbf16>, vector<1x64xf32> -> vector<1x64xf32>
    %462 = arith.truncf %461 : vector<1x64xf32> to vector<1x64xbf16>
    %c7_432 = arith.constant 7 : index
    %c0_433 = arith.constant 0 : index
    %c0_434 = arith.constant 0 : index
    %463 = vector.load %arg9[%c7_432, %c0_433, %c0_434] : memref<9x64x64xbf16, #tpu.memory_space<vmem>>, vector<1x64x64xbf16>
    %464 = vector.shape_cast %463 : vector<1x64x64xbf16> to vector<64x64xbf16>
    %cst_435 = arith.constant dense<0.000000e+00> : vector<1x64xf32>
    %465 = tpu.matmul %462, %464, %cst_435 {dimension_numbers = #tpu.dot_dimension_numbers<[1], [0], [0], [1], [0, 0, 1, 1], [], []>} : vector<1x64xbf16>, vector<64x64xbf16>, vector<1x64xf32> -> vector<1x64xf32>
    %466 = arith.addf %458, %465 : vector<1x64xf32>
    %c8_436 = arith.constant 8 : index
    %c0_437 = arith.constant 0 : index
    %c0_438 = arith.constant 0 : index
    %467 = vector.load %arg8[%c8_436, %c0_437, %c0_438] : memref<9x1x9xbf16, #tpu.memory_space<vmem>>, vector<1x1x9xbf16>
    %468 = vector.shape_cast %467 : vector<1x1x9xbf16> to vector<1x9xbf16>
    %cst_439 = arith.constant dense<0.000000e+00> : vector<1x64xf32>
    %469 = tpu.matmul %468, %401, %cst_439 {dimension_numbers = #tpu.dot_dimension_numbers<[1], [0], [0], [1], [0, 0, 1, 1], [], []>} : vector<1x9xbf16>, vector<9x64xbf16>, vector<1x64xf32> -> vector<1x64xf32>
    %470 = arith.truncf %469 : vector<1x64xf32> to vector<1x64xbf16>
    %c8_440 = arith.constant 8 : index
    %c0_441 = arith.constant 0 : index
    %c0_442 = arith.constant 0 : index
    %471 = vector.load %arg9[%c8_440, %c0_441, %c0_442] : memref<9x64x64xbf16, #tpu.memory_space<vmem>>, vector<1x64x64xbf16>
    %472 = vector.shape_cast %471 : vector<1x64x64xbf16> to vector<64x64xbf16>
    %cst_443 = arith.constant dense<0.000000e+00> : vector<1x64xf32>
    %473 = tpu.matmul %470, %472, %cst_443 {dimension_numbers = #tpu.dot_dimension_numbers<[1], [0], [0], [1], [0, 0, 1, 1], [], []>} : vector<1x64xbf16>, vector<64x64xbf16>, vector<1x64xf32> -> vector<1x64xf32>
    %474 = arith.addf %466, %473 : vector<1x64xf32>
    %cst_444 = arith.constant 0.000000e+00 : f32
    %475 = vector.broadcast %cst_444 : f32 to vector<1x64xf32>
    %476 = arith.maximumf %474, %475 : vector<1x64xf32>
    %477 = arith.truncf %476 : vector<1x64xf32> to vector<1x64xbf16>
    %478 = tpu.concatenate %238, %477 in 0 : vector<1x64xbf16>, vector<1x64xbf16> -> vector<2x64xbf16>
    %c0_445 = arith.constant 0 : index
    %c0_446 = arith.constant 0 : index
    %479 = vector.load %arg11[%c0_445, %c0_446] : memref<64x1024xbf16, #tpu.memory_space<vmem>>, vector<64x1024xbf16>
    %cst_447 = arith.constant dense<0.000000e+00> : vector<2x1024xf32>
    %480 = tpu.matmul %478, %479, %cst_447 {dimension_numbers = #tpu.dot_dimension_numbers<[1], [0], [0], [1], [0, 0, 1, 1], [], []>} : vector<2x64xbf16>, vector<64x1024xbf16>, vector<2x1024xf32> -> vector<2x1024xf32>
    %c0_448 = arith.constant 0 : index
    %c0_449 = arith.constant 0 : index
    %481 = vector.load %arg12[%c0_448, %c0_449] : memref<1x1024xf32, #tpu.memory_space<vmem>>, vector<1x1024xf32>
    %482 = vector.broadcast %481 : vector<1x1024xf32> to vector<2x1024xf32>
    %483 = arith.addf %480, %482 : vector<2x1024xf32>
    %cst_450 = arith.constant 0.000000e+00 : f32
    %484 = vector.broadcast %cst_450 : f32 to vector<2x1024xf32>
    %485 = arith.maximumf %483, %484 : vector<2x1024xf32>
    %486 = arith.truncf %485 : vector<2x1024xf32> to vector<2x1024xbf16>
    %c0_451 = arith.constant 0 : index
    %c0_452 = arith.constant 0 : index
    %487 = vector.load %arg13[%c0_451, %c0_452] : memref<1024x256xbf16, #tpu.memory_space<vmem>>, vector<1024x256xbf16>
    %cst_453 = arith.constant dense<0.000000e+00> : vector<2x256xf32>
    %488 = tpu.matmul %486, %487, %cst_453 {dimension_numbers = #tpu.dot_dimension_numbers<[1], [0], [0], [1], [0, 0, 1, 1], [], []>} : vector<2x1024xbf16>, vector<1024x256xbf16>, vector<2x256xf32> -> vector<2x256xf32>
    %c0_454 = arith.constant 0 : index
    %c0_455 = arith.constant 0 : index
    %489 = vector.load %arg14[%c0_454, %c0_455] : memref<1x256xf32, #tpu.memory_space<vmem>>, vector<1x256xf32>
    %490 = vector.broadcast %489 : vector<1x256xf32> to vector<2x256xf32>
    %491 = arith.addf %488, %490 : vector<2x256xf32>
    %492 = vector.extract_strided_slice %491 {offsets = [0, 0], sizes = [2, 128], strides = [1, 1]} : vector<2x256xf32> to vector<2x128xf32>
    %cst_456 = arith.constant dense<0xFF800000> : vector<2xf32>
    %493 = vector.multi_reduction <maximumf>, %492, %cst_456 [1] : vector<2x128xf32> to vector<2xf32>
    %494 = vector.shape_cast %493 : vector<2xf32> to vector<2x1xf32>
    %495 = vector.broadcast %494 : vector<2x1xf32> to vector<2x128xf32>
    %496 = arith.subf %492, %495 : vector<2x128xf32>
    %497 = math.exp %496 : vector<2x128xf32>
    %cst_457 = arith.constant dense<0.000000e+00> : vector<2xf32>
    %498 = vector.multi_reduction <add>, %497, %cst_457 [1] : vector<2x128xf32> to vector<2xf32>
    %499 = vector.shape_cast %498 : vector<2xf32> to vector<2x1xf32>
    %500 = vector.broadcast %499 : vector<2x1xf32> to vector<2x128xf32>
    %501 = arith.divf %497, %500 : vector<2x128xf32>
    %502 = vector.extract_strided_slice %491 {offsets = [0, 128], sizes = [2, 128], strides = [1, 1]} : vector<2x256xf32> to vector<2x128xf32>
    %503 = tpu.concatenate %501, %502 in 1 : vector<2x128xf32>, vector<2x128xf32> -> vector<2x256xf32>
    %c0_458 = arith.constant 0 : index
    %c0_459 = arith.constant 0 : index
    %504 = vector.load %arg15[%c0_458, %c0_459] : memref<2x256xf32, #tpu.memory_space<vmem>>, vector<2x256xf32>
    tpu.vector_store %arg15[%c0_458, %c0_459], %503 {strides = array<i32>} : memref<2x256xf32, #tpu.memory_space<vmem>>, vector<2x256xf32>,
    return
  }
  func.func @transform_0(%arg0: i32) -> (i32, i32, i32) {
    %c0_i32 = arith.constant 0 : i32
    %c0_i32_0 = arith.constant 0 : i32
    %c0_i32_1 = arith.constant 0 : i32
    return %arg0, %c0_i32, %c0_i32_0 : i32, i32, i32
  }
  func.func @transform_1(%arg0: i32) -> (i32, i32, i32) {
    %c0_i32 = arith.constant 0 : i32
    %c0_i32_0 = arith.constant 0 : i32
    %c0_i32_1 = arith.constant 0 : i32
    %c0_i32_2 = arith.constant 0 : i32
    return %c0_i32, %c0_i32_0, %c0_i32_1 : i32, i32, i32
  }
  func.func @transform_2(%arg0: i32) -> (i32, i32) {
    %c0_i32 = arith.constant 0 : i32
    %c0_i32_0 = arith.constant 0 : i32
    %c0_i32_1 = arith.constant 0 : i32
    return %c0_i32, %c0_i32_0 : i32, i32
  }
  func.func @transform_3(%arg0: i32) -> (i32, i32) {
    %c0_i32 = arith.constant 0 : i32
    %c0_i32_0 = arith.constant 0 : i32
    %c0_i32_1 = arith.constant 0 : i32
    return %c0_i32, %c0_i32_0 : i32, i32
  }
  func.func @transform_4(%arg0: i32) -> (i32, i32, i32) {
    %c0_i32 = arith.constant 0 : i32
    %c0_i32_0 = arith.constant 0 : i32
    %c0_i32_1 = arith.constant 0 : i32
    %c0_i32_2 = arith.constant 0 : i32
    return %c0_i32, %c0_i32_0, %c0_i32_1 : i32, i32, i32
  }
  func.func @transform_5(%arg0: i32) -> (i32, i32, i32) {
    %c0_i32 = arith.constant 0 : i32
    %c0_i32_0 = arith.constant 0 : i32
    %c0_i32_1 = arith.constant 0 : i32
    %c0_i32_2 = arith.constant 0 : i32
    return %c0_i32, %c0_i32_0, %c0_i32_1 : i32, i32, i32
  }
  func.func @transform_6(%arg0: i32) -> (i32, i32) {
    %c0_i32 = arith.constant 0 : i32
    %c0_i32_0 = arith.constant 0 : i32
    %c0_i32_1 = arith.constant 0 : i32
    return %c0_i32, %c0_i32_0 : i32, i32
  }
  func.func @transform_7(%arg0: i32) -> (i32, i32, i32) {
    %c0_i32 = arith.constant 0 : i32
    %c0_i32_0 = arith.constant 0 : i32
    %c0_i32_1 = arith.constant 0 : i32
    %c0_i32_2 = arith.constant 0 : i32
    return %c0_i32, %c0_i32_0, %c0_i32_1 : i32, i32, i32
  }
  func.func @transform_8(%arg0: i32) -> (i32, i32, i32) {
    %c0_i32 = arith.constant 0 : i32
    %c0_i32_0 = arith.constant 0 : i32
    %c0_i32_1 = arith.constant 0 : i32
    %c0_i32_2 = arith.constant 0 : i32
    return %c0_i32, %c0_i32_0, %c0_i32_1 : i32, i32, i32
  }
  func.func @transform_9(%arg0: i32) -> (i32, i32) {
    %c0_i32 = arith.constant 0 : i32
    %c0_i32_0 = arith.constant 0 : i32
    %c0_i32_1 = arith.constant 0 : i32
    return %c0_i32, %c0_i32_0 : i32, i32
  }
  func.func @transform_10(%arg0: i32) -> (i32, i32) {
    %c0_i32 = arith.constant 0 : i32
    %c0_i32_0 = arith.constant 0 : i32
    %c0_i32_1 = arith.constant 0 : i32
    return %c0_i32, %c0_i32_0 : i32, i32
  }
  func.func @transform_11(%arg0: i32) -> (i32, i32) {
    %c0_i32 = arith.constant 0 : i32
    %c0_i32_0 = arith.constant 0 : i32
    %c0_i32_1 = arith.constant 0 : i32
    return %c0_i32, %c0_i32_0 : i32, i32
  }
  func.func @transform_12(%arg0: i32) -> (i32, i32) {
    %c0_i32 = arith.constant 0 : i32
    %c0_i32_0 = arith.constant 0 : i32
    %c0_i32_1 = arith.constant 0 : i32
    return %c0_i32, %c0_i32_0 : i32, i32
  }
  func.func @transform_13(%arg0: i32) -> (i32, i32) {
    %c0_i32 = arith.constant 0 : i32
    %c0_i32_0 = arith.constant 0 : i32
    %c0_i32_1 = arith.constant 0 : i32
    return %c0_i32, %c0_i32_0 : i32, i32
  }
  func.func @transform_14(%arg0: i32) -> (i32, i32) {
    %c0_i32 = arith.constant 0 : i32
    %c0_i32_0 = arith.constant 0 : i32
    return %arg0, %c0_i32 : i32, i32
  }
}

</mosaic_0001>

<llo_original>
// kernel: actor_critic_forward.1
$region0: #{actor_critic_forward.1}
  #allocation0 [shape = 'u32[]', space=smem, size = 0x4, offset = 0x4, fixed_abs, tag = 'smem constant byte address 0x4 - core index']
  #allocation1 [shape = 'u32[72,128]{1,0:T(1,128)}', space=vmem, size = 0x9000, scoped, tag = 'internal scratch']
  %s0 = inlined_call_operand.vmem [shape: bf16[2,81,64], index: 0, kind: input, shape index: {}]
  %s1 = inlined_call_operand.vmem [shape: bf16[4,64,81], index: 1, kind: input, shape index: {}]
  %s2 = inlined_call_operand.vmem [shape: bf16[64,128], index: 2, kind: input, shape index: {}]
  %s3 = inlined_call_operand.vmem [shape: f32[1,32], index: 3, kind: input, shape index: {}]
  %s4 = inlined_call_operand.vmem [shape: bf16[16,9,64], index: 4, kind: input, shape index: {}]
  %s5 = inlined_call_operand.vmem [shape: bf16[16,32,64], index: 5, kind: input, shape index: {}]
  %s6 = inlined_call_operand.vmem [shape: f32[1,64], index: 6, kind: input, shape index: {}]
  %s7 = inlined_call_operand.vmem [shape: bf16[9,1,9], index: 7, kind: input, shape index: {}]
  %s8 = inlined_call_operand.vmem [shape: bf16[9,64,64], index: 8, kind: input, shape index: {}]
  %s9 = inlined_call_operand.vmem [shape: f32[1,64], index: 9, kind: input, shape index: {}]
  %s10 = inlined_call_operand.vmem [shape: bf16[64,1024], index: 10, kind: input, shape index: {}]
  %s11 = inlined_call_operand.vmem [shape: f32[1,1024], index: 11, kind: input, shape index: {}]
  %s12 = inlined_call_operand.vmem [shape: bf16[1024,256], index: 12, kind: input, shape index: {}]
  %s13 = inlined_call_operand.vmem [shape: f32[1,256], index: 13, kind: input, shape index: {}]
  %s14 = inlined_call_operand.vmem [shape: f32[2,256], index: 14, kind: output, shape index: {}]
  %s15 = sld [smem:[#allocation0]]
  $region66: #{actor_critic_forward.1} parent=0
    _
  %s17 = ssub.s32 1, %s15
  %s18 = scalar_select 0, %s17, %s15
  // Predicated region
  $region2: #{actor_critic_forward.1} parent=0 // pred_check
    _
  $region3: #{actor_critic_forward.1} parent=0 // pred_check_branch
    %20 = sbr.rel (0) target = $region5
  $region4: #{actor_critic_forward.1} parent=0 // pred_region
    _
  $region5: #{actor_critic_forward.1} parent=0 // pred_fallthru
    _
  // Predicated region
  $region6: #{actor_critic_forward.1} parent=0 // pred_check
    _
  $region7: #{actor_critic_forward.1} parent=0 // pred_check_branch
    %22 = sbr.rel (0) target = $region9
  $region8: #{actor_critic_forward.1} parent=0 // pred_region
    _
  $region9: #{actor_critic_forward.1} parent=0 // pred_fallthru
    _
  // Predicated region
  $region10: #{actor_critic_forward.1} parent=0 // pred_check
    _
  $region11: #{actor_critic_forward.1} parent=0 // pred_check_branch
    %24 = sbr.rel (0) target = $region13
  $region12: #{actor_critic_forward.1} parent=0 // pred_region
    _
  $region13: #{actor_critic_forward.1} parent=0 // pred_fallthru
    _
  // Predicated region
  $region14: #{actor_critic_forward.1} parent=0 // pred_check
    _
  $region15: #{actor_critic_forward.1} parent=0 // pred_check_branch
    %26 = sbr.rel (0) target = $region17
  $region16: #{actor_critic_forward.1} parent=0 // pred_region
    _
  $region17: #{actor_critic_forward.1} parent=0 // pred_fallthru
    _
  // Predicated region
  $region18: #{actor_critic_forward.1} parent=0 // pred_check
    _
  $region19: #{actor_critic_forward.1} parent=0 // pred_check_branch
    %28 = sbr.rel (0) target = $region21
  $region20: #{actor_critic_forward.1} parent=0 // pred_region
    _
  $region21: #{actor_critic_forward.1} parent=0 // pred_fallthru
    _
  // Predicated region
  $region22: #{actor_critic_forward.1} parent=0 // pred_check
    _
  $region23: #{actor_critic_forward.1} parent=0 // pred_check_branch
    %30 = sbr.rel (0) target = $region25
  $region24: #{actor_critic_forward.1} parent=0 // pred_region
    _
  $region25: #{actor_critic_forward.1} parent=0 // pred_fallthru
    _
  // Predicated region
  $region26: #{actor_critic_forward.1} parent=0 // pred_check
    _
  $region27: #{actor_critic_forward.1} parent=0 // pred_check_branch
    %32 = sbr.rel (0) target = $region29
  $region28: #{actor_critic_forward.1} parent=0 // pred_region
    _
  $region29: #{actor_critic_forward.1} parent=0 // pred_fallthru
    _
  // Predicated region
  $region30: #{actor_critic_forward.1} parent=0 // pred_check
    _
  $region31: #{actor_critic_forward.1} parent=0 // pred_check_branch
    %34 = sbr.rel (0) target = $region33
  $region32: #{actor_critic_forward.1} parent=0 // pred_region
    _
  $region33: #{actor_critic_forward.1} parent=0 // pred_fallthru
    _
  // Predicated region
  $region34: #{actor_critic_forward.1} parent=0 // pred_check
    _
  $region35: #{actor_critic_forward.1} parent=0 // pred_check_branch
    %36 = sbr.rel (0) target = $region37
  $region36: #{actor_critic_forward.1} parent=0 // pred_region
    _
  $region37: #{actor_critic_forward.1} parent=0 // pred_fallthru
    _
  // Predicated region
  $region38: #{actor_critic_forward.1} parent=0 // pred_check
    _
  $region39: #{actor_critic_forward.1} parent=0 // pred_check_branch
    %38 = sbr.rel (0) target = $region41
  $region40: #{actor_critic_forward.1} parent=0 // pred_region
    _
  $region41: #{actor_critic_forward.1} parent=0 // pred_fallthru
    _
  // Predicated region
  $region42: #{actor_critic_forward.1} parent=0 // pred_check
    _
  $region43: #{actor_critic_forward.1} parent=0 // pred_check_branch
    %40 = sbr.rel (0) target = $region45
  $region44: #{actor_critic_forward.1} parent=0 // pred_region
    _
  $region45: #{actor_critic_forward.1} parent=0 // pred_fallthru
    _
  // Predicated region
  $region46: #{actor_critic_forward.1} parent=0 // pred_check
    _
  $region47: #{actor_critic_forward.1} parent=0 // pred_check_branch
    %42 = sbr.rel (0) target = $region49
  $region48: #{actor_critic_forward.1} parent=0 // pred_region
    _
  $region49: #{actor_critic_forward.1} parent=0 // pred_fallthru
    _
  // Predicated region
  $region50: #{actor_critic_forward.1} parent=0 // pred_check
    _
  $region51: #{actor_critic_forward.1} parent=0 // pred_check_branch
    %44 = sbr.rel (0) target = $region53
  $region52: #{actor_critic_forward.1} parent=0 // pred_region
    _
  $region53: #{actor_critic_forward.1} parent=0 // pred_fallthru
    _
  // Predicated region
  $region54: #{actor_critic_forward.1} parent=0 // pred_check
    _
  $region55: #{actor_critic_forward.1} parent=0 // pred_check_branch
    %46 = sbr.rel (0) target = $region57
  $region56: #{actor_critic_forward.1} parent=0 // pred_region
    _
  $region57: #{actor_critic_forward.1} parent=0 // pred_fallthru
    _
  %v48 = vld [vmem:[%s0] sm:$0xf]
  %v49 = vld [vmem:[%s0 + $0x4] sm:$0xf]
  %v50 = vld [vmem:[%s0 + $0x8] sm:$0xf]
  %v51 = vld [vmem:[%s0 + $0xc] sm:$0xf]
  %v52 = vld [vmem:[%s0 + $0x10] sm:$0xf]
  %v53 = vld [vmem:[%s0 + $0x14] sm:$0xf]
  %v54 = vld [vmem:[%s0 + $0x18] sm:$0xf]
  %v55 = vld [vmem:[%s0 + $0x1c] sm:$0xf]
  %v56 = vld [vmem:[%s0 + $0x20] sm:$0xf]
  %v57 = vld [vmem:[%s0 + $0x24] sm:$0xf]
  %v58 = vld [vmem:[%s0 + $0x28] sm:$0x1]
  %v59 = vld [vmem:[%s2] sm:$0xf]
  %v60 = vld [vmem:[%s2 + $0x4] sm:$0xf]
  %v61 = vld [vmem:[%s2 + $0x8] sm:$0xf]
  %v62 = vld [vmem:[%s2 + $0xc] sm:$0xf]
  %v63 = vld [vmem:[%s2 + $0x10] sm:$0xf]
  %v64 = vld [vmem:[%s2 + $0x14] sm:$0xf]
  %v65 = vld [vmem:[%s2 + $0x18] sm:$0xf]
  %v66 = vld [vmem:[%s2 + $0x1c] sm:$0xf]
  %v78 = vunpack.c.l.b16 %v48
  %v79 = vunpack.c.l.b16 %v49
  %v80 = vunpack.c.l.b16 %v50
  %v81 = vunpack.c.l.b16 %v51
  %v82 = vunpack.c.l.b16 %v52
  %v83 = vunpack.c.l.b16 %v53
  %v84 = vunpack.c.l.b16 %v54
  %v85 = vunpack.c.l.b16 %v55
  %v86 = vunpack.c.l.b16 %v56
  %v87 = vunpack.c.l.b16 %v57
  %v88 = vunpack.c.l.b16 %v58
  %v89 = vpack.c.b16 %v79, %v78
  %v90 = vpack.c.b16 %v81, %v80
  %v91 = vpack.c.b16 %v83, %v82
  %v92 = vpack.c.b16 %v85, %v84
  %v93 = vpack.c.b16 %v87, %v86
  %v94 = vpack.c.b16 %v88, %v88
  %v103 = vunpack.c.l.b16 %v59
  %v104 = vunpack.c.l.b16 %v60
  %v105 = vunpack.c.l.b16 %v61
  %v106 = vunpack.c.l.b16 %v62
  %v107 = vunpack.c.l.b16 %v63
  %v108 = vunpack.c.l.b16 %v64
  %v109 = vunpack.c.l.b16 %v65
  %v110 = vunpack.c.l.b16 %v66
  %v111 = vpack.c.b16 %v104, %v103
  %v112 = vpack.c.b16 %v106, %v105
  %v113 = vpack.c.b16 %v108, %v107
  %v114 = vpack.c.b16 %v110, %v109
  %vm119 = vcmask 523264
  %v121 = vsel %vm119, %v89, 0
  %v124 = vsel %vm119, %v90, 0
  %v127 = vsel %vm119, %v91, 0
  %v130 = vsel %vm119, %v92, 0
  %v133 = vsel %vm119, %v93, 0
  %v136 = vsel %vm119, %v94, 0
  %138 = vmatpush.bf16.msra.mxu0 0
  %139 = vmatpush.bf16.msra.mxu0 0
  %140 = vmatpush.bf16.msra.mxu0 0
  %141 = vmatpush.bf16.msra.mxu0 0
  %142 = vmatpush.bf16.msra.mxu0 %v114
  %143 = vmatpush.bf16.msra.mxu0 %v113
  %144 = vmatpush.bf16.msra.mxu0 %v112
  %145 = vmatpush.bf16.msra.mxu0 %v111
  %146 = vmatmul.bf16.gmra.mxu0 %v121
  %v147 = vpop.f32.mrf.mxu0
  %v148 = vadd.f32 0.0, %v147
  %v149 = vpop.f32.mrf.mxu0
  %v150 = vadd.f32 0.0, %v149
  %151 = vmatmul.bf16.gmra.mxu0 %v124
  %v152 = vpop.f32.mrf.mxu0
  %v153 = vadd.f32 0.0, %v152
  %v154 = vpop.f32.mrf.mxu0
  %v155 = vadd.f32 0.0, %v154
  %156 = vmatmul.bf16.gmra.mxu0 %v127
  %v157 = vpop.f32.mrf.mxu0
  %v158 = vadd.f32 0.0, %v157
  %v159 = vpop.f32.mrf.mxu0
  %v160 = vadd.f32 0.0, %v159
  %161 = vmatmul.bf16.gmra.mxu0 %v130
  %v162 = vpop.f32.mrf.mxu0
  %v163 = vadd.f32 0.0, %v162
  %v164 = vpop.f32.mrf.mxu0
  %v165 = vadd.f32 0.0, %v164
  %166 = vmatmul.bf16.gmra.mxu0 %v133
  %v167 = vpop.f32.mrf.mxu0
  %v168 = vadd.f32 0.0, %v167
  %v169 = vpop.f32.mrf.mxu0
  %v170 = vadd.f32 0.0, %v169
  %171 = vmatmul.bf16.gmra.mxu0 %v136
  %v172 = vpop.f32.mrf.mxu0
  %v173 = vadd.f32 0.0, %v172
  %v174 = vpop.f32.mrf.mxu0
  %175 = vdwg.mxu0
  %v176 = vpack.c.bf16 %v148, %v148
  %v177 = vpack.c.bf16 %v150, %v150
  %v178 = vpack.c.bf16 %v153, %v153
  %v179 = vpack.c.bf16 %v155, %v155
  %v180 = vpack.c.bf16 %v158, %v158
  %v181 = vpack.c.bf16 %v160, %v160
  %v182 = vpack.c.bf16 %v163, %v163
  %v183 = vpack.c.bf16 %v165, %v165
  %v184 = vpack.c.bf16 %v168, %v168
  %v185 = vpack.c.bf16 %v170, %v170
  %v186 = vpack.c.bf16 %v173, %v173
  %v187 = vld [vmem:[%s3] sm:$0x1]
  %v188 = vld [vmem:[%s1] sm:$0xf]
  %v189 = vld [vmem:[%s1 + $0x4] sm:$0xf]
  %v190 = vld [vmem:[%s1 + $0x8] sm:$0xf]
  %v191 = vld [vmem:[%s1 + $0xc] sm:$0xf]
  %v192 = vld [vmem:[%s1 + $0x10] sm:$0xf]
  %v193 = vld [vmem:[%s1 + $0x14] sm:$0xf]
  %v194 = vld [vmem:[%s1 + $0x18] sm:$0xf]
  %v195 = vld [vmem:[%s1 + $0x1c] sm:$0xf]
  %v204 = vunpack.c.l.b16 %v188
  %v205 = vunpack.c.l.b16 %v189
  %v206 = vunpack.c.l.b16 %v190
  %v207 = vunpack.c.l.b16 %v191
  %v208 = vunpack.c.l.b16 %v192
  %v209 = vunpack.c.l.b16 %v193
  %v210 = vunpack.c.l.b16 %v194
  %v211 = vunpack.c.l.b16 %v195
  %v212 = vpack.c.b16 %v205, %v204
  %v213 = vpack.c.b16 %v207, %v206
  %v214 = vpack.c.b16 %v209, %v208
  %v215 = vpack.c.b16 %v211, %v210
  %v227 = vunpack.c.l.b16 %v176
  %v228 = vunpack.c.l.b16 %v177
  %v229 = vunpack.c.l.b16 %v178
  %v230 = vunpack.c.l.b16 %v179
  %v231 = vunpack.c.l.b16 %v180
  %v232 = vunpack.c.l.b16 %v181
  %v233 = vunpack.c.l.b16 %v182
  %v234 = vunpack.c.l.b16 %v183
  %v235 = vunpack.c.l.b16 %v184
  %v236 = vunpack.c.l.b16 %v185
  %v237 = vunpack.c.l.b16 %v186
  %v238 = vpack.c.b16 %v228, %v227
  %v239 = vpack.c.b16 %v230, %v229
  %v240 = vpack.c.b16 %v232, %v231
  %v241 = vpack.c.b16 %v234, %v233
  %v242 = vpack.c.b16 %v236, %v235
  %v243 = vpack.c.b16 %v237, %v237
  %vm249 = vcmask 662528
  %v251 = vsel %vm249, %v212, 0
  %v254 = vsel %vm249, %v213, 0
  %v257 = vsel %vm249, %v214, 0
  %v260 = vsel %vm249, %v215, 0
  %vm262 = vcmask 1040384
  %v263 = vsel 0, 4294967295, 65535
  %v264 = vsel %vm262, %v263, 0
  %v266 = vand.u32 %v243, %v264
  %268 = vmatpush.bf16.msra.mxu0 0
  %269 = vmatpush.bf16.msra.mxu0 0
  %270 = vmatpush.bf16.msra.mxu0 %v266
  %271 = vmatpush.bf16.msra.mxu0 %v242
  %272 = vmatpush.bf16.msra.mxu0 %v241
  %273 = vmatpush.bf16.msra.mxu0 %v240
  %274 = vmatpush.bf16.msra.mxu0 %v239
  %275 = vmatpush.bf16.msra.mxu0 %v238
  %276 = vmatmul.bf16.gmra.mxu0 %v251
  %v277 = vpop.f32.mrf.mxu0
  %v278 = vadd.f32 0.0, %v277
  %v279 = vpop.f32.mrf.mxu0
  %v280 = vadd.f32 0.0, %v279
  %281 = vmatmul.bf16.gmra.mxu0 %v254
  %v282 = vpop.f32.mrf.mxu0
  %v283 = vadd.f32 0.0, %v282
  %v284 = vpop.f32.mrf.mxu0
  %v285 = vadd.f32 0.0, %v284
  %286 = vmatmul.bf16.gmra.mxu0 %v257
  %v287 = vpop.f32.mrf.mxu0
  %v288 = vadd.f32 0.0, %v287
  %v289 = vpop.f32.mrf.mxu0
  %v290 = vadd.f32 0.0, %v289
  %291 = vmatmul.bf16.gmra.mxu0 %v260
  %v292 = vpop.f32.mrf.mxu0
  %v293 = vadd.f32 0.0, %v292
  %v294 = vpop.f32.mrf.mxu0
  %v295 = vadd.f32 0.0, %v294
  %296 = vdwg.mxu0
  %v298 = vperm.slane %v187, 0
  %v300 = vadd.f32 %v298, %v278
  %v301 = vadd.f32 %v298, %v280
  %v302 = vadd.f32 %v298, %v283
  %v303 = vadd.f32 %v298, %v285
  %v304 = vadd.f32 %v298, %v288
  %v305 = vadd.f32 %v298, %v290
  %v306 = vadd.f32 %v298, %v293
  %v307 = vadd.f32 %v298, %v295
  %s308 = scalar_lea.vmem %s1, 32
  %v309 = vld [vmem:[%s308] sm:$0xf]
  %v310 = vld [vmem:[%s308 + $0x4] sm:$0xf]
  %v311 = vld [vmem:[%s308 + $0x8] sm:$0xf]
  %v312 = vld [vmem:[%s308 + $0xc] sm:$0xf]
  %v313 = vld [vmem:[%s308 + $0x10] sm:$0xf]
  %v314 = vld [vmem:[%s308 + $0x14] sm:$0xf]
  %v315 = vld [vmem:[%s308 + $0x18] sm:$0xf]
  %v316 = vld [vmem:[%s308 + $0x1c] sm:$0xf]
  %v325 = vunpack.c.l.b16 %v309
  %v326 = vunpack.c.l.b16 %v310
  %v327 = vunpack.c.l.b16 %v311
  %v328 = vunpack.c.l.b16 %v312
  %v329 = vunpack.c.l.b16 %v313
  %v330 = vunpack.c.l.b16 %v314
  %v331 = vunpack.c.l.b16 %v315
  %v332 = vunpack.c.l.b16 %v316
  %v333 = vpack.c.b16 %v326, %v325
  %v334 = vpack.c.b16 %v328, %v327
  %v335 = vpack.c.b16 %v330, %v329
  %v336 = vpack.c.b16 %v332, %v331
  %337 = vrot.lane.b32.xlu0 %v238, 96
  %v338 = vpop.permute.xlu0 %337
  %339 = vrot.lane.b32.xlu0 %v239, 96
  %v340 = vpop.permute.xlu0 %339
  %341 = vrot.lane.b32.xlu0 %v240, 96
  %v342 = vpop.permute.xlu0 %341
  %343 = vrot.lane.b32.xlu0 %v241, 96
  %v344 = vpop.permute.xlu0 %343
  %345 = vrot.lane.b32.xlu0 %v242, 96
  %v346 = vpop.permute.xlu0 %345
  %347 = vrot.lane.b32.xlu0 %v243, 96
  %v348 = vpop.permute.xlu0 %347
  %v355 = vsel %vm249, %v333, 0
  %v358 = vsel %vm249, %v334, 0
  %v361 = vsel %vm249, %v335, 0
  %v364 = vsel %vm249, %v336, 0
  %v367 = vand.u32 %v348, %v264
  %369 = vmatpush.bf16.msra.mxu0 0
  %370 = vmatpush.bf16.msra.mxu0 0
  %371 = vmatpush.bf16.msra.mxu0 %v367
  %372 = vmatpush.bf16.msra.mxu0 %v346
  %373 = vmatpush.bf16.msra.mxu0 %v344
  %374 = vmatpush.bf16.msra.mxu0 %v342
  %375 = vmatpush.bf16.msra.mxu0 %v340
  %376 = vmatpush.bf16.msra.mxu0 %v338
  %377 = vmatmul.bf16.gmra.mxu0 %v355
  %v378 = vpop.f32.mrf.mxu0
  %v379 = vadd.f32 0.0, %v378
  %v380 = vpop.f32.mrf.mxu0
  %v381 = vadd.f32 0.0, %v380
  %382 = vmatmul.bf16.gmra.mxu0 %v358
  %v383 = vpop.f32.mrf.mxu0
  %v384 = vadd.f32 0.0, %v383
  %v385 = vpop.f32.mrf.mxu0
  %v386 = vadd.f32 0.0, %v385
  %387 = vmatmul.bf16.gmra.mxu0 %v361
  %v388 = vpop.f32.mrf.mxu0
  %v389 = vadd.f32 0.0, %v388
  %v390 = vpop.f32.mrf.mxu0
  %v391 = vadd.f32 0.0, %v390
  %392 = vmatmul.bf16.gmra.mxu0 %v364
  %v393 = vpop.f32.mrf.mxu0
  %v394 = vadd.f32 0.0, %v393
  %v395 = vpop.f32.mrf.mxu0
  %v396 = vadd.f32 0.0, %v395
  %397 = vdwg.mxu0
  %v398 = vadd.f32 %v300, %v379
  %v399 = vadd.f32 %v301, %v381
  %v400 = vadd.f32 %v302, %v384
  %v401 = vadd.f32 %v303, %v386
  %v402 = vadd.f32 %v304, %v389
  %v403 = vadd.f32 %v305, %v391
  %v404 = vadd.f32 %v306, %v394
  %v405 = vadd.f32 %v307, %v396
  %s406 = scalar_lea.vmem %s1, 64
  %v407 = vld [vmem:[%s406] sm:$0xf]
  %v408 = vld [vmem:[%s406 + $0x4] sm:$0xf]
  %v409 = vld [vmem:[%s406 + $0x8] sm:$0xf]
  %v410 = vld [vmem:[%s406 + $0xc] sm:$0xf]
  %v411 = vld [vmem:[%s406 + $0x10] sm:$0xf]
  %v412 = vld [vmem:[%s406 + $0x14] sm:$0xf]
  %v413 = vld [vmem:[%s406 + $0x18] sm:$0xf]
  %v414 = vld [vmem:[%s406 + $0x1c] sm:$0xf]
  %v423 = vunpack.c.l.b16 %v407
  %v424 = vunpack.c.l.b16 %v408
  %v425 = vunpack.c.l.b16 %v409
  %v426 = vunpack.c.l.b16 %v410
  %v427 = vunpack.c.l.b16 %v411
  %v428 = vunpack.c.l.b16 %v412
  %v429 = vunpack.c.l.b16 %v413
  %v430 = vunpack.c.l.b16 %v414
  %v431 = vpack.c.b16 %v424, %v423
  %v432 = vpack.c.b16 %v426, %v425
  %v433 = vpack.c.b16 %v428, %v427
  %v434 = vpack.c.b16 %v430, %v429
  %435 = vrot.lane.b32.xlu0 %v238, 64
  %v436 = vpop.permute.xlu0 %435
  %437 = vrot.lane.b32.xlu0 %v239, 64
  %v438 = vpop.permute.xlu0 %437
  %439 = vrot.lane.b32.xlu0 %v240, 64
  %v440 = vpop.permute.xlu0 %439
  %441 = vrot.lane.b32.xlu0 %v241, 64
  %v442 = vpop.permute.xlu0 %441
  %443 = vrot.lane.b32.xlu0 %v242, 64
  %v444 = vpop.permute.xlu0 %443
  %445 = vrot.lane.b32.xlu0 %v243, 64
  %v446 = vpop.permute.xlu0 %445
  %v453 = vsel %vm249, %v431, 0
  %v456 = vsel %vm249, %v432, 0
  %v459 = vsel %vm249, %v433, 0
  %v462 = vsel %vm249, %v434, 0
  %v465 = vand.u32 %v446, %v264
  %467 = vmatpush.bf16.msra.mxu0 0
  %468 = vmatpush.bf16.msra.mxu0 0
  %469 = vmatpush.bf16.msra.mxu0 %v465
  %470 = vmatpush.bf16.msra.mxu0 %v444
  %471 = vmatpush.bf16.msra.mxu0 %v442
  %472 = vmatpush.bf16.msra.mxu0 %v440
  %473 = vmatpush.bf16.msra.mxu0 %v438
  %474 = vmatpush.bf16.msra.mxu0 %v436
  %475 = vmatmul.bf16.gmra.mxu0 %v453
  %v476 = vpop.f32.mrf.mxu0
  %v477 = vadd.f32 0.0, %v476
  %v478 = vpop.f32.mrf.mxu0
  %v479 = vadd.f32 0.0, %v478
  %480 = vmatmul.bf16.gmra.mxu0 %v456
  %v481 = vpop.f32.mrf.mxu0
  %v482 = vadd.f32 0.0, %v481
  %v483 = vpop.f32.mrf.mxu0
  %v484 = vadd.f32 0.0, %v483
  %485 = vmatmul.bf16.gmra.mxu0 %v459
  %v486 = vpop.f32.mrf.mxu0
  %v487 = vadd.f32 0.0, %v486
  %v488 = vpop.f32.mrf.mxu0
  %v489 = vadd.f32 0.0, %v488
  %490 = vmatmul.bf16.gmra.mxu0 %v462
  %v491 = vpop.f32.mrf.mxu0
  %v492 = vadd.f32 0.0, %v491
  %v493 = vpop.f32.mrf.mxu0
  %v494 = vadd.f32 0.0, %v493
  %495 = vdwg.mxu0
  %v496 = vadd.f32 %v398, %v477
  %v497 = vadd.f32 %v399, %v479
  %v498 = vadd.f32 %v400, %v482
  %v499 = vadd.f32 %v401, %v484
  %v500 = vadd.f32 %v402, %v487
  %v501 = vadd.f32 %v403, %v489
  %v502 = vadd.f32 %v404, %v492
  %v503 = vadd.f32 %v405, %v494
  %s504 = scalar_lea.vmem %s1, 96
  %v505 = vld [vmem:[%s504] sm:$0xf]
  %v506 = vld [vmem:[%s504 + $0x4] sm:$0xf]
  %v507 = vld [vmem:[%s504 + $0x8] sm:$0xf]
  %v508 = vld [vmem:[%s504 + $0xc] sm:$0xf]
  %v509 = vld [vmem:[%s504 + $0x10] sm:$0xf]
  %v510 = vld [vmem:[%s504 + $0x14] sm:$0xf]
  %v511 = vld [vmem:[%s504 + $0x18] sm:$0xf]
  %v512 = vld [vmem:[%s504 + $0x1c] sm:$0xf]
  %v521 = vunpack.c.l.b16 %v505
  %v522 = vunpack.c.l.b16 %v506
  %v523 = vunpack.c.l.b16 %v507
  %v524 = vunpack.c.l.b16 %v508
  %v525 = vunpack.c.l.b16 %v509
  %v526 = vunpack.c.l.b16 %v510
  %v527 = vunpack.c.l.b16 %v511
  %v528 = vunpack.c.l.b16 %v512
  %v529 = vpack.c.b16 %v522, %v521
  %v530 = vpack.c.b16 %v524, %v523
  %v531 = vpack.c.b16 %v526, %v525
  %v532 = vpack.c.b16 %v528, %v527
  %533 = vrot.lane.b32.xlu0 %v238, 32
  %v534 = vpop.permute.xlu0 %533
  %535 = vrot.lane.b32.xlu0 %v239, 32
  %v536 = vpop.permute.xlu0 %535
  %537 = vrot.lane.b32.xlu0 %v240, 32
  %v538 = vpop.permute.xlu0 %537
  %539 = vrot.lane.b32.xlu0 %v241, 32
  %v540 = vpop.permute.xlu0 %539
  %541 = vrot.lane.b32.xlu0 %v242, 32
  %v542 = vpop.permute.xlu0 %541
  %543 = vrot.lane.b32.xlu0 %v243, 32
  %v544 = vpop.permute.xlu0 %543
  %v551 = vsel %vm249, %v529, 0
  %v554 = vsel %vm249, %v530, 0
  %v557 = vsel %vm249, %v531, 0
  %v560 = vsel %vm249, %v532, 0
  %v563 = vand.u32 %v544, %v264
  %565 = vmatpush.bf16.msra.mxu0 0
  %566 = vmatpush.bf16.msra.mxu0 0
  %567 = vmatpush.bf16.msra.mxu0 %v563
  %568 = vmatpush.bf16.msra.mxu0 %v542
  %569 = vmatpush.bf16.msra.mxu0 %v540
  %570 = vmatpush.bf16.msra.mxu0 %v538
  %571 = vmatpush.bf16.msra.mxu0 %v536
  %572 = vmatpush.bf16.msra.mxu0 %v534
  %573 = vmatmul.bf16.gmra.mxu0 %v551
  %v574 = vpop.f32.mrf.mxu0
  %v575 = vadd.f32 0.0, %v574
  %v576 = vpop.f32.mrf.mxu0
  %v577 = vadd.f32 0.0, %v576
  %578 = vmatmul.bf16.gmra.mxu0 %v554
  %v579 = vpop.f32.mrf.mxu0
  %v580 = vadd.f32 0.0, %v579
  %v581 = vpop.f32.mrf.mxu0
  %v582 = vadd.f32 0.0, %v581
  %583 = vmatmul.bf16.gmra.mxu0 %v557
  %v584 = vpop.f32.mrf.mxu0
  %v585 = vadd.f32 0.0, %v584
  %v586 = vpop.f32.mrf.mxu0
  %v587 = vadd.f32 0.0, %v586
  %588 = vmatmul.bf16.gmra.mxu0 %v560
  %v589 = vpop.f32.mrf.mxu0
  %v590 = vadd.f32 0.0, %v589
  %v591 = vpop.f32.mrf.mxu0
  %v592 = vadd.f32 0.0, %v591
  %593 = vdwg.mxu0
  %v594 = vadd.f32 %v496, %v575
  %v595 = vadd.f32 %v497, %v577
  %v596 = vadd.f32 %v498, %v580
  %v597 = vadd.f32 %v499, %v582
  %v598 = vadd.f32 %v500, %v585
  %v599 = vadd.f32 %v501, %v587
  %v600 = vadd.f32 %v502, %v590
  %v601 = vadd.f32 %v503, %v592
  %v602 = vmax.f32 %v594, 0.0
  %v603 = vmax.f32 %v595, 0.0
  %v604 = vmax.f32 %v596, 0.0
  %v605 = vmax.f32 %v597, 0.0
  %v606 = vmax.f32 %v598, 0.0
  %v607 = vmax.f32 %v599, 0.0
  %v608 = vmax.f32 %v600, 0.0
  %v609 = vmax.f32 %v601, 0.0
  %v610 = vpack.c.bf16 %v603, %v602
  %v611 = vpack.c.bf16 %v605, %v604
  %v612 = vpack.c.bf16 %v607, %v606
  %v613 = vpack.c.bf16 %v609, %v608
  %v614 = vld [vmem:[%s6] sm:$0x1]
  %v615 = vld [vmem:[%s4] sm:$0xf]
  %v616 = vld [vmem:[%s4 + $0x4] sm:$0x1]
  %v619 = vunpack.c.l.b16 %v615
  %v620 = vunpack.c.l.b16 %v616
  %v621 = vpack.c.b16 %v620, %v619
  %v623 = vsel %vm119, %v621, 0
  %625 = vmatpush.bf16.msra.mxu0 0
  %626 = vmatpush.bf16.msra.mxu0 0
  %627 = vmatpush.bf16.msra.mxu0 0
  %628 = vmatpush.bf16.msra.mxu0 0
  %629 = vmatpush.bf16.msra.mxu0 %v613
  %630 = vmatpush.bf16.msra.mxu0 %v612
  %631 = vmatpush.bf16.msra.mxu0 %v611
  %632 = vmatpush.bf16.msra.mxu0 %v610
  %633 = vmatmul.bf16.gmra.mxu0 %v623
  %v634 = vpop.f32.mrf.mxu0
  %v635 = vadd.f32 0.0, %v634
  %v636 = vpop.f32.mrf.mxu0
  %v637 = vadd.f32 0.0, %v636
  %638 = vdwg.mxu0
  %v639 = vpack.c.bf16 %v637, %v635
  %v640 = vld [vmem:[%s5] sm:$0xf]
  %v641 = vld [vmem:[%s5 + $0x4] sm:$0xf]
  %v642 = vld [vmem:[%s5 + $0x8] sm:$0xf]
  %v643 = vld [vmem:[%s5 + $0xc] sm:$0xf]
  %v648 = vunpack.c.l.b16 %v640
  %v649 = vunpack.c.l.b16 %v641
  %v650 = vunpack.c.l.b16 %v642
  %v651 = vunpack.c.l.b16 %v643
  %v652 = vpack.c.b16 %v649, %v648
  %v653 = vpack.c.b16 %v651, %v650
  %vm656 = vcmask 261120
  %v658 = vsel %vm656, %v639, 0
  %660 = vmatpush.bf16.msra.mxu0 0
  %661 = vmatpush.bf16.msra.mxu0 0
  %662 = vmatpush.bf16.msra.mxu0 0
  %663 = vmatpush.bf16.msra.mxu0 0
  %664 = vmatpush.bf16.msra.mxu0 0
  %665 = vmatpush.bf16.msra.mxu0 0
  %666 = vmatpush.bf16.msra.mxu0 %v653
  %667 = vmatpush.bf16.msra.mxu0 %v652
  %668 = vmatmul.bf16.gmra.mxu0 %v658
  %v669 = vpop.f32.mrf.mxu0
  %v670 = vadd.f32 0.0, %v669
  %v671 = vpop.f32.mrf.mxu0
  %v672 = vadd.f32 0.0, %v671
  %673 = vdwg.mxu0
  %v675 = vperm.slane %v614, 0
  %v677 = vadd.f32 %v675, %v670
  %v678 = vadd.f32 %v675, %v672
  %s679 = scalar_lea.vmem %s4, 8
  %v680 = vld [vmem:[%s679] sm:$0xf]
  %v681 = vld [vmem:[%s679 + $0x4] sm:$0x1]
  %v684 = vunpack.c.l.b16 %v680
  %v685 = vunpack.c.l.b16 %v681
  %v686 = vpack.c.b16 %v685, %v684
  %v688 = vsel %vm119, %v686, 0
  %690 = vmatpush.bf16.msra.mxu0 0
  %691 = vmatpush.bf16.msra.mxu0 0
  %692 = vmatpush.bf16.msra.mxu0 0
  %693 = vmatpush.bf16.msra.mxu0 0
  %694 = vmatpush.bf16.msra.mxu0 %v613
  %695 = vmatpush.bf16.msra.mxu0 %v612
  %696 = vmatpush.bf16.msra.mxu0 %v611
  %697 = vmatpush.bf16.msra.mxu0 %v610
  %698 = vmatmul.bf16.gmra.mxu0 %v688
  %v699 = vpop.f32.mrf.mxu0
  %v700 = vadd.f32 0.0, %v699
  %v701 = vpop.f32.mrf.mxu0
  %v702 = vadd.f32 0.0, %v701
  %703 = vdwg.mxu0
  %v704 = vpack.c.bf16 %v702, %v700
  %s705 = scalar_lea.vmem %s5, 16
  %v706 = vld [vmem:[%s705] sm:$0xf]
  %v707 = vld [vmem:[%s705 + $0x4] sm:$0xf]
  %v708 = vld [vmem:[%s705 + $0x8] sm:$0xf]
  %v709 = vld [vmem:[%s705 + $0xc] sm:$0xf]
  %v714 = vunpack.c.l.b16 %v706
  %v715 = vunpack.c.l.b16 %v707
  %v716 = vunpack.c.l.b16 %v708
  %v717 = vunpack.c.l.b16 %v709
  %v718 = vpack.c.b16 %v715, %v714
  %v719 = vpack.c.b16 %v717, %v716
  %v723 = vsel %vm656, %v704, 0
  %725 = vmatpush.bf16.msra.mxu0 0
  %726 = vmatpush.bf16.msra.mxu0 0
  %727 = vmatpush.bf16.msra.mxu0 0
  %728 = vmatpush.bf16.msra.mxu0 0
  %729 = vmatpush.bf16.msra.mxu0 0
  %730 = vmatpush.bf16.msra.mxu0 0
  %731 = vmatpush.bf16.msra.mxu0 %v719
  %732 = vmatpush.bf16.msra.mxu0 %v718
  %733 = vmatmul.bf16.gmra.mxu0 %v723
  %v734 = vpop.f32.mrf.mxu0
  %v735 = vadd.f32 0.0, %v734
  %v736 = vpop.f32.mrf.mxu0
  %v737 = vadd.f32 0.0, %v736
  %738 = vdwg.mxu0
  %v739 = vadd.f32 %v677, %v735
  %v740 = vadd.f32 %v678, %v737
  %s741 = scalar_lea.vmem %s4, 16
  %v742 = vld [vmem:[%s741] sm:$0xf]
  %v743 = vld [vmem:[%s741 + $0x4] sm:$0x1]
  %v746 = vunpack.c.l.b16 %v742
  %v747 = vunpack.c.l.b16 %v743
  %v748 = vpack.c.b16 %v747, %v746
  %v750 = vsel %vm119, %v748, 0
  %752 = vmatpush.bf16.msra.mxu0 0
  %753 = vmatpush.bf16.msra.mxu0 0
  %754 = vmatpush.bf16.msra.mxu0 0
  %755 = vmatpush.bf16.msra.mxu0 0
  %756 = vmatpush.bf16.msra.mxu0 %v613
  %757 = vmatpush.bf16.msra.mxu0 %v612
  %758 = vmatpush.bf16.msra.mxu0 %v611
  %759 = vmatpush.bf16.msra.mxu0 %v610
  %760 = vmatmul.bf16.gmra.mxu0 %v750
  %v761 = vpop.f32.mrf.mxu0
  %v762 = vadd.f32 0.0, %v761
  %v763 = vpop.f32.mrf.mxu0
  %v764 = vadd.f32 0.0, %v763
  %765 = vdwg.mxu0
  %v766 = vpack.c.bf16 %v764, %v762
  %s767 = scalar_lea.vmem %s5, 32
  %v768 = vld [vmem:[%s767] sm:$0xf]
  %v769 = vld [vmem:[%s767 + $0x4] sm:$0xf]
  %v770 = vld [vmem:[%s767 + $0x8] sm:$0xf]
  %v771 = vld [vmem:[%s767 + $0xc] sm:$0xf]
  %v776 = vunpack.c.l.b16 %v768
  %v777 = vunpack.c.l.b16 %v769
  %v778 = vunpack.c.l.b16 %v770
  %v779 = vunpack.c.l.b16 %v771
  %v780 = vpack.c.b16 %v777, %v776
  %v781 = vpack.c.b16 %v779, %v778
  %v785 = vsel %vm656, %v766, 0
  %787 = vmatpush.bf16.msra.mxu0 0
  %788 = vmatpush.bf16.msra.mxu0 0
  %789 = vmatpush.bf16.msra.mxu0 0
  %790 = vmatpush.bf16.msra.mxu0 0
  %791 = vmatpush.bf16.msra.mxu0 0
  %792 = vmatpush.bf16.msra.mxu0 0
  %793 = vmatpush.bf16.msra.mxu0 %v781
  %794 = vmatpush.bf16.msra.mxu0 %v780
  %795 = vmatmul.bf16.gmra.mxu0 %v785
  %v796 = vpop.f32.mrf.mxu0
  %v797 = vadd.f32 0.0, %v796
  %v798 = vpop.f32.mrf.mxu0
  %v799 = vadd.f32 0.0, %v798
  %800 = vdwg.mxu0
  %v801 = vadd.f32 %v739, %v797
  %v802 = vadd.f32 %v740, %v799
  %s803 = scalar_lea.vmem %s4, 24
  %v804 = vld [vmem:[%s803] sm:$0xf]
  %v805 = vld [vmem:[%s803 + $0x4] sm:$0x1]
  %v808 = vunpack.c.l.b16 %v804
  %v809 = vunpack.c.l.b16 %v805
  %v810 = vpack.c.b16 %v809, %v808
  %v812 = vsel %vm119, %v810, 0
  %814 = vmatpush.bf16.msra.mxu0 0
  %815 = vmatpush.bf16.msra.mxu0 0
  %816 = vmatpush.bf16.msra.mxu0 0
  %817 = vmatpush.bf16.msra.mxu0 0
  %818 = vmatpush.bf16.msra.mxu0 %v613
  %819 = vmatpush.bf16.msra.mxu0 %v612
  %820 = vmatpush.bf16.msra.mxu0 %v611
  %821 = vmatpush.bf16.msra.mxu0 %v610
  %822 = vmatmul.bf16.gmra.mxu0 %v812
  %v823 = vpop.f32.mrf.mxu0
  %v824 = vadd.f32 0.0, %v823
  %v825 = vpop.f32.mrf.mxu0
  %v826 = vadd.f32 0.0, %v825
  %827 = vdwg.mxu0
  %v828 = vpack.c.bf16 %v826, %v824
  %s829 = scalar_lea.vmem %s5, 48
  %v830 = vld [vmem:[%s829] sm:$0xf]
  %v831 = vld [vmem:[%s829 + $0x4] sm:$0xf]
  %v832 = vld [vmem:[%s829 + $0x8] sm:$0xf]
  %v833 = vld [vmem:[%s829 + $0xc] sm:$0xf]
  %v838 = vunpack.c.l.b16 %v830
  %v839 = vunpack.c.l.b16 %v831
  %v840 = vunpack.c.l.b16 %v832
  %v841 = vunpack.c.l.b16 %v833
  %v842 = vpack.c.b16 %v839, %v838
  %v843 = vpack.c.b16 %v841, %v840
  %v847 = vsel %vm656, %v828, 0
  %849 = vmatpush.bf16.msra.mxu0 0
  %850 = vmatpush.bf16.msra.mxu0 0
  %851 = vmatpush.bf16.msra.mxu0 0
  %852 = vmatpush.bf16.msra.mxu0 0
  %853 = vmatpush.bf16.msra.mxu0 0
  %854 = vmatpush.bf16.msra.mxu0 0
  %855 = vmatpush.bf16.msra.mxu0 %v843
  %856 = vmatpush.bf16.msra.mxu0 %v842
  %857 = vmatmul.bf16.gmra.mxu0 %v847
  %v858 = vpop.f32.mrf.mxu0
  %v859 = vadd.f32 0.0, %v858
  %v860 = vpop.f32.mrf.mxu0
  %v861 = vadd.f32 0.0, %v860
  %862 = vdwg.mxu0
  %v863 = vadd.f32 %v801, %v859
  %v864 = vadd.f32 %v802, %v861
  %s865 = scalar_lea.vmem %s4, 32
  %v866 = vld [vmem:[%s865] sm:$0xf]
  %v867 = vld [vmem:[%s865 + $0x4] sm:$0x1]
  %v870 = vunpack.c.l.b16 %v866
  %v871 = vunpack.c.l.b16 %v867
  %v872 = vpack.c.b16 %v871, %v870
  %v874 = vsel %vm119, %v872, 0
  %876 = vmatpush.bf16.msra.mxu0 0
  %877 = vmatpush.bf16.msra.mxu0 0
  %878 = vmatpush.bf16.msra.mxu0 0
  %879 = vmatpush.bf16.msra.mxu0 0
  %880 = vmatpush.bf16.msra.mxu0 %v613
  %881 = vmatpush.bf16.msra.mxu0 %v612
  %882 = vmatpush.bf16.msra.mxu0 %v611
  %883 = vmatpush.bf16.msra.mxu0 %v610
  %884 = vmatmul.bf16.gmra.mxu0 %v874
  %v885 = vpop.f32.mrf.mxu0
  %v886 = vadd.f32 0.0, %v885
  %v887 = vpop.f32.mrf.mxu0
  %v888 = vadd.f32 0.0, %v887
  %889 = vdwg.mxu0
  %v890 = vpack.c.bf16 %v888, %v886
  %s891 = scalar_lea.vmem %s5, 64
  %v892 = vld [vmem:[%s891] sm:$0xf]
  %v893 = vld [vmem:[%s891 + $0x4] sm:$0xf]
  %v894 = vld [vmem:[%s891 + $0x8] sm:$0xf]
  %v895 = vld [vmem:[%s891 + $0xc] sm:$0xf]
  %v900 = vunpack.c.l.b16 %v892
  %v901 = vunpack.c.l.b16 %v893
  %v902 = vunpack.c.l.b16 %v894
  %v903 = vunpack.c.l.b16 %v895
  %v904 = vpack.c.b16 %v901, %v900
  %v905 = vpack.c.b16 %v903, %v902
  %v909 = vsel %vm656, %v890, 0
  %911 = vmatpush.bf16.msra.mxu0 0
  %912 = vmatpush.bf16.msra.mxu0 0
  %913 = vmatpush.bf16.msra.mxu0 0
  %914 = vmatpush.bf16.msra.mxu0 0
  %915 = vmatpush.bf16.msra.mxu0 0
  %916 = vmatpush.bf16.msra.mxu0 0
  %917 = vmatpush.bf16.msra.mxu0 %v905
  %918 = vmatpush.bf16.msra.mxu0 %v904
  %919 = vmatmul.bf16.gmra.mxu0 %v909
  %v920 = vpop.f32.mrf.mxu0
  %v921 = vadd.f32 0.0, %v920
  %v922 = vpop.f32.mrf.mxu0
  %v923 = vadd.f32 0.0, %v922
  %924 = vdwg.mxu0
  %v925 = vadd.f32 %v863, %v921
  %v926 = vadd.f32 %v864, %v923
  %s927 = scalar_lea.vmem %s4, 40
  %v928 = vld [vmem:[%s927] sm:$0xf]
  %v929 = vld [vmem:[%s927 + $0x4] sm:$0x1]
  %v932 = vunpack.c.l.b16 %v928
  %v933 = vunpack.c.l.b16 %v929
  %v934 = vpack.c.b16 %v933, %v932
  %v936 = vsel %vm119, %v934, 0
  %938 = vmatpush.bf16.msra.mxu0 0
  %939 = vmatpush.bf16.msra.mxu0 0
  %940 = vmatpush.bf16.msra.mxu0 0
  %941 = vmatpush.bf16.msra.mxu0 0
  %942 = vmatpush.bf16.msra.mxu0 %v613
  %943 = vmatpush.bf16.msra.mxu0 %v612
  %944 = vmatpush.bf16.msra.mxu0 %v611
  %945 = vmatpush.bf16.msra.mxu0 %v610
  %946 = vmatmul.bf16.gmra.mxu0 %v936
  %v947 = vpop.f32.mrf.mxu0
  %v948 = vadd.f32 0.0, %v947
  %v949 = vpop.f32.mrf.mxu0
  %v950 = vadd.f32 0.0, %v949
  %951 = vdwg.mxu0
  %v952 = vpack.c.bf16 %v950, %v948
  %s953 = scalar_lea.vmem %s5, 80
  %v954 = vld [vmem:[%s953] sm:$0xf]
  %v955 = vld [vmem:[%s953 + $0x4] sm:$0xf]
  %v956 = vld [vmem:[%s953 + $0x8] sm:$0xf]
  %v957 = vld [vmem:[%s953 + $0xc] sm:$0xf]
  %v962 = vunpack.c.l.b16 %v954
  %v963 = vunpack.c.l.b16 %v955
  %v964 = vunpack.c.l.b16 %v956
  %v965 = vunpack.c.l.b16 %v957
  %v966 = vpack.c.b16 %v963, %v962
  %v967 = vpack.c.b16 %v965, %v964
  %v971 = vsel %vm656, %v952, 0
  %973 = vmatpush.bf16.msra.mxu0 0
  %974 = vmatpush.bf16.msra.mxu0 0
  %975 = vmatpush.bf16.msra.mxu0 0
  %976 = vmatpush.bf16.msra.mxu0 0
  %977 = vmatpush.bf16.msra.mxu0 0
  %978 = vmatpush.bf16.msra.mxu0 0
  %979 = vmatpush.bf16.msra.mxu0 %v967
  %980 = vmatpush.bf16.msra.mxu0 %v966
  %981 = vmatmul.bf16.gmra.mxu0 %v971
  %v982 = vpop.f32.mrf.mxu0
  %v983 = vadd.f32 0.0, %v982
  %v984 = vpop.f32.mrf.mxu0
  %v985 = vadd.f32 0.0, %v984
  %986 = vdwg.mxu0
  %v987 = vadd.f32 %v925, %v983
  %v988 = vadd.f32 %v926, %v985
  %s989 = scalar_lea.vmem %s4, 48
  %v990 = vld [vmem:[%s989] sm:$0xf]
  %v991 = vld [vmem:[%s989 + $0x4] sm:$0x1]
  %v994 = vunpack.c.l.b16 %v990
  %v995 = vunpack.c.l.b16 %v991
  %v996 = vpack.c.b16 %v995, %v994
  %v998 = vsel %vm119, %v996, 0
  %1000 = vmatpush.bf16.msra.mxu0 0
  %1001 = vmatpush.bf16.msra.mxu0 0
  %1002 = vmatpush.bf16.msra.mxu0 0
  %1003 = vmatpush.bf16.msra.mxu0 0
  %1004 = vmatpush.bf16.msra.mxu0 %v613
  %1005 = vmatpush.bf16.msra.mxu0 %v612
  %1006 = vmatpush.bf16.msra.mxu0 %v611
  %1007 = vmatpush.bf16.msra.mxu0 %v610
  %1008 = vmatmul.bf16.gmra.mxu0 %v998
  %v1009 = vpop.f32.mrf.mxu0
  %v1010 = vadd.f32 0.0, %v1009
  %v1011 = vpop.f32.mrf.mxu0
  %v1012 = vadd.f32 0.0, %v1011
  %1013 = vdwg.mxu0
  %v1014 = vpack.c.bf16 %v1012, %v1010
  %s1015 = scalar_lea.vmem %s5, 96
  %v1016 = vld [vmem:[%s1015] sm:$0xf]
  %v1017 = vld [vmem:[%s1015 + $0x4] sm:$0xf]
  %v1018 = vld [vmem:[%s1015 + $0x8] sm:$0xf]
  %v1019 = vld [vmem:[%s1015 + $0xc] sm:$0xf]
  %v1024 = vunpack.c.l.b16 %v1016
  %v1025 = vunpack.c.l.b16 %v1017
  %v1026 = vunpack.c.l.b16 %v1018
  %v1027 = vunpack.c.l.b16 %v1019
  %v1028 = vpack.c.b16 %v1025, %v1024
  %v1029 = vpack.c.b16 %v1027, %v1026
  %v1033 = vsel %vm656, %v1014, 0
  %1035 = vmatpush.bf16.msra.mxu0 0
  %1036 = vmatpush.bf16.msra.mxu0 0
  %1037 = vmatpush.bf16.msra.mxu0 0
  %1038 = vmatpush.bf16.msra.mxu0 0
  %1039 = vmatpush.bf16.msra.mxu0 0
  %1040 = vmatpush.bf16.msra.mxu0 0
  %1041 = vmatpush.bf16.msra.mxu0 %v1029
  %1042 = vmatpush.bf16.msra.mxu0 %v1028
  %1043 = vmatmul.bf16.gmra.mxu0 %v1033
  %v1044 = vpop.f32.mrf.mxu0
  %v1045 = vadd.f32 0.0, %v1044
  %v1046 = vpop.f32.mrf.mxu0
  %v1047 = vadd.f32 0.0, %v1046
  %1048 = vdwg.mxu0
  %v1049 = vadd.f32 %v987, %v1045
  %v1050 = vadd.f32 %v988, %v1047
  %s1051 = scalar_lea.vmem %s4, 56
  %v1052 = vld [vmem:[%s1051] sm:$0xf]
  %v1053 = vld [vmem:[%s1051 + $0x4] sm:$0x1]
  %v1056 = vunpack.c.l.b16 %v1052
  %v1057 = vunpack.c.l.b16 %v1053
  %v1058 = vpack.c.b16 %v1057, %v1056
  %v1060 = vsel %vm119, %v1058, 0
  %1062 = vmatpush.bf16.msra.mxu0 0
  %1063 = vmatpush.bf16.msra.mxu0 0
  %1064 = vmatpush.bf16.msra.mxu0 0
  %1065 = vmatpush.bf16.msra.mxu0 0
  %1066 = vmatpush.bf16.msra.mxu0 %v613
  %1067 = vmatpush.bf16.msra.mxu0 %v612
  %1068 = vmatpush.bf16.msra.mxu0 %v611
  %1069 = vmatpush.bf16.msra.mxu0 %v610
  %1070 = vmatmul.bf16.gmra.mxu0 %v1060
  %v1071 = vpop.f32.mrf.mxu0
  %v1072 = vadd.f32 0.0, %v1071
  %v1073 = vpop.f32.mrf.mxu0
  %v1074 = vadd.f32 0.0, %v1073
  %1075 = vdwg.mxu0
  %v1076 = vpack.c.bf16 %v1074, %v1072
  %s1077 = scalar_lea.vmem %s5, 112
  %v1078 = vld [vmem:[%s1077] sm:$0xf]
  %v1079 = vld [vmem:[%s1077 + $0x4] sm:$0xf]
  %v1080 = vld [vmem:[%s1077 + $0x8] sm:$0xf]
  %v1081 = vld [vmem:[%s1077 + $0xc] sm:$0xf]
  %v1086 = vunpack.c.l.b16 %v1078
  %v1087 = vunpack.c.l.b16 %v1079
  %v1088 = vunpack.c.l.b16 %v1080
  %v1089 = vunpack.c.l.b16 %v1081
  %v1090 = vpack.c.b16 %v1087, %v1086
  %v1091 = vpack.c.b16 %v1089, %v1088
  %v1095 = vsel %vm656, %v1076, 0
  %1097 = vmatpush.bf16.msra.mxu0 0
  %1098 = vmatpush.bf16.msra.mxu0 0
  %1099 = vmatpush.bf16.msra.mxu0 0
  %1100 = vmatpush.bf16.msra.mxu0 0
  %1101 = vmatpush.bf16.msra.mxu0 0
  %1102 = vmatpush.bf16.msra.mxu0 0
  %1103 = vmatpush.bf16.msra.mxu0 %v1091
  %1104 = vmatpush.bf16.msra.mxu0 %v1090
  %1105 = vmatmul.bf16.gmra.mxu0 %v1095
  %v1106 = vpop.f32.mrf.mxu0
  %v1107 = vadd.f32 0.0, %v1106
  %v1108 = vpop.f32.mrf.mxu0
  %v1109 = vadd.f32 0.0, %v1108
  %1110 = vdwg.mxu0
  %v1111 = vadd.f32 %v1049, %v1107
  %v1112 = vadd.f32 %v1050, %v1109
  %s1113 = scalar_lea.vmem %s4, 64
  %v1114 = vld [vmem:[%s1113] sm:$0xf]
  %v1115 = vld [vmem:[%s1113 + $0x4] sm:$0x1]
  %v1118 = vunpack.c.l.b16 %v1114
  %v1119 = vunpack.c.l.b16 %v1115
  %v1120 = vpack.c.b16 %v1119, %v1118
  %v1122 = vsel %vm119, %v1120, 0
  %1124 = vmatpush.bf16.msra.mxu0 0
  %1125 = vmatpush.bf16.msra.mxu0 0
  %1126 = vmatpush.bf16.msra.mxu0 0
  %1127 = vmatpush.bf16.msra.mxu0 0
  %1128 = vmatpush.bf16.msra.mxu0 %v613
  %1129 = vmatpush.bf16.msra.mxu0 %v612
  %1130 = vmatpush.bf16.msra.mxu0 %v611
  %1131 = vmatpush.bf16.msra.mxu0 %v610
  %1132 = vmatmul.bf16.gmra.mxu0 %v1122
  %v1133 = vpop.f32.mrf.mxu0
  %v1134 = vadd.f32 0.0, %v1133
  %v1135 = vpop.f32.mrf.mxu0
  %v1136 = vadd.f32 0.0, %v1135
  %1137 = vdwg.mxu0
  %v1138 = vpack.c.bf16 %v1136, %v1134
  %s1139 = scalar_lea.vmem %s5, 128
  %v1140 = vld [vmem:[%s1139] sm:$0xf]
  %v1141 = vld [vmem:[%s1139 + $0x4] sm:$0xf]
  %v1142 = vld [vmem:[%s1139 + $0x8] sm:$0xf]
  %v1143 = vld [vmem:[%s1139 + $0xc] sm:$0xf]
  %v1148 = vunpack.c.l.b16 %v1140
  %v1149 = vunpack.c.l.b16 %v1141
  %v1150 = vunpack.c.l.b16 %v1142
  %v1151 = vunpack.c.l.b16 %v1143
  %v1152 = vpack.c.b16 %v1149, %v1148
  %v1153 = vpack.c.b16 %v1151, %v1150
  %v1157 = vsel %vm656, %v1138, 0
  %1159 = vmatpush.bf16.msra.mxu0 0
  %1160 = vmatpush.bf16.msra.mxu0 0
  %1161 = vmatpush.bf16.msra.mxu0 0
  %1162 = vmatpush.bf16.msra.mxu0 0
  %1163 = vmatpush.bf16.msra.mxu0 0
  %1164 = vmatpush.bf16.msra.mxu0 0
  %1165 = vmatpush.bf16.msra.mxu0 %v1153
  %1166 = vmatpush.bf16.msra.mxu0 %v1152
  %1167 = vmatmul.bf16.gmra.mxu0 %v1157
  %v1168 = vpop.f32.mrf.mxu0
  %v1169 = vadd.f32 0.0, %v1168
  %v1170 = vpop.f32.mrf.mxu0
  %v1171 = vadd.f32 0.0, %v1170
  %1172 = vdwg.mxu0
  %v1173 = vadd.f32 %v1111, %v1169
  %v1174 = vadd.f32 %v1112, %v1171
  %s1175 = scalar_lea.vmem %s4, 72
  %v1176 = vld [vmem:[%s1175] sm:$0xf]
  %v1177 = vld [vmem:[%s1175 + $0x4] sm:$0x1]
  %v1180 = vunpack.c.l.b16 %v1176
  %v1181 = vunpack.c.l.b16 %v1177
  %v1182 = vpack.c.b16 %v1181, %v1180
  %v1184 = vsel %vm119, %v1182, 0
  %1186 = vmatpush.bf16.msra.mxu0 0
  %1187 = vmatpush.bf16.msra.mxu0 0
  %1188 = vmatpush.bf16.msra.mxu0 0
  %1189 = vmatpush.bf16.msra.mxu0 0
  %1190 = vmatpush.bf16.msra.mxu0 %v613
  %1191 = vmatpush.bf16.msra.mxu0 %v612
  %1192 = vmatpush.bf16.msra.mxu0 %v611
  %1193 = vmatpush.bf16.msra.mxu0 %v610
  %1194 = vmatmul.bf16.gmra.mxu0 %v1184
  %v1195 = vpop.f32.mrf.mxu0
  %v1196 = vadd.f32 0.0, %v1195
  %v1197 = vpop.f32.mrf.mxu0
  %v1198 = vadd.f32 0.0, %v1197
  %1199 = vdwg.mxu0
  %v1200 = vpack.c.bf16 %v1198, %v1196
  %s1201 = scalar_lea.vmem %s5, 144
  %v1202 = vld [vmem:[%s1201] sm:$0xf]
  %v1203 = vld [vmem:[%s1201 + $0x4] sm:$0xf]
  %v1204 = vld [vmem:[%s1201 + $0x8] sm:$0xf]
  %v1205 = vld [vmem:[%s1201 + $0xc] sm:$0xf]
  %v1210 = vunpack.c.l.b16 %v1202
  %v1211 = vunpack.c.l.b16 %v1203
  %v1212 = vunpack.c.l.b16 %v1204
  %v1213 = vunpack.c.l.b16 %v1205
  %v1214 = vpack.c.b16 %v1211, %v1210
  %v1215 = vpack.c.b16 %v1213, %v1212
  %v1219 = vsel %vm656, %v1200, 0
  %1221 = vmatpush.bf16.msra.mxu0 0
  %1222 = vmatpush.bf16.msra.mxu0 0
  %1223 = vmatpush.bf16.msra.mxu0 0
  %1224 = vmatpush.bf16.msra.mxu0 0
  %1225 = vmatpush.bf16.msra.mxu0 0
  %1226 = vmatpush.bf16.msra.mxu0 0
  %1227 = vmatpush.bf16.msra.mxu0 %v1215
  %1228 = vmatpush.bf16.msra.mxu0 %v1214
  %1229 = vmatmul.bf16.gmra.mxu0 %v1219
  %v1230 = vpop.f32.mrf.mxu0
  %v1231 = vadd.f32 0.0, %v1230
  %v1232 = vpop.f32.mrf.mxu0
  %v1233 = vadd.f32 0.0, %v1232
  %1234 = vdwg.mxu0
  %v1235 = vadd.f32 %v1173, %v1231
  %v1236 = vadd.f32 %v1174, %v1233
  %s1237 = scalar_lea.vmem %s4, 80
  %v1238 = vld [vmem:[%s1237] sm:$0xf]
  %v1239 = vld [vmem:[%s1237 + $0x4] sm:$0x1]
  %v1242 = vunpack.c.l.b16 %v1238
  %v1243 = vunpack.c.l.b16 %v1239
  %v1244 = vpack.c.b16 %v1243, %v1242
  %v1246 = vsel %vm119, %v1244, 0
  %1248 = vmatpush.bf16.msra.mxu0 0
  %1249 = vmatpush.bf16.msra.mxu0 0
  %1250 = vmatpush.bf16.msra.mxu0 0
  %1251 = vmatpush.bf16.msra.mxu0 0
  %1252 = vmatpush.bf16.msra.mxu0 %v613
  %1253 = vmatpush.bf16.msra.mxu0 %v612
  %1254 = vmatpush.bf16.msra.mxu0 %v611
  %1255 = vmatpush.bf16.msra.mxu0 %v610
  %1256 = vmatmul.bf16.gmra.mxu0 %v1246
  %v1257 = vpop.f32.mrf.mxu0
  %v1258 = vadd.f32 0.0, %v1257
  %v1259 = vpop.f32.mrf.mxu0
  %v1260 = vadd.f32 0.0, %v1259
  %1261 = vdwg.mxu0
  %v1262 = vpack.c.bf16 %v1260, %v1258
  %s1263 = scalar_lea.vmem %s5, 160
  %v1264 = vld [vmem:[%s1263] sm:$0xf]
  %v1265 = vld [vmem:[%s1263 + $0x4] sm:$0xf]
  %v1266 = vld [vmem:[%s1263 + $0x8] sm:$0xf]
  %v1267 = vld [vmem:[%s1263 + $0xc] sm:$0xf]
  %v1272 = vunpack.c.l.b16 %v1264
  %v1273 = vunpack.c.l.b16 %v1265
  %v1274 = vunpack.c.l.b16 %v1266
  %v1275 = vunpack.c.l.b16 %v1267
  %v1276 = vpack.c.b16 %v1273, %v1272
  %v1277 = vpack.c.b16 %v1275, %v1274
  %v1281 = vsel %vm656, %v1262, 0
  %1283 = vmatpush.bf16.msra.mxu0 0
  %1284 = vmatpush.bf16.msra.mxu0 0
  %1285 = vmatpush.bf16.msra.mxu0 0
  %1286 = vmatpush.bf16.msra.mxu0 0
  %1287 = vmatpush.bf16.msra.mxu0 0
  %1288 = vmatpush.bf16.msra.mxu0 0
  %1289 = vmatpush.bf16.msra.mxu0 %v1277
  %1290 = vmatpush.bf16.msra.mxu0 %v1276
  %1291 = vmatmul.bf16.gmra.mxu0 %v1281
  %v1292 = vpop.f32.mrf.mxu0
  %v1293 = vadd.f32 0.0, %v1292
  %v1294 = vpop.f32.mrf.mxu0
  %v1295 = vadd.f32 0.0, %v1294
  %1296 = vdwg.mxu0
  %v1297 = vadd.f32 %v1235, %v1293
  %v1298 = vadd.f32 %v1236, %v1295
  %s1299 = scalar_lea.vmem %s4, 88
  %v1300 = vld [vmem:[%s1299] sm:$0xf]
  %v1301 = vld [vmem:[%s1299 + $0x4] sm:$0x1]
  %v1304 = vunpack.c.l.b16 %v1300
  %v1305 = vunpack.c.l.b16 %v1301
  %v1306 = vpack.c.b16 %v1305, %v1304
  %v1308 = vsel %vm119, %v1306, 0
  %1310 = vmatpush.bf16.msra.mxu0 0
  %1311 = vmatpush.bf16.msra.mxu0 0
  %1312 = vmatpush.bf16.msra.mxu0 0
  %1313 = vmatpush.bf16.msra.mxu0 0
  %1314 = vmatpush.bf16.msra.mxu0 %v613
  %1315 = vmatpush.bf16.msra.mxu0 %v612
  %1316 = vmatpush.bf16.msra.mxu0 %v611
  %1317 = vmatpush.bf16.msra.mxu0 %v610
  %1318 = vmatmul.bf16.gmra.mxu0 %v1308
  %v1319 = vpop.f32.mrf.mxu0
  %v1320 = vadd.f32 0.0, %v1319
  %v1321 = vpop.f32.mrf.mxu0
  %v1322 = vadd.f32 0.0, %v1321
  %1323 = vdwg.mxu0
  %v1324 = vpack.c.bf16 %v1322, %v1320
  %s1325 = scalar_lea.vmem %s5, 176
  %v1326 = vld [vmem:[%s1325] sm:$0xf]
  %v1327 = vld [vmem:[%s1325 + $0x4] sm:$0xf]
  %v1328 = vld [vmem:[%s1325 + $0x8] sm:$0xf]
  %v1329 = vld [vmem:[%s1325 + $0xc] sm:$0xf]
  %v1334 = vunpack.c.l.b16 %v1326
  %v1335 = vunpack.c.l.b16 %v1327
  %v1336 = vunpack.c.l.b16 %v1328
  %v1337 = vunpack.c.l.b16 %v1329
  %v1338 = vpack.c.b16 %v1335, %v1334
  %v1339 = vpack.c.b16 %v1337, %v1336
  %v1343 = vsel %vm656, %v1324, 0
  %1345 = vmatpush.bf16.msra.mxu0 0
  %1346 = vmatpush.bf16.msra.mxu0 0
  %1347 = vmatpush.bf16.msra.mxu0 0
  %1348 = vmatpush.bf16.msra.mxu0 0
  %1349 = vmatpush.bf16.msra.mxu0 0
  %1350 = vmatpush.bf16.msra.mxu0 0
  %1351 = vmatpush.bf16.msra.mxu0 %v1339
  %1352 = vmatpush.bf16.msra.mxu0 %v1338
  %1353 = vmatmul.bf16.gmra.mxu0 %v1343
  %v1354 = vpop.f32.mrf.mxu0
  %v1355 = vadd.f32 0.0, %v1354
  %v1356 = vpop.f32.mrf.mxu0
  %v1357 = vadd.f32 0.0, %v1356
  %1358 = vdwg.mxu0
  %v1359 = vadd.f32 %v1297, %v1355
  %v1360 = vadd.f32 %v1298, %v1357
  %s1361 = scalar_lea.vmem %s4, 96
  %v1362 = vld [vmem:[%s1361] sm:$0xf]
  %v1363 = vld [vmem:[%s1361 + $0x4] sm:$0x1]
  %v1366 = vunpack.c.l.b16 %v1362
  %v1367 = vunpack.c.l.b16 %v1363
  %v1368 = vpack.c.b16 %v1367, %v1366
  %v1370 = vsel %vm119, %v1368, 0
  %1372 = vmatpush.bf16.msra.mxu0 0
  %1373 = vmatpush.bf16.msra.mxu0 0
  %1374 = vmatpush.bf16.msra.mxu0 0
  %1375 = vmatpush.bf16.msra.mxu0 0
  %1376 = vmatpush.bf16.msra.mxu0 %v613
  %1377 = vmatpush.bf16.msra.mxu0 %v612
  %1378 = vmatpush.bf16.msra.mxu0 %v611
  %1379 = vmatpush.bf16.msra.mxu0 %v610
  %1380 = vmatmul.bf16.gmra.mxu0 %v1370
  %v1381 = vpop.f32.mrf.mxu0
  %v1382 = vadd.f32 0.0, %v1381
  %v1383 = vpop.f32.mrf.mxu0
  %v1384 = vadd.f32 0.0, %v1383
  %1385 = vdwg.mxu0
  %v1386 = vpack.c.bf16 %v1384, %v1382
  %s1387 = scalar_lea.vmem %s5, 192
  %v1388 = vld [vmem:[%s1387] sm:$0xf]
  %v1389 = vld [vmem:[%s1387 + $0x4] sm:$0xf]
  %v1390 = vld [vmem:[%s1387 + $0x8] sm:$0xf]
  %v1391 = vld [vmem:[%s1387 + $0xc] sm:$0xf]
  %v1396 = vunpack.c.l.b16 %v1388
  %v1397 = vunpack.c.l.b16 %v1389
  %v1398 = vunpack.c.l.b16 %v1390
  %v1399 = vunpack.c.l.b16 %v1391
  %v1400 = vpack.c.b16 %v1397, %v1396
  %v1401 = vpack.c.b16 %v1399, %v1398
  %v1405 = vsel %vm656, %v1386, 0
  %1407 = vmatpush.bf16.msra.mxu0 0
  %1408 = vmatpush.bf16.msra.mxu0 0
  %1409 = vmatpush.bf16.msra.mxu0 0
  %1410 = vmatpush.bf16.msra.mxu0 0
  %1411 = vmatpush.bf16.msra.mxu0 0
  %1412 = vmatpush.bf16.msra.mxu0 0
  %1413 = vmatpush.bf16.msra.mxu0 %v1401
  %1414 = vmatpush.bf16.msra.mxu0 %v1400
  %1415 = vmatmul.bf16.gmra.mxu0 %v1405
  %v1416 = vpop.f32.mrf.mxu0
  %v1417 = vadd.f32 0.0, %v1416
  %v1418 = vpop.f32.mrf.mxu0
  %v1419 = vadd.f32 0.0, %v1418
  %1420 = vdwg.mxu0
  %v1421 = vadd.f32 %v1359, %v1417
  %v1422 = vadd.f32 %v1360, %v1419
  %s1423 = scalar_lea.vmem %s4, 104
  %v1424 = vld [vmem:[%s1423] sm:$0xf]
  %v1425 = vld [vmem:[%s1423 + $0x4] sm:$0x1]
  %v1428 = vunpack.c.l.b16 %v1424
  %v1429 = vunpack.c.l.b16 %v1425
  %v1430 = vpack.c.b16 %v1429, %v1428
  %v1432 = vsel %vm119, %v1430, 0
  %1434 = vmatpush.bf16.msra.mxu0 0
  %1435 = vmatpush.bf16.msra.mxu0 0
  %1436 = vmatpush.bf16.msra.mxu0 0
  %1437 = vmatpush.bf16.msra.mxu0 0
  %1438 = vmatpush.bf16.msra.mxu0 %v613
  %1439 = vmatpush.bf16.msra.mxu0 %v612
  %1440 = vmatpush.bf16.msra.mxu0 %v611
  %1441 = vmatpush.bf16.msra.mxu0 %v610
  %1442 = vmatmul.bf16.gmra.mxu0 %v1432
  %v1443 = vpop.f32.mrf.mxu0
  %v1444 = vadd.f32 0.0, %v1443
  %v1445 = vpop.f32.mrf.mxu0
  %v1446 = vadd.f32 0.0, %v1445
  %1447 = vdwg.mxu0
  %v1448 = vpack.c.bf16 %v1446, %v1444
  %s1449 = scalar_lea.vmem %s5, 208
  %v1450 = vld [vmem:[%s1449] sm:$0xf]
  %v1451 = vld [vmem:[%s1449 + $0x4] sm:$0xf]
  %v1452 = vld [vmem:[%s1449 + $0x8] sm:$0xf]
  %v1453 = vld [vmem:[%s1449 + $0xc] sm:$0xf]
  %v1458 = vunpack.c.l.b16 %v1450
  %v1459 = vunpack.c.l.b16 %v1451
  %v1460 = vunpack.c.l.b16 %v1452
  %v1461 = vunpack.c.l.b16 %v1453
  %v1462 = vpack.c.b16 %v1459, %v1458
  %v1463 = vpack.c.b16 %v1461, %v1460
  %v1467 = vsel %vm656, %v1448, 0
  %1469 = vmatpush.bf16.msra.mxu0 0
  %1470 = vmatpush.bf16.msra.mxu0 0
  %1471 = vmatpush.bf16.msra.mxu0 0
  %1472 = vmatpush.bf16.msra.mxu0 0
  %1473 = vmatpush.bf16.msra.mxu0 0
  %1474 = vmatpush.bf16.msra.mxu0 0
  %1475 = vmatpush.bf16.msra.mxu0 %v1463
  %1476 = vmatpush.bf16.msra.mxu0 %v1462
  %1477 = vmatmul.bf16.gmra.mxu0 %v1467
  %v1478 = vpop.f32.mrf.mxu0
  %v1479 = vadd.f32 0.0, %v1478
  %v1480 = vpop.f32.mrf.mxu0
  %v1481 = vadd.f32 0.0, %v1480
  %1482 = vdwg.mxu0
  %v1483 = vadd.f32 %v1421, %v1479
  %v1484 = vadd.f32 %v1422, %v1481
  %s1485 = scalar_lea.vmem %s4, 112
  %v1486 = vld [vmem:[%s1485] sm:$0xf]
  %v1487 = vld [vmem:[%s1485 + $0x4] sm:$0x1]
  %v1490 = vunpack.c.l.b16 %v1486
  %v1491 = vunpack.c.l.b16 %v1487
  %v1492 = vpack.c.b16 %v1491, %v1490
  %v1494 = vsel %vm119, %v1492, 0
  %1496 = vmatpush.bf16.msra.mxu0 0
  %1497 = vmatpush.bf16.msra.mxu0 0
  %1498 = vmatpush.bf16.msra.mxu0 0
  %1499 = vmatpush.bf16.msra.mxu0 0
  %1500 = vmatpush.bf16.msra.mxu0 %v613
  %1501 = vmatpush.bf16.msra.mxu0 %v612
  %1502 = vmatpush.bf16.msra.mxu0 %v611
  %1503 = vmatpush.bf16.msra.mxu0 %v610
  %1504 = vmatmul.bf16.gmra.mxu0 %v1494
  %v1505 = vpop.f32.mrf.mxu0
  %v1506 = vadd.f32 0.0, %v1505
  %v1507 = vpop.f32.mrf.mxu0
  %v1508 = vadd.f32 0.0, %v1507
  %1509 = vdwg.mxu0
  %v1510 = vpack.c.bf16 %v1508, %v1506
  %s1511 = scalar_lea.vmem %s5, 224
  %v1512 = vld [vmem:[%s1511] sm:$0xf]
  %v1513 = vld [vmem:[%s1511 + $0x4] sm:$0xf]
  %v1514 = vld [vmem:[%s1511 + $0x8] sm:$0xf]
  %v1515 = vld [vmem:[%s1511 + $0xc] sm:$0xf]
  %v1520 = vunpack.c.l.b16 %v1512
  %v1521 = vunpack.c.l.b16 %v1513
  %v1522 = vunpack.c.l.b16 %v1514
  %v1523 = vunpack.c.l.b16 %v1515
  %v1524 = vpack.c.b16 %v1521, %v1520
  %v1525 = vpack.c.b16 %v1523, %v1522
  %v1529 = vsel %vm656, %v1510, 0
  %1531 = vmatpush.bf16.msra.mxu0 0
  %1532 = vmatpush.bf16.msra.mxu0 0
  %1533 = vmatpush.bf16.msra.mxu0 0
  %1534 = vmatpush.bf16.msra.mxu0 0
  %1535 = vmatpush.bf16.msra.mxu0 0
  %1536 = vmatpush.bf16.msra.mxu0 0
  %1537 = vmatpush.bf16.msra.mxu0 %v1525
  %1538 = vmatpush.bf16.msra.mxu0 %v1524
  %1539 = vmatmul.bf16.gmra.mxu0 %v1529
  %v1540 = vpop.f32.mrf.mxu0
  %v1541 = vadd.f32 0.0, %v1540
  %v1542 = vpop.f32.mrf.mxu0
  %v1543 = vadd.f32 0.0, %v1542
  %1544 = vdwg.mxu0
  %v1545 = vadd.f32 %v1483, %v1541
  %v1546 = vadd.f32 %v1484, %v1543
  %s1547 = scalar_lea.vmem %s4, 120
  %v1548 = vld [vmem:[%s1547] sm:$0xf]
  %v1549 = vld [vmem:[%s1547 + $0x4] sm:$0x1]
  %v1552 = vunpack.c.l.b16 %v1548
  %v1553 = vunpack.c.l.b16 %v1549
  %v1554 = vpack.c.b16 %v1553, %v1552
  %v1556 = vsel %vm119, %v1554, 0
  %1558 = vmatpush.bf16.msra.mxu0 0
  %1559 = vmatpush.bf16.msra.mxu0 0
  %1560 = vmatpush.bf16.msra.mxu0 0
  %1561 = vmatpush.bf16.msra.mxu0 0
  %1562 = vmatpush.bf16.msra.mxu0 %v613
  %1563 = vmatpush.bf16.msra.mxu0 %v612
  %1564 = vmatpush.bf16.msra.mxu0 %v611
  %1565 = vmatpush.bf16.msra.mxu0 %v610
  %1566 = vmatmul.bf16.gmra.mxu0 %v1556
  %v1567 = vpop.f32.mrf.mxu0
  %v1568 = vadd.f32 0.0, %v1567
  %v1569 = vpop.f32.mrf.mxu0
  %v1570 = vadd.f32 0.0, %v1569
  %1571 = vdwg.mxu0
  %v1572 = vpack.c.bf16 %v1570, %v1568
  %s1573 = scalar_lea.vmem %s5, 240
  %v1574 = vld [vmem:[%s1573] sm:$0xf]
  %v1575 = vld [vmem:[%s1573 + $0x4] sm:$0xf]
  %v1576 = vld [vmem:[%s1573 + $0x8] sm:$0xf]
  %v1577 = vld [vmem:[%s1573 + $0xc] sm:$0xf]
  %v1582 = vunpack.c.l.b16 %v1574
  %v1583 = vunpack.c.l.b16 %v1575
  %v1584 = vunpack.c.l.b16 %v1576
  %v1585 = vunpack.c.l.b16 %v1577
  %v1586 = vpack.c.b16 %v1583, %v1582
  %v1587 = vpack.c.b16 %v1585, %v1584
  %v1591 = vsel %vm656, %v1572, 0
  %1593 = vmatpush.bf16.msra.mxu0 0
  %1594 = vmatpush.bf16.msra.mxu0 0
  %1595 = vmatpush.bf16.msra.mxu0 0
  %1596 = vmatpush.bf16.msra.mxu0 0
  %1597 = vmatpush.bf16.msra.mxu0 0
  %1598 = vmatpush.bf16.msra.mxu0 0
  %1599 = vmatpush.bf16.msra.mxu0 %v1587
  %1600 = vmatpush.bf16.msra.mxu0 %v1586
  %1601 = vmatmul.bf16.gmra.mxu0 %v1591
  %v1602 = vpop.f32.mrf.mxu0
  %v1603 = vadd.f32 0.0, %v1602
  %v1604 = vpop.f32.mrf.mxu0
  %v1605 = vadd.f32 0.0, %v1604
  %1606 = vdwg.mxu0
  %v1607 = vadd.f32 %v1545, %v1603
  %v1608 = vadd.f32 %v1546, %v1605
  %v1609 = vmax.f32 %v1607, 0.0
  %v1610 = vmax.f32 %v1608, 0.0
  %v1611 = vpack.c.bf16 %v1610, %v1609
  %v1612 = vld [vmem:[%s9] sm:$0x1]
  %v1613 = vld [vmem:[%s7] sm:$0x1]
  %vm1614 = vcmask 72704
  %v1616 = vsel %vm1614, %v1613, 0
  %vm1618 = vcmask 1043456
  %vm1619 = vcmask 1044480
  %v1620 = vsel %vm1618, 4294967295, 65535
  %v1621 = vsel %vm1619, %v1620, 0
  %v1623 = vand.u32 %v1611, %v1621
  %1625 = vmatpush.bf16.msra.mxu0 0
  %1626 = vmatpush.bf16.msra.mxu0 0
  %1627 = vmatpush.bf16.msra.mxu0 0
  %1628 = vmatpush.bf16.msra.mxu0 0
  %1629 = vmatpush.bf16.msra.mxu0 0
  %1630 = vmatpush.bf16.msra.mxu0 0
  %1631 = vmatpush.bf16.msra.mxu0 0
  %1632 = vmatpush.bf16.msra.mxu0 %v1623
  %1633 = vmatmul.bf16.gmra.mxu0 %v1616
  %v1634 = vpop.f32.mrf.mxu0
  %v1635 = vadd.f32 0.0, %v1634
  %v1636 = vpop.f32.mrf.mxu0
  %1637 = vdwg.mxu0
  %v1638 = vpack.c.bf16 %v1635, %v1635
  %v1639 = vld [vmem:[%s8] sm:$0xf]
  %v1640 = vld [vmem:[%s8 + $0x4] sm:$0xf]
  %v1641 = vld [vmem:[%s8 + $0x8] sm:$0xf]
  %v1642 = vld [vmem:[%s8 + $0xc] sm:$0xf]
  %v1643 = vld [vmem:[%s8 + $0x10] sm:$0xf]
  %v1644 = vld [vmem:[%s8 + $0x14] sm:$0xf]
  %v1645 = vld [vmem:[%s8 + $0x18] sm:$0xf]
  %v1646 = vld [vmem:[%s8 + $0x1c] sm:$0xf]
  %v1655 = vunpack.c.l.b16 %v1639
  %v1656 = vunpack.c.l.b16 %v1640
  %v1657 = vunpack.c.l.b16 %v1641
  %v1658 = vunpack.c.l.b16 %v1642
  %v1659 = vunpack.c.l.b16 %v1643
  %v1660 = vunpack.c.l.b16 %v1644
  %v1661 = vunpack.c.l.b16 %v1645
  %v1662 = vunpack.c.l.b16 %v1646
  %v1663 = vpack.c.b16 %v1656, %v1655
  %v1664 = vpack.c.b16 %v1658, %v1657
  %v1665 = vpack.c.b16 %v1660, %v1659
  %v1666 = vpack.c.b16 %v1662, %v1661
  %v1672 = vsel %vm119, %v1638, 0
  %1674 = vmatpush.bf16.msra.mxu0 0
  %1675 = vmatpush.bf16.msra.mxu0 0
  %1676 = vmatpush.bf16.msra.mxu0 0
  %1677 = vmatpush.bf16.msra.mxu0 0
  %1678 = vmatpush.bf16.msra.mxu0 %v1666
  %1679 = vmatpush.bf16.msra.mxu0 %v1665
  %1680 = vmatpush.bf16.msra.mxu0 %v1664
  %1681 = vmatpush.bf16.msra.mxu0 %v1663
  %1682 = vmatmul.bf16.gmra.mxu0 %v1672
  %v1683 = vpop.f32.mrf.mxu0
  %v1684 = vadd.f32 0.0, %v1683
  %v1685 = vpop.f32.mrf.mxu0
  %1686 = vdwg.mxu0
  %v1687 = vadd.f32 %v1612, %v1684
  %s1688 = scalar_lea.vmem %s7, 1
  %v1689 = vld [vmem:[%s1688] sm:$0x1]
  %v1691 = vsel %vm1614, %v1689, 0
  %1693 = vmatpush.bf16.msra.mxu0 0
  %1694 = vmatpush.bf16.msra.mxu0 0
  %1695 = vmatpush.bf16.msra.mxu0 0
  %1696 = vmatpush.bf16.msra.mxu0 0
  %1697 = vmatpush.bf16.msra.mxu0 0
  %1698 = vmatpush.bf16.msra.mxu0 0
  %1699 = vmatpush.bf16.msra.mxu0 0
  %1700 = vmatpush.bf16.msra.mxu0 %v1623
  %1701 = vmatmul.bf16.gmra.mxu0 %v1691
  %v1702 = vpop.f32.mrf.mxu0
  %v1703 = vadd.f32 0.0, %v1702
  %v1704 = vpop.f32.mrf.mxu0
  %1705 = vdwg.mxu0
  %v1706 = vpack.c.bf16 %v1703, %v1703
  %s1707 = scalar_lea.vmem %s8, 32
  %v1708 = vld [vmem:[%s1707] sm:$0xf]
  %v1709 = vld [vmem:[%s1707 + $0x4] sm:$0xf]
  %v1710 = vld [vmem:[%s1707 + $0x8] sm:$0xf]
  %v1711 = vld [vmem:[%s1707 + $0xc] sm:$0xf]
  %v1712 = vld [vmem:[%s1707 + $0x10] sm:$0xf]
  %v1713 = vld [vmem:[%s1707 + $0x14] sm:$0xf]
  %v1714 = vld [vmem:[%s1707 + $0x18] sm:$0xf]
  %v1715 = vld [vmem:[%s1707 + $0x1c] sm:$0xf]
  %v1724 = vunpack.c.l.b16 %v1708
  %v1725 = vunpack.c.l.b16 %v1709
  %v1726 = vunpack.c.l.b16 %v1710
  %v1727 = vunpack.c.l.b16 %v1711
  %v1728 = vunpack.c.l.b16 %v1712
  %v1729 = vunpack.c.l.b16 %v1713
  %v1730 = vunpack.c.l.b16 %v1714
  %v1731 = vunpack.c.l.b16 %v1715
  %v1732 = vpack.c.b16 %v1725, %v1724
  %v1733 = vpack.c.b16 %v1727, %v1726
  %v1734 = vpack.c.b16 %v1729, %v1728
  %v1735 = vpack.c.b16 %v1731, %v1730
  %v1741 = vsel %vm119, %v1706, 0
  %1743 = vmatpush.bf16.msra.mxu0 0
  %1744 = vmatpush.bf16.msra.mxu0 0
  %1745 = vmatpush.bf16.msra.mxu0 0
  %1746 = vmatpush.bf16.msra.mxu0 0
  %1747 = vmatpush.bf16.msra.mxu0 %v1735
  %1748 = vmatpush.bf16.msra.mxu0 %v1734
  %1749 = vmatpush.bf16.msra.mxu0 %v1733
  %1750 = vmatpush.bf16.msra.mxu0 %v1732
  %1751 = vmatmul.bf16.gmra.mxu0 %v1741
  %v1752 = vpop.f32.mrf.mxu0
  %v1753 = vadd.f32 0.0, %v1752
  %v1754 = vpop.f32.mrf.mxu0
  %1755 = vdwg.mxu0
  %v1756 = vadd.f32 %v1687, %v1753
  %s1757 = scalar_lea.vmem %s7, 2
  %v1758 = vld [vmem:[%s1757] sm:$0x1]
  %v1760 = vsel %vm1614, %v1758, 0
  %1762 = vmatpush.bf16.msra.mxu0 0
  %1763 = vmatpush.bf16.msra.mxu0 0
  %1764 = vmatpush.bf16.msra.mxu0 0
  %1765 = vmatpush.bf16.msra.mxu0 0
  %1766 = vmatpush.bf16.msra.mxu0 0
  %1767 = vmatpush.bf16.msra.mxu0 0
  %1768 = vmatpush.bf16.msra.mxu0 0
  %1769 = vmatpush.bf16.msra.mxu0 %v1623
  %1770 = vmatmul.bf16.gmra.mxu0 %v1760
  %v1771 = vpop.f32.mrf.mxu0
  %v1772 = vadd.f32 0.0, %v1771
  %v1773 = vpop.f32.mrf.mxu0
  %1774 = vdwg.mxu0
  %v1775 = vpack.c.bf16 %v1772, %v1772
  %s1776 = scalar_lea.vmem %s8, 64
  %v1777 = vld [vmem:[%s1776] sm:$0xf]
  %v1778 = vld [vmem:[%s1776 + $0x4] sm:$0xf]
  %v1779 = vld [vmem:[%s1776 + $0x8] sm:$0xf]
  %v1780 = vld [vmem:[%s1776 + $0xc] sm:$0xf]
  %v1781 = vld [vmem:[%s1776 + $0x10] sm:$0xf]
  %v1782 = vld [vmem:[%s1776 + $0x14] sm:$0xf]
  %v1783 = vld [vmem:[%s1776 + $0x18] sm:$0xf]
  %v1784 = vld [vmem:[%s1776 + $0x1c] sm:$0xf]
  %v1793 = vunpack.c.l.b16 %v1777
  %v1794 = vunpack.c.l.b16 %v1778
  %v1795 = vunpack.c.l.b16 %v1779
  %v1796 = vunpack.c.l.b16 %v1780
  %v1797 = vunpack.c.l.b16 %v1781
  %v1798 = vunpack.c.l.b16 %v1782
  %v1799 = vunpack.c.l.b16 %v1783
  %v1800 = vunpack.c.l.b16 %v1784
  %v1801 = vpack.c.b16 %v1794, %v1793
  %v1802 = vpack.c.b16 %v1796, %v1795
  %v1803 = vpack.c.b16 %v1798, %v1797
  %v1804 = vpack.c.b16 %v1800, %v1799
  %v1810 = vsel %vm119, %v1775, 0
  %1812 = vmatpush.bf16.msra.mxu0 0
  %1813 = vmatpush.bf16.msra.mxu0 0
  %1814 = vmatpush.bf16.msra.mxu0 0
  %1815 = vmatpush.bf16.msra.mxu0 0
  %1816 = vmatpush.bf16.msra.mxu0 %v1804
  %1817 = vmatpush.bf16.msra.mxu0 %v1803
  %1818 = vmatpush.bf16.msra.mxu0 %v1802
  %1819 = vmatpush.bf16.msra.mxu0 %v1801
  %1820 = vmatmul.bf16.gmra.mxu0 %v1810
  %v1821 = vpop.f32.mrf.mxu0
  %v1822 = vadd.f32 0.0, %v1821
  %v1823 = vpop.f32.mrf.mxu0
  %1824 = vdwg.mxu0
  %v1825 = vadd.f32 %v1756, %v1822
  %s1826 = scalar_lea.vmem %s7, 3
  %v1827 = vld [vmem:[%s1826] sm:$0x1]
  %v1829 = vsel %vm1614, %v1827, 0
  %1831 = vmatpush.bf16.msra.mxu0 0
  %1832 = vmatpush.bf16.msra.mxu0 0
  %1833 = vmatpush.bf16.msra.mxu0 0
  %1834 = vmatpush.bf16.msra.mxu0 0
  %1835 = vmatpush.bf16.msra.mxu0 0
  %1836 = vmatpush.bf16.msra.mxu0 0
  %1837 = vmatpush.bf16.msra.mxu0 0
  %1838 = vmatpush.bf16.msra.mxu0 %v1623
  %1839 = vmatmul.bf16.gmra.mxu0 %v1829
  %v1840 = vpop.f32.mrf.mxu0
  %v1841 = vadd.f32 0.0, %v1840
  %v1842 = vpop.f32.mrf.mxu0
  %1843 = vdwg.mxu0
  %v1844 = vpack.c.bf16 %v1841, %v1841
  %s1845 = scalar_lea.vmem %s8, 96
  %v1846 = vld [vmem:[%s1845] sm:$0xf]
  %v1847 = vld [vmem:[%s1845 + $0x4] sm:$0xf]
  %v1848 = vld [vmem:[%s1845 + $0x8] sm:$0xf]
  %v1849 = vld [vmem:[%s1845 + $0xc] sm:$0xf]
  %v1850 = vld [vmem:[%s1845 + $0x10] sm:$0xf]
  %v1851 = vld [vmem:[%s1845 + $0x14] sm:$0xf]
  %v1852 = vld [vmem:[%s1845 + $0x18] sm:$0xf]
  %v1853 = vld [vmem:[%s1845 + $0x1c] sm:$0xf]
  %v1862 = vunpack.c.l.b16 %v1846
  %v1863 = vunpack.c.l.b16 %v1847
  %v1864 = vunpack.c.l.b16 %v1848
  %v1865 = vunpack.c.l.b16 %v1849
  %v1866 = vunpack.c.l.b16 %v1850
  %v1867 = vunpack.c.l.b16 %v1851
  %v1868 = vunpack.c.l.b16 %v1852
  %v1869 = vunpack.c.l.b16 %v1853
  %v1870 = vpack.c.b16 %v1863, %v1862
  %v1871 = vpack.c.b16 %v1865, %v1864
  %v1872 = vpack.c.b16 %v1867, %v1866
  %v1873 = vpack.c.b16 %v1869, %v1868
  %v1879 = vsel %vm119, %v1844, 0
  %1881 = vmatpush.bf16.msra.mxu0 0
  %1882 = vmatpush.bf16.msra.mxu0 0
  %1883 = vmatpush.bf16.msra.mxu0 0
  %1884 = vmatpush.bf16.msra.mxu0 0
  %1885 = vmatpush.bf16.msra.mxu0 %v1873
  %1886 = vmatpush.bf16.msra.mxu0 %v1872
  %1887 = vmatpush.bf16.msra.mxu0 %v1871
  %1888 = vmatpush.bf16.msra.mxu0 %v1870
  %1889 = vmatmul.bf16.gmra.mxu0 %v1879
  %v1890 = vpop.f32.mrf.mxu0
  %v1891 = vadd.f32 0.0, %v1890
  %v1892 = vpop.f32.mrf.mxu0
  %1893 = vdwg.mxu0
  %v1894 = vadd.f32 %v1825, %v1891
  %s1895 = scalar_lea.vmem %s7, 4
  %v1896 = vld [vmem:[%s1895] sm:$0x1]
  %v1898 = vsel %vm1614, %v1896, 0
  %1900 = vmatpush.bf16.msra.mxu0 0
  %1901 = vmatpush.bf16.msra.mxu0 0
  %1902 = vmatpush.bf16.msra.mxu0 0
  %1903 = vmatpush.bf16.msra.mxu0 0
  %1904 = vmatpush.bf16.msra.mxu0 0
  %1905 = vmatpush.bf16.msra.mxu0 0
  %1906 = vmatpush.bf16.msra.mxu0 0
  %1907 = vmatpush.bf16.msra.mxu0 %v1623
  %1908 = vmatmul.bf16.gmra.mxu0 %v1898
  %v1909 = vpop.f32.mrf.mxu0
  %v1910 = vadd.f32 0.0, %v1909
  %v1911 = vpop.f32.mrf.mxu0
  %1912 = vdwg.mxu0
  %v1913 = vpack.c.bf16 %v1910, %v1910
  %s1914 = scalar_lea.vmem %s8, 128
  %v1915 = vld [vmem:[%s1914] sm:$0xf]
  %v1916 = vld [vmem:[%s1914 + $0x4] sm:$0xf]
  %v1917 = vld [vmem:[%s1914 + $0x8] sm:$0xf]
  %v1918 = vld [vmem:[%s1914 + $0xc] sm:$0xf]
  %v1919 = vld [vmem:[%s1914 + $0x10] sm:$0xf]
  %v1920 = vld [vmem:[%s1914 + $0x14] sm:$0xf]
  %v1921 = vld [vmem:[%s1914 + $0x18] sm:$0xf]
  %v1922 = vld [vmem:[%s1914 + $0x1c] sm:$0xf]
  %v1931 = vunpack.c.l.b16 %v1915
  %v1932 = vunpack.c.l.b16 %v1916
  %v1933 = vunpack.c.l.b16 %v1917
  %v1934 = vunpack.c.l.b16 %v1918
  %v1935 = vunpack.c.l.b16 %v1919
  %v1936 = vunpack.c.l.b16 %v1920
  %v1937 = vunpack.c.l.b16 %v1921
  %v1938 = vunpack.c.l.b16 %v1922
  %v1939 = vpack.c.b16 %v1932, %v1931
  %v1940 = vpack.c.b16 %v1934, %v1933
  %v1941 = vpack.c.b16 %v1936, %v1935
  %v1942 = vpack.c.b16 %v1938, %v1937
  %v1948 = vsel %vm119, %v1913, 0
  %1950 = vmatpush.bf16.msra.mxu0 0
  %1951 = vmatpush.bf16.msra.mxu0 0
  %1952 = vmatpush.bf16.msra.mxu0 0
  %1953 = vmatpush.bf16.msra.mxu0 0
  %1954 = vmatpush.bf16.msra.mxu0 %v1942
  %1955 = vmatpush.bf16.msra.mxu0 %v1941
  %1956 = vmatpush.bf16.msra.mxu0 %v1940
  %1957 = vmatpush.bf16.msra.mxu0 %v1939
  %1958 = vmatmul.bf16.gmra.mxu0 %v1948
  %v1959 = vpop.f32.mrf.mxu0
  %v1960 = vadd.f32 0.0, %v1959
  %v1961 = vpop.f32.mrf.mxu0
  %1962 = vdwg.mxu0
  %v1963 = vadd.f32 %v1894, %v1960
  %s1964 = scalar_lea.vmem %s7, 5
  %v1965 = vld [vmem:[%s1964] sm:$0x1]
  %v1967 = vsel %vm1614, %v1965, 0
  %1969 = vmatpush.bf16.msra.mxu0 0
  %1970 = vmatpush.bf16.msra.mxu0 0
  %1971 = vmatpush.bf16.msra.mxu0 0
  %1972 = vmatpush.bf16.msra.mxu0 0
  %1973 = vmatpush.bf16.msra.mxu0 0
  %1974 = vmatpush.bf16.msra.mxu0 0
  %1975 = vmatpush.bf16.msra.mxu0 0
  %1976 = vmatpush.bf16.msra.mxu0 %v1623
  %1977 = vmatmul.bf16.gmra.mxu0 %v1967
  %v1978 = vpop.f32.mrf.mxu0
  %v1979 = vadd.f32 0.0, %v1978
  %v1980 = vpop.f32.mrf.mxu0
  %1981 = vdwg.mxu0
  %v1982 = vpack.c.bf16 %v1979, %v1979
  %s1983 = scalar_lea.vmem %s8, 160
  %v1984 = vld [vmem:[%s1983] sm:$0xf]
  %v1985 = vld [vmem:[%s1983 + $0x4] sm:$0xf]
  %v1986 = vld [vmem:[%s1983 + $0x8] sm:$0xf]
  %v1987 = vld [vmem:[%s1983 + $0xc] sm:$0xf]
  %v1988 = vld [vmem:[%s1983 + $0x10] sm:$0xf]
  %v1989 = vld [vmem:[%s1983 + $0x14] sm:$0xf]
  %v1990 = vld [vmem:[%s1983 + $0x18] sm:$0xf]
  %v1991 = vld [vmem:[%s1983 + $0x1c] sm:$0xf]
  %v2000 = vunpack.c.l.b16 %v1984
  %v2001 = vunpack.c.l.b16 %v1985
  %v2002 = vunpack.c.l.b16 %v1986
  %v2003 = vunpack.c.l.b16 %v1987
  %v2004 = vunpack.c.l.b16 %v1988
  %v2005 = vunpack.c.l.b16 %v1989
  %v2006 = vunpack.c.l.b16 %v1990
  %v2007 = vunpack.c.l.b16 %v1991
  %v2008 = vpack.c.b16 %v2001, %v2000
  %v2009 = vpack.c.b16 %v2003, %v2002
  %v2010 = vpack.c.b16 %v2005, %v2004
  %v2011 = vpack.c.b16 %v2007, %v2006
  %v2017 = vsel %vm119, %v1982, 0
  %2019 = vmatpush.bf16.msra.mxu0 0
  %2020 = vmatpush.bf16.msra.mxu0 0
  %2021 = vmatpush.bf16.msra.mxu0 0
  %2022 = vmatpush.bf16.msra.mxu0 0
  %2023 = vmatpush.bf16.msra.mxu0 %v2011
  %2024 = vmatpush.bf16.msra.mxu0 %v2010
  %2025 = vmatpush.bf16.msra.mxu0 %v2009
  %2026 = vmatpush.bf16.msra.mxu0 %v2008
  %2027 = vmatmul.bf16.gmra.mxu0 %v2017
  %v2028 = vpop.f32.mrf.mxu0
  %v2029 = vadd.f32 0.0, %v2028
  %v2030 = vpop.f32.mrf.mxu0
  %2031 = vdwg.mxu0
  %v2032 = vadd.f32 %v1963, %v2029
  %s2033 = scalar_lea.vmem %s7, 6
  %v2034 = vld [vmem:[%s2033] sm:$0x1]
  %v2036 = vsel %vm1614, %v2034, 0
  %2038 = vmatpush.bf16.msra.mxu0 0
  %2039 = vmatpush.bf16.msra.mxu0 0
  %2040 = vmatpush.bf16.msra.mxu0 0
  %2041 = vmatpush.bf16.msra.mxu0 0
  %2042 = vmatpush.bf16.msra.mxu0 0
  %2043 = vmatpush.bf16.msra.mxu0 0
  %2044 = vmatpush.bf16.msra.mxu0 0
  %2045 = vmatpush.bf16.msra.mxu0 %v1623
  %2046 = vmatmul.bf16.gmra.mxu0 %v2036
  %v2047 = vpop.f32.mrf.mxu0
  %v2048 = vadd.f32 0.0, %v2047
  %v2049 = vpop.f32.mrf.mxu0
  %2050 = vdwg.mxu0
  %v2051 = vpack.c.bf16 %v2048, %v2048
  %s2052 = scalar_lea.vmem %s8, 192
  %v2053 = vld [vmem:[%s2052] sm:$0xf]
  %v2054 = vld [vmem:[%s2052 + $0x4] sm:$0xf]
  %v2055 = vld [vmem:[%s2052 + $0x8] sm:$0xf]
  %v2056 = vld [vmem:[%s2052 + $0xc] sm:$0xf]
  %v2057 = vld [vmem:[%s2052 + $0x10] sm:$0xf]
  %v2058 = vld [vmem:[%s2052 + $0x14] sm:$0xf]
  %v2059 = vld [vmem:[%s2052 + $0x18] sm:$0xf]
  %v2060 = vld [vmem:[%s2052 + $0x1c] sm:$0xf]
  %v2069 = vunpack.c.l.b16 %v2053
  %v2070 = vunpack.c.l.b16 %v2054
  %v2071 = vunpack.c.l.b16 %v2055
  %v2072 = vunpack.c.l.b16 %v2056
  %v2073 = vunpack.c.l.b16 %v2057
  %v2074 = vunpack.c.l.b16 %v2058
  %v2075 = vunpack.c.l.b16 %v2059
  %v2076 = vunpack.c.l.b16 %v2060
  %v2077 = vpack.c.b16 %v2070, %v2069
  %v2078 = vpack.c.b16 %v2072, %v2071
  %v2079 = vpack.c.b16 %v2074, %v2073
  %v2080 = vpack.c.b16 %v2076, %v2075
  %v2086 = vsel %vm119, %v2051, 0
  %2088 = vmatpush.bf16.msra.mxu0 0
  %2089 = vmatpush.bf16.msra.mxu0 0
  %2090 = vmatpush.bf16.msra.mxu0 0
  %2091 = vmatpush.bf16.msra.mxu0 0
  %2092 = vmatpush.bf16.msra.mxu0 %v2080
  %2093 = vmatpush.bf16.msra.mxu0 %v2079
  %2094 = vmatpush.bf16.msra.mxu0 %v2078
  %2095 = vmatpush.bf16.msra.mxu0 %v2077
  %2096 = vmatmul.bf16.gmra.mxu0 %v2086
  %v2097 = vpop.f32.mrf.mxu0
  %v2098 = vadd.f32 0.0, %v2097
  %v2099 = vpop.f32.mrf.mxu0
  %2100 = vdwg.mxu0
  %v2101 = vadd.f32 %v2032, %v2098
  %s2102 = scalar_lea.vmem %s7, 7
  %v2103 = vld [vmem:[%s2102] sm:$0x1]
  %v2105 = vsel %vm1614, %v2103, 0
  %2107 = vmatpush.bf16.msra.mxu0 0
  %2108 = vmatpush.bf16.msra.mxu0 0
  %2109 = vmatpush.bf16.msra.mxu0 0
  %2110 = vmatpush.bf16.msra.mxu0 0
  %2111 = vmatpush.bf16.msra.mxu0 0
  %2112 = vmatpush.bf16.msra.mxu0 0
  %2113 = vmatpush.bf16.msra.mxu0 0
  %2114 = vmatpush.bf16.msra.mxu0 %v1623
  %2115 = vmatmul.bf16.gmra.mxu0 %v2105
  %v2116 = vpop.f32.mrf.mxu0
  %v2117 = vadd.f32 0.0, %v2116
  %v2118 = vpop.f32.mrf.mxu0
  %2119 = vdwg.mxu0
  %v2120 = vpack.c.bf16 %v2117, %v2117
  %s2121 = scalar_lea.vmem %s8, 224
  %v2122 = vld [vmem:[%s2121] sm:$0xf]
  %v2123 = vld [vmem:[%s2121 + $0x4] sm:$0xf]
  %v2124 = vld [vmem:[%s2121 + $0x8] sm:$0xf]
  %v2125 = vld [vmem:[%s2121 + $0xc] sm:$0xf]
  %v2126 = vld [vmem:[%s2121 + $0x10] sm:$0xf]
  %v2127 = vld [vmem:[%s2121 + $0x14] sm:$0xf]
  %v2128 = vld [vmem:[%s2121 + $0x18] sm:$0xf]
  %v2129 = vld [vmem:[%s2121 + $0x1c] sm:$0xf]
  %v2138 = vunpack.c.l.b16 %v2122
  %v2139 = vunpack.c.l.b16 %v2123
  %v2140 = vunpack.c.l.b16 %v2124
  %v2141 = vunpack.c.l.b16 %v2125
  %v2142 = vunpack.c.l.b16 %v2126
  %v2143 = vunpack.c.l.b16 %v2127
  %v2144 = vunpack.c.l.b16 %v2128
  %v2145 = vunpack.c.l.b16 %v2129
  %v2146 = vpack.c.b16 %v2139, %v2138
  %v2147 = vpack.c.b16 %v2141, %v2140
  %v2148 = vpack.c.b16 %v2143, %v2142
  %v2149 = vpack.c.b16 %v2145, %v2144
  %v2155 = vsel %vm119, %v2120, 0
  %2157 = vmatpush.bf16.msra.mxu0 0
  %2158 = vmatpush.bf16.msra.mxu0 0
  %2159 = vmatpush.bf16.msra.mxu0 0
  %2160 = vmatpush.bf16.msra.mxu0 0
  %2161 = vmatpush.bf16.msra.mxu0 %v2149
  %2162 = vmatpush.bf16.msra.mxu0 %v2148
  %2163 = vmatpush.bf16.msra.mxu0 %v2147
  %2164 = vmatpush.bf16.msra.mxu0 %v2146
  %2165 = vmatmul.bf16.gmra.mxu0 %v2155
  %v2166 = vpop.f32.mrf.mxu0
  %v2167 = vadd.f32 0.0, %v2166
  %v2168 = vpop.f32.mrf.mxu0
  %2169 = vdwg.mxu0
  %v2170 = vadd.f32 %v2101, %v2167
  %s2171 = scalar_lea.vmem %s7, 8
  %v2172 = vld [vmem:[%s2171] sm:$0x1]
  %v2174 = vsel %vm1614, %v2172, 0
  %2176 = vmatpush.bf16.msra.mxu0 0
  %2177 = vmatpush.bf16.msra.mxu0 0
  %2178 = vmatpush.bf16.msra.mxu0 0
  %2179 = vmatpush.bf16.msra.mxu0 0
  %2180 = vmatpush.bf16.msra.mxu0 0
  %2181 = vmatpush.bf16.msra.mxu0 0
  %2182 = vmatpush.bf16.msra.mxu0 0
  %2183 = vmatpush.bf16.msra.mxu0 %v1623
  %2184 = vmatmul.bf16.gmra.mxu0 %v2174
  %v2185 = vpop.f32.mrf.mxu0
  %v2186 = vadd.f32 0.0, %v2185
  %v2187 = vpop.f32.mrf.mxu0
  %2188 = vdwg.mxu0
  %v2189 = vpack.c.bf16 %v2186, %v2186
  %s2190 = scalar_lea.vmem %s8, 256
  %v2191 = vld [vmem:[%s2190] sm:$0xf]
  %v2192 = vld [vmem:[%s2190 + $0x4] sm:$0xf]
  %v2193 = vld [vmem:[%s2190 + $0x8] sm:$0xf]
  %v2194 = vld [vmem:[%s2190 + $0xc] sm:$0xf]
  %v2195 = vld [vmem:[%s2190 + $0x10] sm:$0xf]
  %v2196 = vld [vmem:[%s2190 + $0x14] sm:$0xf]
  %v2197 = vld [vmem:[%s2190 + $0x18] sm:$0xf]
  %v2198 = vld [vmem:[%s2190 + $0x1c] sm:$0xf]
  %v2207 = vunpack.c.l.b16 %v2191
  %v2208 = vunpack.c.l.b16 %v2192
  %v2209 = vunpack.c.l.b16 %v2193
  %v2210 = vunpack.c.l.b16 %v2194
  %v2211 = vunpack.c.l.b16 %v2195
  %v2212 = vunpack.c.l.b16 %v2196
  %v2213 = vunpack.c.l.b16 %v2197
  %v2214 = vunpack.c.l.b16 %v2198
  %v2215 = vpack.c.b16 %v2208, %v2207
  %v2216 = vpack.c.b16 %v2210, %v2209
  %v2217 = vpack.c.b16 %v2212, %v2211
  %v2218 = vpack.c.b16 %v2214, %v2213
  %v2224 = vsel %vm119, %v2189, 0
  %2226 = vmatpush.bf16.msra.mxu0 0
  %2227 = vmatpush.bf16.msra.mxu0 0
  %2228 = vmatpush.bf16.msra.mxu0 0
  %2229 = vmatpush.bf16.msra.mxu0 0
  %2230 = vmatpush.bf16.msra.mxu0 %v2218
  %2231 = vmatpush.bf16.msra.mxu0 %v2217
  %2232 = vmatpush.bf16.msra.mxu0 %v2216
  %2233 = vmatpush.bf16.msra.mxu0 %v2215
  %2234 = vmatmul.bf16.gmra.mxu0 %v2224
  %v2235 = vpop.f32.mrf.mxu0
  %v2236 = vadd.f32 0.0, %v2235
  %v2237 = vpop.f32.mrf.mxu0
  %2238 = vdwg.mxu0
  %v2239 = vadd.f32 %v2170, %v2236
  %v2240 = vmax.f32 %v2239, 0.0
  %v2241 = vpack.c.bf16 %v2240, %v2240
  %s2242 = scalar_lea.vmem %s0, 44
  %v2243 = vld [vmem:[%s2242] sm:$0xf]
  %v2244 = vld [vmem:[%s2242 + $0x4] sm:$0xf]
  %v2245 = vld [vmem:[%s2242 + $0x8] sm:$0xf]
  %v2246 = vld [vmem:[%s2242 + $0xc] sm:$0xf]
  %v2247 = vld [vmem:[%s2242 + $0x10] sm:$0xf]
  %v2248 = vld [vmem:[%s2242 + $0x14] sm:$0xf]
  %v2249 = vld [vmem:[%s2242 + $0x18] sm:$0xf]
  %v2250 = vld [vmem:[%s2242 + $0x1c] sm:$0xf]
  %v2251 = vld [vmem:[%s2242 + $0x20] sm:$0xf]
  %v2252 = vld [vmem:[%s2242 + $0x24] sm:$0xf]
  %v2253 = vld [vmem:[%s2242 + $0x28] sm:$0x1]
  %v2265 = vunpack.c.l.b16 %v2243
  %v2266 = vunpack.c.l.b16 %v2244
  %v2267 = vunpack.c.l.b16 %v2245
  %v2268 = vunpack.c.l.b16 %v2246
  %v2269 = vunpack.c.l.b16 %v2247
  %v2270 = vunpack.c.l.b16 %v2248
  %v2271 = vunpack.c.l.b16 %v2249
  %v2272 = vunpack.c.l.b16 %v2250
  %v2273 = vunpack.c.l.b16 %v2251
  %v2274 = vunpack.c.l.b16 %v2252
  %v2275 = vunpack.c.l.b16 %v2253
  %v2276 = vpack.c.b16 %v2266, %v2265
  %v2277 = vpack.c.b16 %v2268, %v2267
  %v2278 = vpack.c.b16 %v2270, %v2269
  %v2279 = vpack.c.b16 %v2272, %v2271
  %v2280 = vpack.c.b16 %v2274, %v2273
  %v2281 = vpack.c.b16 %v2275, %v2275
  %v2283 = vsel %vm119, %v2276, 0
  %v2286 = vsel %vm119, %v2277, 0
  %v2289 = vsel %vm119, %v2278, 0
  %v2292 = vsel %vm119, %v2279, 0
  %v2295 = vsel %vm119, %v2280, 0
  %v2298 = vsel %vm119, %v2281, 0
  %2300 = vmatpush.bf16.msra.mxu0 0
  %2301 = vmatpush.bf16.msra.mxu0 0
  %2302 = vmatpush.bf16.msra.mxu0 0
  %2303 = vmatpush.bf16.msra.mxu0 0
  %2304 = vmatpush.bf16.msra.mxu0 %v114
  %2305 = vmatpush.bf16.msra.mxu0 %v113
  %2306 = vmatpush.bf16.msra.mxu0 %v112
  %2307 = vmatpush.bf16.msra.mxu0 %v111
  %2308 = vmatmul.bf16.gmra.mxu0 %v2283
  %v2309 = vpop.f32.mrf.mxu0
  %v2310 = vadd.f32 0.0, %v2309
  %v2311 = vpop.f32.mrf.mxu0
  %v2312 = vadd.f32 0.0, %v2311
  %2313 = vmatmul.bf16.gmra.mxu0 %v2286
  %v2314 = vpop.f32.mrf.mxu0
  %v2315 = vadd.f32 0.0, %v2314
  %v2316 = vpop.f32.mrf.mxu0
  %v2317 = vadd.f32 0.0, %v2316
  %2318 = vmatmul.bf16.gmra.mxu0 %v2289
  %v2319 = vpop.f32.mrf.mxu0
  %v2320 = vadd.f32 0.0, %v2319
  %v2321 = vpop.f32.mrf.mxu0
  %v2322 = vadd.f32 0.0, %v2321
  %2323 = vmatmul.bf16.gmra.mxu0 %v2292
  %v2324 = vpop.f32.mrf.mxu0
  %v2325 = vadd.f32 0.0, %v2324
  %v2326 = vpop.f32.mrf.mxu0
  %v2327 = vadd.f32 0.0, %v2326
  %2328 = vmatmul.bf16.gmra.mxu0 %v2295
  %v2329 = vpop.f32.mrf.mxu0
  %v2330 = vadd.f32 0.0, %v2329
  %v2331 = vpop.f32.mrf.mxu0
  %v2332 = vadd.f32 0.0, %v2331
  %2333 = vmatmul.bf16.gmra.mxu0 %v2298
  %v2334 = vpop.f32.mrf.mxu0
  %v2335 = vadd.f32 0.0, %v2334
  %v2336 = vpop.f32.mrf.mxu0
  %2337 = vdwg.mxu0
  %v2338 = vpack.c.bf16 %v2310, %v2310
  %v2339 = vpack.c.bf16 %v2312, %v2312
  %v2340 = vpack.c.bf16 %v2315, %v2315
  %v2341 = vpack.c.bf16 %v2317, %v2317
  %v2342 = vpack.c.bf16 %v2320, %v2320
  %v2343 = vpack.c.bf16 %v2322, %v2322
  %v2344 = vpack.c.bf16 %v2325, %v2325
  %v2345 = vpack.c.bf16 %v2327, %v2327
  %v2346 = vpack.c.bf16 %v2330, %v2330
  %v2347 = vpack.c.bf16 %v2332, %v2332
  %v2348 = vpack.c.bf16 %v2335, %v2335
  %v2360 = vunpack.c.l.b16 %v2338
  %v2361 = vunpack.c.l.b16 %v2339
  %v2362 = vunpack.c.l.b16 %v2340
  %v2363 = vunpack.c.l.b16 %v2341
  %v2364 = vunpack.c.l.b16 %v2342
  %v2365 = vunpack.c.l.b16 %v2343
  %v2366 = vunpack.c.l.b16 %v2344
  %v2367 = vunpack.c.l.b16 %v2345
  %v2368 = vunpack.c.l.b16 %v2346
  %v2369 = vunpack.c.l.b16 %v2347
  %v2370 = vunpack.c.l.b16 %v2348
  %v2371 = vpack.c.b16 %v2361, %v2360
  %v2372 = vpack.c.b16 %v2363, %v2362
  %v2373 = vpack.c.b16 %v2365, %v2364
  %v2374 = vpack.c.b16 %v2367, %v2366
  %v2375 = vpack.c.b16 %v2369, %v2368
  %v2376 = vpack.c.b16 %v2370, %v2370
  %v2383 = vand.u32 %v2376, %v264
  %2385 = vmatpush.bf16.msra.mxu0 0
  %2386 = vmatpush.bf16.msra.mxu0 0
  %2387 = vmatpush.bf16.msra.mxu0 %v2383
  %2388 = vmatpush.bf16.msra.mxu0 %v2375
  %2389 = vmatpush.bf16.msra.mxu0 %v2374
  %2390 = vmatpush.bf16.msra.mxu0 %v2373
  %2391 = vmatpush.bf16.msra.mxu0 %v2372
  %2392 = vmatpush.bf16.msra.mxu0 %v2371
  %2393 = vmatmul.bf16.gmra.mxu0 %v251
  %v2394 = vpop.f32.mrf.mxu0
  %v2395 = vadd.f32 0.0, %v2394
  %v2396 = vpop.f32.mrf.mxu0
  %v2397 = vadd.f32 0.0, %v2396
  %2398 = vmatmul.bf16.gmra.mxu0 %v254
  %v2399 = vpop.f32.mrf.mxu0
  %v2400 = vadd.f32 0.0, %v2399
  %v2401 = vpop.f32.mrf.mxu0
  %v2402 = vadd.f32 0.0, %v2401
  %2403 = vmatmul.bf16.gmra.mxu0 %v257
  %v2404 = vpop.f32.mrf.mxu0
  %v2405 = vadd.f32 0.0, %v2404
  %v2406 = vpop.f32.mrf.mxu0
  %v2407 = vadd.f32 0.0, %v2406
  %2408 = vmatmul.bf16.gmra.mxu0 %v260
  %v2409 = vpop.f32.mrf.mxu0
  %v2410 = vadd.f32 0.0, %v2409
  %v2411 = vpop.f32.mrf.mxu0
  %v2412 = vadd.f32 0.0, %v2411
  %2413 = vdwg.mxu0
  %v2414 = vadd.f32 %v298, %v2395
  %v2415 = vadd.f32 %v298, %v2397
  %v2416 = vadd.f32 %v298, %v2400
  %v2417 = vadd.f32 %v298, %v2402
  %v2418 = vadd.f32 %v298, %v2405
  %v2419 = vadd.f32 %v298, %v2407
  %v2420 = vadd.f32 %v298, %v2410
  %v2421 = vadd.f32 %v298, %v2412
  %2422 = vrot.lane.b32.xlu0 %v2371, 96
  %v2423 = vpop.permute.xlu0 %2422
  %2424 = vrot.lane.b32.xlu0 %v2372, 96
  %v2425 = vpop.permute.xlu0 %2424
  %2426 = vrot.lane.b32.xlu0 %v2373, 96
  %v2427 = vpop.permute.xlu0 %2426
  %2428 = vrot.lane.b32.xlu0 %v2374, 96
  %v2429 = vpop.permute.xlu0 %2428
  %2430 = vrot.lane.b32.xlu0 %v2375, 96
  %v2431 = vpop.permute.xlu0 %2430
  %2432 = vrot.lane.b32.xlu0 %v2376, 96
  %v2433 = vpop.permute.xlu0 %2432
  %v2440 = vand.u32 %v2433, %v264
  %2442 = vmatpush.bf16.msra.mxu0 0
  %2443 = vmatpush.bf16.msra.mxu0 0
  %2444 = vmatpush.bf16.msra.mxu0 %v2440
  %2445 = vmatpush.bf16.msra.mxu0 %v2431
  %2446 = vmatpush.bf16.msra.mxu0 %v2429
  %2447 = vmatpush.bf16.msra.mxu0 %v2427
  %2448 = vmatpush.bf16.msra.mxu0 %v2425
  %2449 = vmatpush.bf16.msra.mxu0 %v2423
  %2450 = vmatmul.bf16.gmra.mxu0 %v355
  %v2451 = vpop.f32.mrf.mxu0
  %v2452 = vadd.f32 0.0, %v2451
  %v2453 = vpop.f32.mrf.mxu0
  %v2454 = vadd.f32 0.0, %v2453
  %2455 = vmatmul.bf16.gmra.mxu0 %v358
  %v2456 = vpop.f32.mrf.mxu0
  %v2457 = vadd.f32 0.0, %v2456
  %v2458 = vpop.f32.mrf.mxu0
  %v2459 = vadd.f32 0.0, %v2458
  %2460 = vmatmul.bf16.gmra.mxu0 %v361
  %v2461 = vpop.f32.mrf.mxu0
  %v2462 = vadd.f32 0.0, %v2461
  %v2463 = vpop.f32.mrf.mxu0
  %v2464 = vadd.f32 0.0, %v2463
  %2465 = vmatmul.bf16.gmra.mxu0 %v364
  %v2466 = vpop.f32.mrf.mxu0
  %v2467 = vadd.f32 0.0, %v2466
  %v2468 = vpop.f32.mrf.mxu0
  %v2469 = vadd.f32 0.0, %v2468
  %2470 = vdwg.mxu0
  %v2471 = vadd.f32 %v2414, %v2452
  %v2472 = vadd.f32 %v2415, %v2454
  %v2473 = vadd.f32 %v2416, %v2457
  %v2474 = vadd.f32 %v2417, %v2459
  %v2475 = vadd.f32 %v2418, %v2462
  %v2476 = vadd.f32 %v2419, %v2464
  %v2477 = vadd.f32 %v2420, %v2467
  %v2478 = vadd.f32 %v2421, %v2469
  %2479 = vrot.lane.b32.xlu0 %v2371, 64
  %v2480 = vpop.permute.xlu0 %2479
  %2481 = vrot.lane.b32.xlu0 %v2372, 64
  %v2482 = vpop.permute.xlu0 %2481
  %2483 = vrot.lane.b32.xlu0 %v2373, 64
  %v2484 = vpop.permute.xlu0 %2483
  %2485 = vrot.lane.b32.xlu0 %v2374, 64
  %v2486 = vpop.permute.xlu0 %2485
  %2487 = vrot.lane.b32.xlu0 %v2375, 64
  %v2488 = vpop.permute.xlu0 %2487
  %2489 = vrot.lane.b32.xlu0 %v2376, 64
  %v2490 = vpop.permute.xlu0 %2489
  %v2497 = vand.u32 %v2490, %v264
  %2499 = vmatpush.bf16.msra.mxu0 0
  %2500 = vmatpush.bf16.msra.mxu0 0
  %2501 = vmatpush.bf16.msra.mxu0 %v2497
  %2502 = vmatpush.bf16.msra.mxu0 %v2488
  %2503 = vmatpush.bf16.msra.mxu0 %v2486
  %2504 = vmatpush.bf16.msra.mxu0 %v2484
  %2505 = vmatpush.bf16.msra.mxu0 %v2482
  %2506 = vmatpush.bf16.msra.mxu0 %v2480
  %2507 = vmatmul.bf16.gmra.mxu0 %v453
  %v2508 = vpop.f32.mrf.mxu0
  %v2509 = vadd.f32 0.0, %v2508
  %v2510 = vpop.f32.mrf.mxu0
  %v2511 = vadd.f32 0.0, %v2510
  %2512 = vmatmul.bf16.gmra.mxu0 %v456
  %v2513 = vpop.f32.mrf.mxu0
  %v2514 = vadd.f32 0.0, %v2513
  %v2515 = vpop.f32.mrf.mxu0
  %v2516 = vadd.f32 0.0, %v2515
  %2517 = vmatmul.bf16.gmra.mxu0 %v459
  %v2518 = vpop.f32.mrf.mxu0
  %v2519 = vadd.f32 0.0, %v2518
  %v2520 = vpop.f32.mrf.mxu0
  %v2521 = vadd.f32 0.0, %v2520
  %2522 = vmatmul.bf16.gmra.mxu0 %v462
  %v2523 = vpop.f32.mrf.mxu0
  %v2524 = vadd.f32 0.0, %v2523
  %v2525 = vpop.f32.mrf.mxu0
  %v2526 = vadd.f32 0.0, %v2525
  %2527 = vdwg.mxu0
  %v2528 = vadd.f32 %v2471, %v2509
  %v2529 = vadd.f32 %v2472, %v2511
  %v2530 = vadd.f32 %v2473, %v2514
  %v2531 = vadd.f32 %v2474, %v2516
  %v2532 = vadd.f32 %v2475, %v2519
  %v2533 = vadd.f32 %v2476, %v2521
  %v2534 = vadd.f32 %v2477, %v2524
  %v2535 = vadd.f32 %v2478, %v2526
  %2536 = vrot.lane.b32.xlu0 %v2371, 32
  %v2537 = vpop.permute.xlu0 %2536
  %2538 = vrot.lane.b32.xlu0 %v2372, 32
  %v2539 = vpop.permute.xlu0 %2538
  %2540 = vrot.lane.b32.xlu0 %v2373, 32
  %v2541 = vpop.permute.xlu0 %2540
  %2542 = vrot.lane.b32.xlu0 %v2374, 32
  %v2543 = vpop.permute.xlu0 %2542
  %2544 = vrot.lane.b32.xlu0 %v2375, 32
  %v2545 = vpop.permute.xlu0 %2544
  %2546 = vrot.lane.b32.xlu0 %v2376, 32
  %v2547 = vpop.permute.xlu0 %2546
  %v2554 = vand.u32 %v2547, %v264
  %2556 = vmatpush.bf16.msra.mxu0 0
  %2557 = vmatpush.bf16.msra.mxu0 0
  %2558 = vmatpush.bf16.msra.mxu0 %v2554
  %2559 = vmatpush.bf16.msra.mxu0 %v2545
  %2560 = vmatpush.bf16.msra.mxu0 %v2543
  %2561 = vmatpush.bf16.msra.mxu0 %v2541
  %2562 = vmatpush.bf16.msra.mxu0 %v2539
  %2563 = vmatpush.bf16.msra.mxu0 %v2537
  %2564 = vmatmul.bf16.gmra.mxu0 %v551
  %v2565 = vpop.f32.mrf.mxu0
  %v2566 = vadd.f32 0.0, %v2565
  %v2567 = vpop.f32.mrf.mxu0
  %v2568 = vadd.f32 0.0, %v2567
  %2569 = vmatmul.bf16.gmra.mxu0 %v554
  %v2570 = vpop.f32.mrf.mxu0
  %v2571 = vadd.f32 0.0, %v2570
  %v2572 = vpop.f32.mrf.mxu0
  %v2573 = vadd.f32 0.0, %v2572
  %2574 = vmatmul.bf16.gmra.mxu0 %v557
  %v2575 = vpop.f32.mrf.mxu0
  %v2576 = vadd.f32 0.0, %v2575
  %v2577 = vpop.f32.mrf.mxu0
  %v2578 = vadd.f32 0.0, %v2577
  %2579 = vmatmul.bf16.gmra.mxu0 %v560
  %v2580 = vpop.f32.mrf.mxu0
  %v2581 = vadd.f32 0.0, %v2580
  %v2582 = vpop.f32.mrf.mxu0
  %v2583 = vadd.f32 0.0, %v2582
  %2584 = vdwg.mxu0
  %v2585 = vadd.f32 %v2528, %v2566
  %v2586 = vadd.f32 %v2529, %v2568
  %v2587 = vadd.f32 %v2530, %v2571
  %v2588 = vadd.f32 %v2531, %v2573
  %v2589 = vadd.f32 %v2532, %v2576
  %v2590 = vadd.f32 %v2533, %v2578
  %v2591 = vadd.f32 %v2534, %v2581
  %v2592 = vadd.f32 %v2535, %v2583
  %v2593 = vmax.f32 %v2585, 0.0
  %v2594 = vmax.f32 %v2586, 0.0
  %v2595 = vmax.f32 %v2587, 0.0
  %v2596 = vmax.f32 %v2588, 0.0
  %v2597 = vmax.f32 %v2589, 0.0
  %v2598 = vmax.f32 %v2590, 0.0
  %v2599 = vmax.f32 %v2591, 0.0
  %v2600 = vmax.f32 %v2592, 0.0
  %v2601 = vpack.c.bf16 %v2594, %v2593
  %v2602 = vpack.c.bf16 %v2596, %v2595
  %v2603 = vpack.c.bf16 %v2598, %v2597
  %v2604 = vpack.c.bf16 %v2600, %v2599
  %2605 = vmatpush.bf16.msra.mxu0 0
  %2606 = vmatpush.bf16.msra.mxu0 0
  %2607 = vmatpush.bf16.msra.mxu0 0
  %2608 = vmatpush.bf16.msra.mxu0 0
  %2609 = vmatpush.bf16.msra.mxu0 %v2604
  %2610 = vmatpush.bf16.msra.mxu0 %v2603
  %2611 = vmatpush.bf16.msra.mxu0 %v2602
  %2612 = vmatpush.bf16.msra.mxu0 %v2601
  %2613 = vmatmul.bf16.gmra.mxu0 %v623
  %v2614 = vpop.f32.mrf.mxu0
  %v2615 = vadd.f32 0.0, %v2614
  %v2616 = vpop.f32.mrf.mxu0
  %v2617 = vadd.f32 0.0, %v2616
  %2618 = vdwg.mxu0
  %v2619 = vpack.c.bf16 %v2617, %v2615
  %v2621 = vsel %vm656, %v2619, 0
  %2623 = vmatpush.bf16.msra.mxu0 0
  %2624 = vmatpush.bf16.msra.mxu0 0
  %2625 = vmatpush.bf16.msra.mxu0 0
  %2626 = vmatpush.bf16.msra.mxu0 0
  %2627 = vmatpush.bf16.msra.mxu0 0
  %2628 = vmatpush.bf16.msra.mxu0 0
  %2629 = vmatpush.bf16.msra.mxu0 %v653
  %2630 = vmatpush.bf16.msra.mxu0 %v652
  %2631 = vmatmul.bf16.gmra.mxu0 %v2621
  %v2632 = vpop.f32.mrf.mxu0
  %v2633 = vadd.f32 0.0, %v2632
  %v2634 = vpop.f32.mrf.mxu0
  %v2635 = vadd.f32 0.0, %v2634
  %2636 = vdwg.mxu0
  %v2637 = vadd.f32 %v675, %v2633
  %v2638 = vadd.f32 %v675, %v2635
  %2639 = vmatpush.bf16.msra.mxu0 0
  %2640 = vmatpush.bf16.msra.mxu0 0
  %2641 = vmatpush.bf16.msra.mxu0 0
  %2642 = vmatpush.bf16.msra.mxu0 0
  %2643 = vmatpush.bf16.msra.mxu0 %v2604
  %2644 = vmatpush.bf16.msra.mxu0 %v2603
  %2645 = vmatpush.bf16.msra.mxu0 %v2602
  %2646 = vmatpush.bf16.msra.mxu0 %v2601
  %2647 = vmatmul.bf16.gmra.mxu0 %v688
  %v2648 = vpop.f32.mrf.mxu0
  %v2649 = vadd.f32 0.0, %v2648
  %v2650 = vpop.f32.mrf.mxu0
  %v2651 = vadd.f32 0.0, %v2650
  %2652 = vdwg.mxu0
  %v2653 = vpack.c.bf16 %v2651, %v2649
  %v2655 = vsel %vm656, %v2653, 0
  %2657 = vmatpush.bf16.msra.mxu0 0
  %2658 = vmatpush.bf16.msra.mxu0 0
  %2659 = vmatpush.bf16.msra.mxu0 0
  %2660 = vmatpush.bf16.msra.mxu0 0
  %2661 = vmatpush.bf16.msra.mxu0 0
  %2662 = vmatpush.bf16.msra.mxu0 0
  %2663 = vmatpush.bf16.msra.mxu0 %v719
  %2664 = vmatpush.bf16.msra.mxu0 %v718
  %2665 = vmatmul.bf16.gmra.mxu0 %v2655
  %v2666 = vpop.f32.mrf.mxu0
  %v2667 = vadd.f32 0.0, %v2666
  %v2668 = vpop.f32.mrf.mxu0
  %v2669 = vadd.f32 0.0, %v2668
  %2670 = vdwg.mxu0
  %v2671 = vadd.f32 %v2637, %v2667
  %v2672 = vadd.f32 %v2638, %v2669
  %2673 = vmatpush.bf16.msra.mxu0 0
  %2674 = vmatpush.bf16.msra.mxu0 0
  %2675 = vmatpush.bf16.msra.mxu0 0
  %2676 = vmatpush.bf16.msra.mxu0 0
  %2677 = vmatpush.bf16.msra.mxu0 %v2604
  %2678 = vmatpush.bf16.msra.mxu0 %v2603
  %2679 = vmatpush.bf16.msra.mxu0 %v2602
  %2680 = vmatpush.bf16.msra.mxu0 %v2601
  %2681 = vmatmul.bf16.gmra.mxu0 %v750
  %v2682 = vpop.f32.mrf.mxu0
  %v2683 = vadd.f32 0.0, %v2682
  %v2684 = vpop.f32.mrf.mxu0
  %v2685 = vadd.f32 0.0, %v2684
  %2686 = vdwg.mxu0
  %v2687 = vpack.c.bf16 %v2685, %v2683
  %v2689 = vsel %vm656, %v2687, 0
  %2691 = vmatpush.bf16.msra.mxu0 0
  %2692 = vmatpush.bf16.msra.mxu0 0
  %2693 = vmatpush.bf16.msra.mxu0 0
  %2694 = vmatpush.bf16.msra.mxu0 0
  %2695 = vmatpush.bf16.msra.mxu0 0
  %2696 = vmatpush.bf16.msra.mxu0 0
  %2697 = vmatpush.bf16.msra.mxu0 %v781
  %2698 = vmatpush.bf16.msra.mxu0 %v780
  %2699 = vmatmul.bf16.gmra.mxu0 %v2689
  %v2700 = vpop.f32.mrf.mxu0
  %v2701 = vadd.f32 0.0, %v2700
  %v2702 = vpop.f32.mrf.mxu0
  %v2703 = vadd.f32 0.0, %v2702
  %2704 = vdwg.mxu0
  %v2705 = vadd.f32 %v2671, %v2701
  %v2706 = vadd.f32 %v2672, %v2703
  %2707 = vmatpush.bf16.msra.mxu0 0
  %2708 = vmatpush.bf16.msra.mxu0 0
  %2709 = vmatpush.bf16.msra.mxu0 0
  %2710 = vmatpush.bf16.msra.mxu0 0
  %2711 = vmatpush.bf16.msra.mxu0 %v2604
  %2712 = vmatpush.bf16.msra.mxu0 %v2603
  %2713 = vmatpush.bf16.msra.mxu0 %v2602
  %2714 = vmatpush.bf16.msra.mxu0 %v2601
  %2715 = vmatmul.bf16.gmra.mxu0 %v812
  %v2716 = vpop.f32.mrf.mxu0
  %v2717 = vadd.f32 0.0, %v2716
  %v2718 = vpop.f32.mrf.mxu0
  %v2719 = vadd.f32 0.0, %v2718
  %2720 = vdwg.mxu0
  %v2721 = vpack.c.bf16 %v2719, %v2717
  %v2723 = vsel %vm656, %v2721, 0
  %2725 = vmatpush.bf16.msra.mxu0 0
  %2726 = vmatpush.bf16.msra.mxu0 0
  %2727 = vmatpush.bf16.msra.mxu0 0
  %2728 = vmatpush.bf16.msra.mxu0 0
  %2729 = vmatpush.bf16.msra.mxu0 0
  %2730 = vmatpush.bf16.msra.mxu0 0
  %2731 = vmatpush.bf16.msra.mxu0 %v843
  %2732 = vmatpush.bf16.msra.mxu0 %v842
  %2733 = vmatmul.bf16.gmra.mxu0 %v2723
  %v2734 = vpop.f32.mrf.mxu0
  %v2735 = vadd.f32 0.0, %v2734
  %v2736 = vpop.f32.mrf.mxu0
  %v2737 = vadd.f32 0.0, %v2736
  %2738 = vdwg.mxu0
  %v2739 = vadd.f32 %v2705, %v2735
  %v2740 = vadd.f32 %v2706, %v2737
  %2741 = vmatpush.bf16.msra.mxu0 0
  %2742 = vmatpush.bf16.msra.mxu0 0
  %2743 = vmatpush.bf16.msra.mxu0 0
  %2744 = vmatpush.bf16.msra.mxu0 0
  %2745 = vmatpush.bf16.msra.mxu0 %v2604
  %2746 = vmatpush.bf16.msra.mxu0 %v2603
  %2747 = vmatpush.bf16.msra.mxu0 %v2602
  %2748 = vmatpush.bf16.msra.mxu0 %v2601
  %2749 = vmatmul.bf16.gmra.mxu0 %v874
  %v2750 = vpop.f32.mrf.mxu0
  %v2751 = vadd.f32 0.0, %v2750
  %v2752 = vpop.f32.mrf.mxu0
  %v2753 = vadd.f32 0.0, %v2752
  %2754 = vdwg.mxu0
  %v2755 = vpack.c.bf16 %v2753, %v2751
  %v2757 = vsel %vm656, %v2755, 0
  %2759 = vmatpush.bf16.msra.mxu0 0
  %2760 = vmatpush.bf16.msra.mxu0 0
  %2761 = vmatpush.bf16.msra.mxu0 0
  %2762 = vmatpush.bf16.msra.mxu0 0
  %2763 = vmatpush.bf16.msra.mxu0 0
  %2764 = vmatpush.bf16.msra.mxu0 0
  %2765 = vmatpush.bf16.msra.mxu0 %v905
  %2766 = vmatpush.bf16.msra.mxu0 %v904
  %2767 = vmatmul.bf16.gmra.mxu0 %v2757
  %v2768 = vpop.f32.mrf.mxu0
  %v2769 = vadd.f32 0.0, %v2768
  %v2770 = vpop.f32.mrf.mxu0
  %v2771 = vadd.f32 0.0, %v2770
  %2772 = vdwg.mxu0
  %v2773 = vadd.f32 %v2739, %v2769
  %v2774 = vadd.f32 %v2740, %v2771
  %2775 = vmatpush.bf16.msra.mxu0 0
  %2776 = vmatpush.bf16.msra.mxu0 0
  %2777 = vmatpush.bf16.msra.mxu0 0
  %2778 = vmatpush.bf16.msra.mxu0 0
  %2779 = vmatpush.bf16.msra.mxu0 %v2604
  %2780 = vmatpush.bf16.msra.mxu0 %v2603
  %2781 = vmatpush.bf16.msra.mxu0 %v2602
  %2782 = vmatpush.bf16.msra.mxu0 %v2601
  %2783 = vmatmul.bf16.gmra.mxu0 %v936
  %v2784 = vpop.f32.mrf.mxu0
  %v2785 = vadd.f32 0.0, %v2784
  %v2786 = vpop.f32.mrf.mxu0
  %v2787 = vadd.f32 0.0, %v2786
  %2788 = vdwg.mxu0
  %v2789 = vpack.c.bf16 %v2787, %v2785
  %v2791 = vsel %vm656, %v2789, 0
  %2793 = vmatpush.bf16.msra.mxu0 0
  %2794 = vmatpush.bf16.msra.mxu0 0
  %2795 = vmatpush.bf16.msra.mxu0 0
  %2796 = vmatpush.bf16.msra.mxu0 0
  %2797 = vmatpush.bf16.msra.mxu0 0
  %2798 = vmatpush.bf16.msra.mxu0 0
  %2799 = vmatpush.bf16.msra.mxu0 %v967
  %2800 = vmatpush.bf16.msra.mxu0 %v966
  %2801 = vmatmul.bf16.gmra.mxu0 %v2791
  %v2802 = vpop.f32.mrf.mxu0
  %v2803 = vadd.f32 0.0, %v2802
  %v2804 = vpop.f32.mrf.mxu0
  %v2805 = vadd.f32 0.0, %v2804
  %2806 = vdwg.mxu0
  %v2807 = vadd.f32 %v2773, %v2803
  %v2808 = vadd.f32 %v2774, %v2805
  %2809 = vmatpush.bf16.msra.mxu0 0
  %2810 = vmatpush.bf16.msra.mxu0 0
  %2811 = vmatpush.bf16.msra.mxu0 0
  %2812 = vmatpush.bf16.msra.mxu0 0
  %2813 = vmatpush.bf16.msra.mxu0 %v2604
  %2814 = vmatpush.bf16.msra.mxu0 %v2603
  %2815 = vmatpush.bf16.msra.mxu0 %v2602
  %2816 = vmatpush.bf16.msra.mxu0 %v2601
  %2817 = vmatmul.bf16.gmra.mxu0 %v998
  %v2818 = vpop.f32.mrf.mxu0
  %v2819 = vadd.f32 0.0, %v2818
  %v2820 = vpop.f32.mrf.mxu0
  %v2821 = vadd.f32 0.0, %v2820
  %2822 = vdwg.mxu0
  %v2823 = vpack.c.bf16 %v2821, %v2819
  %v2825 = vsel %vm656, %v2823, 0
  %2827 = vmatpush.bf16.msra.mxu0 0
  %2828 = vmatpush.bf16.msra.mxu0 0
  %2829 = vmatpush.bf16.msra.mxu0 0
  %2830 = vmatpush.bf16.msra.mxu0 0
  %2831 = vmatpush.bf16.msra.mxu0 0
  %2832 = vmatpush.bf16.msra.mxu0 0
  %2833 = vmatpush.bf16.msra.mxu0 %v1029
  %2834 = vmatpush.bf16.msra.mxu0 %v1028
  %2835 = vmatmul.bf16.gmra.mxu0 %v2825
  %v2836 = vpop.f32.mrf.mxu0
  %v2837 = vadd.f32 0.0, %v2836
  %v2838 = vpop.f32.mrf.mxu0
  %v2839 = vadd.f32 0.0, %v2838
  %2840 = vdwg.mxu0
  %v2841 = vadd.f32 %v2807, %v2837
  %v2842 = vadd.f32 %v2808, %v2839
  %2843 = vmatpush.bf16.msra.mxu0 0
  %2844 = vmatpush.bf16.msra.mxu0 0
  %2845 = vmatpush.bf16.msra.mxu0 0
  %2846 = vmatpush.bf16.msra.mxu0 0
  %2847 = vmatpush.bf16.msra.mxu0 %v2604
  %2848 = vmatpush.bf16.msra.mxu0 %v2603
  %2849 = vmatpush.bf16.msra.mxu0 %v2602
  %2850 = vmatpush.bf16.msra.mxu0 %v2601
  %2851 = vmatmul.bf16.gmra.mxu0 %v1060
  %v2852 = vpop.f32.mrf.mxu0
  %v2853 = vadd.f32 0.0, %v2852
  %v2854 = vpop.f32.mrf.mxu0
  %v2855 = vadd.f32 0.0, %v2854
  %2856 = vdwg.mxu0
  %v2857 = vpack.c.bf16 %v2855, %v2853
  %v2859 = vsel %vm656, %v2857, 0
  %2861 = vmatpush.bf16.msra.mxu0 0
  %2862 = vmatpush.bf16.msra.mxu0 0
  %2863 = vmatpush.bf16.msra.mxu0 0
  %2864 = vmatpush.bf16.msra.mxu0 0
  %2865 = vmatpush.bf16.msra.mxu0 0
  %2866 = vmatpush.bf16.msra.mxu0 0
  %2867 = vmatpush.bf16.msra.mxu0 %v1091
  %2868 = vmatpush.bf16.msra.mxu0 %v1090
  %2869 = vmatmul.bf16.gmra.mxu0 %v2859
  %v2870 = vpop.f32.mrf.mxu0
  %v2871 = vadd.f32 0.0, %v2870
  %v2872 = vpop.f32.mrf.mxu0
  %v2873 = vadd.f32 0.0, %v2872
  %2874 = vdwg.mxu0
  %v2875 = vadd.f32 %v2841, %v2871
  %v2876 = vadd.f32 %v2842, %v2873
  %2877 = vmatpush.bf16.msra.mxu0 0
  %2878 = vmatpush.bf16.msra.mxu0 0
  %2879 = vmatpush.bf16.msra.mxu0 0
  %2880 = vmatpush.bf16.msra.mxu0 0
  %2881 = vmatpush.bf16.msra.mxu0 %v2604
  %2882 = vmatpush.bf16.msra.mxu0 %v2603
  %2883 = vmatpush.bf16.msra.mxu0 %v2602
  %2884 = vmatpush.bf16.msra.mxu0 %v2601
  %2885 = vmatmul.bf16.gmra.mxu0 %v1122
  %v2886 = vpop.f32.mrf.mxu0
  %v2887 = vadd.f32 0.0, %v2886
  %v2888 = vpop.f32.mrf.mxu0
  %v2889 = vadd.f32 0.0, %v2888
  %2890 = vdwg.mxu0
  %v2891 = vpack.c.bf16 %v2889, %v2887
  %v2893 = vsel %vm656, %v2891, 0
  %2895 = vmatpush.bf16.msra.mxu0 0
  %2896 = vmatpush.bf16.msra.mxu0 0
  %2897 = vmatpush.bf16.msra.mxu0 0
  %2898 = vmatpush.bf16.msra.mxu0 0
  %2899 = vmatpush.bf16.msra.mxu0 0
  %2900 = vmatpush.bf16.msra.mxu0 0
  %2901 = vmatpush.bf16.msra.mxu0 %v1153
  %2902 = vmatpush.bf16.msra.mxu0 %v1152
  %2903 = vmatmul.bf16.gmra.mxu0 %v2893
  %v2904 = vpop.f32.mrf.mxu0
  %v2905 = vadd.f32 0.0, %v2904
  %v2906 = vpop.f32.mrf.mxu0
  %v2907 = vadd.f32 0.0, %v2906
  %2908 = vdwg.mxu0
  %v2909 = vadd.f32 %v2875, %v2905
  %v2910 = vadd.f32 %v2876, %v2907
  %2911 = vmatpush.bf16.msra.mxu0 0
  %2912 = vmatpush.bf16.msra.mxu0 0
  %2913 = vmatpush.bf16.msra.mxu0 0
  %2914 = vmatpush.bf16.msra.mxu0 0
  %2915 = vmatpush.bf16.msra.mxu0 %v2604
  %2916 = vmatpush.bf16.msra.mxu0 %v2603
  %2917 = vmatpush.bf16.msra.mxu0 %v2602
  %2918 = vmatpush.bf16.msra.mxu0 %v2601
  %2919 = vmatmul.bf16.gmra.mxu0 %v1184
  %v2920 = vpop.f32.mrf.mxu0
  %v2921 = vadd.f32 0.0, %v2920
  %v2922 = vpop.f32.mrf.mxu0
  %v2923 = vadd.f32 0.0, %v2922
  %2924 = vdwg.mxu0
  %v2925 = vpack.c.bf16 %v2923, %v2921
  %v2927 = vsel %vm656, %v2925, 0
  %2929 = vmatpush.bf16.msra.mxu0 0
  %2930 = vmatpush.bf16.msra.mxu0 0
  %2931 = vmatpush.bf16.msra.mxu0 0
  %2932 = vmatpush.bf16.msra.mxu0 0
  %2933 = vmatpush.bf16.msra.mxu0 0
  %2934 = vmatpush.bf16.msra.mxu0 0
  %2935 = vmatpush.bf16.msra.mxu0 %v1215
  %2936 = vmatpush.bf16.msra.mxu0 %v1214
  %2937 = vmatmul.bf16.gmra.mxu0 %v2927
  %v2938 = vpop.f32.mrf.mxu0
  %v2939 = vadd.f32 0.0, %v2938
  %v2940 = vpop.f32.mrf.mxu0
  %v2941 = vadd.f32 0.0, %v2940
  %2942 = vdwg.mxu0
  %v2943 = vadd.f32 %v2909, %v2939
  %v2944 = vadd.f32 %v2910, %v2941
  %2945 = vmatpush.bf16.msra.mxu0 0
  %2946 = vmatpush.bf16.msra.mxu0 0
  %2947 = vmatpush.bf16.msra.mxu0 0
  %2948 = vmatpush.bf16.msra.mxu0 0
  %2949 = vmatpush.bf16.msra.mxu0 %v2604
  %2950 = vmatpush.bf16.msra.mxu0 %v2603
  %2951 = vmatpush.bf16.msra.mxu0 %v2602
  %2952 = vmatpush.bf16.msra.mxu0 %v2601
  %2953 = vmatmul.bf16.gmra.mxu0 %v1246
  %v2954 = vpop.f32.mrf.mxu0
  %v2955 = vadd.f32 0.0, %v2954
  %v2956 = vpop.f32.mrf.mxu0
  %v2957 = vadd.f32 0.0, %v2956
  %2958 = vdwg.mxu0
  %v2959 = vpack.c.bf16 %v2957, %v2955
  %v2961 = vsel %vm656, %v2959, 0
  %2963 = vmatpush.bf16.msra.mxu0 0
  %2964 = vmatpush.bf16.msra.mxu0 0
  %2965 = vmatpush.bf16.msra.mxu0 0
  %2966 = vmatpush.bf16.msra.mxu0 0
  %2967 = vmatpush.bf16.msra.mxu0 0
  %2968 = vmatpush.bf16.msra.mxu0 0
  %2969 = vmatpush.bf16.msra.mxu0 %v1277
  %2970 = vmatpush.bf16.msra.mxu0 %v1276
  %2971 = vmatmul.bf16.gmra.mxu0 %v2961
  %v2972 = vpop.f32.mrf.mxu0
  %v2973 = vadd.f32 0.0, %v2972
  %v2974 = vpop.f32.mrf.mxu0
  %v2975 = vadd.f32 0.0, %v2974
  %2976 = vdwg.mxu0
  %v2977 = vadd.f32 %v2943, %v2973
  %v2978 = vadd.f32 %v2944, %v2975
  %2979 = vmatpush.bf16.msra.mxu0 0
  %2980 = vmatpush.bf16.msra.mxu0 0
  %2981 = vmatpush.bf16.msra.mxu0 0
  %2982 = vmatpush.bf16.msra.mxu0 0
  %2983 = vmatpush.bf16.msra.mxu0 %v2604
  %2984 = vmatpush.bf16.msra.mxu0 %v2603
  %2985 = vmatpush.bf16.msra.mxu0 %v2602
  %2986 = vmatpush.bf16.msra.mxu0 %v2601
  %2987 = vmatmul.bf16.gmra.mxu0 %v1308
  %v2988 = vpop.f32.mrf.mxu0
  %v2989 = vadd.f32 0.0, %v2988
  %v2990 = vpop.f32.mrf.mxu0
  %v2991 = vadd.f32 0.0, %v2990
  %2992 = vdwg.mxu0
  %v2993 = vpack.c.bf16 %v2991, %v2989
  %v2995 = vsel %vm656, %v2993, 0
  %2997 = vmatpush.bf16.msra.mxu0 0
  %2998 = vmatpush.bf16.msra.mxu0 0
  %2999 = vmatpush.bf16.msra.mxu0 0
  %3000 = vmatpush.bf16.msra.mxu0 0
  %3001 = vmatpush.bf16.msra.mxu0 0
  %3002 = vmatpush.bf16.msra.mxu0 0
  %3003 = vmatpush.bf16.msra.mxu0 %v1339
  %3004 = vmatpush.bf16.msra.mxu0 %v1338
  %3005 = vmatmul.bf16.gmra.mxu0 %v2995
  %v3006 = vpop.f32.mrf.mxu0
  %v3007 = vadd.f32 0.0, %v3006
  %v3008 = vpop.f32.mrf.mxu0
  %v3009 = vadd.f32 0.0, %v3008
  %3010 = vdwg.mxu0
  %v3011 = vadd.f32 %v2977, %v3007
  %v3012 = vadd.f32 %v2978, %v3009
  %3013 = vmatpush.bf16.msra.mxu0 0
  %3014 = vmatpush.bf16.msra.mxu0 0
  %3015 = vmatpush.bf16.msra.mxu0 0
  %3016 = vmatpush.bf16.msra.mxu0 0
  %3017 = vmatpush.bf16.msra.mxu0 %v2604
  %3018 = vmatpush.bf16.msra.mxu0 %v2603
  %3019 = vmatpush.bf16.msra.mxu0 %v2602
  %3020 = vmatpush.bf16.msra.mxu0 %v2601
  %3021 = vmatmul.bf16.gmra.mxu0 %v1370
  %v3022 = vpop.f32.mrf.mxu0
  %v3023 = vadd.f32 0.0, %v3022
  %v3024 = vpop.f32.mrf.mxu0
  %v3025 = vadd.f32 0.0, %v3024
  %3026 = vdwg.mxu0
  %v3027 = vpack.c.bf16 %v3025, %v3023
  %v3029 = vsel %vm656, %v3027, 0
  %3031 = vmatpush.bf16.msra.mxu0 0
  %3032 = vmatpush.bf16.msra.mxu0 0
  %3033 = vmatpush.bf16.msra.mxu0 0
  %3034 = vmatpush.bf16.msra.mxu0 0
  %3035 = vmatpush.bf16.msra.mxu0 0
  %3036 = vmatpush.bf16.msra.mxu0 0
  %3037 = vmatpush.bf16.msra.mxu0 %v1401
  %3038 = vmatpush.bf16.msra.mxu0 %v1400
  %3039 = vmatmul.bf16.gmra.mxu0 %v3029
  %v3040 = vpop.f32.mrf.mxu0
  %v3041 = vadd.f32 0.0, %v3040
  %v3042 = vpop.f32.mrf.mxu0
  %v3043 = vadd.f32 0.0, %v3042
  %3044 = vdwg.mxu0
  %v3045 = vadd.f32 %v3011, %v3041
  %v3046 = vadd.f32 %v3012, %v3043
  %3047 = vmatpush.bf16.msra.mxu0 0
  %3048 = vmatpush.bf16.msra.mxu0 0
  %3049 = vmatpush.bf16.msra.mxu0 0
  %3050 = vmatpush.bf16.msra.mxu0 0
  %3051 = vmatpush.bf16.msra.mxu0 %v2604
  %3052 = vmatpush.bf16.msra.mxu0 %v2603
  %3053 = vmatpush.bf16.msra.mxu0 %v2602
  %3054 = vmatpush.bf16.msra.mxu0 %v2601
  %3055 = vmatmul.bf16.gmra.mxu0 %v1432
  %v3056 = vpop.f32.mrf.mxu0
  %v3057 = vadd.f32 0.0, %v3056
  %v3058 = vpop.f32.mrf.mxu0
  %v3059 = vadd.f32 0.0, %v3058
  %3060 = vdwg.mxu0
  %v3061 = vpack.c.bf16 %v3059, %v3057
  %v3063 = vsel %vm656, %v3061, 0
  %3065 = vmatpush.bf16.msra.mxu0 0
  %3066 = vmatpush.bf16.msra.mxu0 0
  %3067 = vmatpush.bf16.msra.mxu0 0
  %3068 = vmatpush.bf16.msra.mxu0 0
  %3069 = vmatpush.bf16.msra.mxu0 0
  %3070 = vmatpush.bf16.msra.mxu0 0
  %3071 = vmatpush.bf16.msra.mxu0 %v1463
  %3072 = vmatpush.bf16.msra.mxu0 %v1462
  %3073 = vmatmul.bf16.gmra.mxu0 %v3063
  %v3074 = vpop.f32.mrf.mxu0
  %v3075 = vadd.f32 0.0, %v3074
  %v3076 = vpop.f32.mrf.mxu0
  %v3077 = vadd.f32 0.0, %v3076
  %3078 = vdwg.mxu0
  %v3079 = vadd.f32 %v3045, %v3075
  %v3080 = vadd.f32 %v3046, %v3077
  %3081 = vmatpush.bf16.msra.mxu0 0
  %3082 = vmatpush.bf16.msra.mxu0 0
  %3083 = vmatpush.bf16.msra.mxu0 0
  %3084 = vmatpush.bf16.msra.mxu0 0
  %3085 = vmatpush.bf16.msra.mxu0 %v2604
  %3086 = vmatpush.bf16.msra.mxu0 %v2603
  %3087 = vmatpush.bf16.msra.mxu0 %v2602
  %3088 = vmatpush.bf16.msra.mxu0 %v2601
  %3089 = vmatmul.bf16.gmra.mxu0 %v1494
  %v3090 = vpop.f32.mrf.mxu0
  %v3091 = vadd.f32 0.0, %v3090
  %v3092 = vpop.f32.mrf.mxu0
  %v3093 = vadd.f32 0.0, %v3092
  %3094 = vdwg.mxu0
  %v3095 = vpack.c.bf16 %v3093, %v3091
  %v3097 = vsel %vm656, %v3095, 0
  %3099 = vmatpush.bf16.msra.mxu0 0
  %3100 = vmatpush.bf16.msra.mxu0 0
  %3101 = vmatpush.bf16.msra.mxu0 0
  %3102 = vmatpush.bf16.msra.mxu0 0
  %3103 = vmatpush.bf16.msra.mxu0 0
  %3104 = vmatpush.bf16.msra.mxu0 0
  %3105 = vmatpush.bf16.msra.mxu0 %v1525
  %3106 = vmatpush.bf16.msra.mxu0 %v1524
  %3107 = vmatmul.bf16.gmra.mxu0 %v3097
  %v3108 = vpop.f32.mrf.mxu0
  %v3109 = vadd.f32 0.0, %v3108
  %v3110 = vpop.f32.mrf.mxu0
  %v3111 = vadd.f32 0.0, %v3110
  %3112 = vdwg.mxu0
  %v3113 = vadd.f32 %v3079, %v3109
  %v3114 = vadd.f32 %v3080, %v3111
  %3115 = vmatpush.bf16.msra.mxu0 0
  %3116 = vmatpush.bf16.msra.mxu0 0
  %3117 = vmatpush.bf16.msra.mxu0 0
  %3118 = vmatpush.bf16.msra.mxu0 0
  %3119 = vmatpush.bf16.msra.mxu0 %v2604
  %3120 = vmatpush.bf16.msra.mxu0 %v2603
  %3121 = vmatpush.bf16.msra.mxu0 %v2602
  %3122 = vmatpush.bf16.msra.mxu0 %v2601
  %3123 = vmatmul.bf16.gmra.mxu0 %v1556
  %v3124 = vpop.f32.mrf.mxu0
  %v3125 = vadd.f32 0.0, %v3124
  %v3126 = vpop.f32.mrf.mxu0
  %v3127 = vadd.f32 0.0, %v3126
  %3128 = vdwg.mxu0
  %v3129 = vpack.c.bf16 %v3127, %v3125
  %v3131 = vsel %vm656, %v3129, 0
  %3133 = vmatpush.bf16.msra.mxu0 0
  %3134 = vmatpush.bf16.msra.mxu0 0
  %3135 = vmatpush.bf16.msra.mxu0 0
  %3136 = vmatpush.bf16.msra.mxu0 0
  %3137 = vmatpush.bf16.msra.mxu0 0
  %3138 = vmatpush.bf16.msra.mxu0 0
  %3139 = vmatpush.bf16.msra.mxu0 %v1587
  %3140 = vmatpush.bf16.msra.mxu0 %v1586
  %3141 = vmatmul.bf16.gmra.mxu0 %v3131
  %v3142 = vpop.f32.mrf.mxu0
  %v3143 = vadd.f32 0.0, %v3142
  %v3144 = vpop.f32.mrf.mxu0
  %v3145 = vadd.f32 0.0, %v3144
  %3146 = vdwg.mxu0
  %v3147 = vadd.f32 %v3113, %v3143
  %v3148 = vadd.f32 %v3114, %v3145
  %v3149 = vmax.f32 %v3147, 0.0
  %v3150 = vmax.f32 %v3148, 0.0
  %v3151 = vpack.c.bf16 %v3150, %v3149
  %v3153 = vand.u32 %v3151, %v1621
  %3155 = vmatpush.bf16.msra.mxu0 0
  %3156 = vmatpush.bf16.msra.mxu0 0
  %3157 = vmatpush.bf16.msra.mxu0 0
  %3158 = vmatpush.bf16.msra.mxu0 0
  %3159 = vmatpush.bf16.msra.mxu0 0
  %3160 = vmatpush.bf16.msra.mxu0 0
  %3161 = vmatpush.bf16.msra.mxu0 0
  %3162 = vmatpush.bf16.msra.mxu0 %v3153
  %3163 = vmatmul.bf16.gmra.mxu0 %v1616
  %v3164 = vpop.f32.mrf.mxu0
  %v3165 = vadd.f32 0.0, %v3164
  %v3166 = vpop.f32.mrf.mxu0
  %3167 = vdwg.mxu0
  %v3168 = vpack.c.bf16 %v3165, %v3165
  %v3170 = vsel %vm119, %v3168, 0
  %3172 = vmatpush.bf16.msra.mxu0 0
  %3173 = vmatpush.bf16.msra.mxu0 0
  %3174 = vmatpush.bf16.msra.mxu0 0
  %3175 = vmatpush.bf16.msra.mxu0 0
  %3176 = vmatpush.bf16.msra.mxu0 %v1666
  %3177 = vmatpush.bf16.msra.mxu0 %v1665
  %3178 = vmatpush.bf16.msra.mxu0 %v1664
  %3179 = vmatpush.bf16.msra.mxu0 %v1663
  %3180 = vmatmul.bf16.gmra.mxu0 %v3170
  %v3181 = vpop.f32.mrf.mxu0
  %v3182 = vadd.f32 0.0, %v3181
  %v3183 = vpop.f32.mrf.mxu0
  %3184 = vdwg.mxu0
  %v3185 = vadd.f32 %v1612, %v3182
  %3186 = vmatpush.bf16.msra.mxu0 0
  %3187 = vmatpush.bf16.msra.mxu0 0
  %3188 = vmatpush.bf16.msra.mxu0 0
  %3189 = vmatpush.bf16.msra.mxu0 0
  %3190 = vmatpush.bf16.msra.mxu0 0
  %3191 = vmatpush.bf16.msra.mxu0 0
  %3192 = vmatpush.bf16.msra.mxu0 0
  %3193 = vmatpush.bf16.msra.mxu0 %v3153
  %3194 = vmatmul.bf16.gmra.mxu0 %v1691
  %v3195 = vpop.f32.mrf.mxu0
  %v3196 = vadd.f32 0.0, %v3195
  %v3197 = vpop.f32.mrf.mxu0
  %3198 = vdwg.mxu0
  %v3199 = vpack.c.bf16 %v3196, %v3196
  %v3201 = vsel %vm119, %v3199, 0
  %3203 = vmatpush.bf16.msra.mxu0 0
  %3204 = vmatpush.bf16.msra.mxu0 0
  %3205 = vmatpush.bf16.msra.mxu0 0
  %3206 = vmatpush.bf16.msra.mxu0 0
  %3207 = vmatpush.bf16.msra.mxu0 %v1735
  %3208 = vmatpush.bf16.msra.mxu0 %v1734
  %3209 = vmatpush.bf16.msra.mxu0 %v1733
  %3210 = vmatpush.bf16.msra.mxu0 %v1732
  %3211 = vmatmul.bf16.gmra.mxu0 %v3201
  %v3212 = vpop.f32.mrf.mxu0
  %v3213 = vadd.f32 0.0, %v3212
  %v3214 = vpop.f32.mrf.mxu0
  %3215 = vdwg.mxu0
  %v3216 = vadd.f32 %v3185, %v3213
  %3217 = vmatpush.bf16.msra.mxu0 0
  %3218 = vmatpush.bf16.msra.mxu0 0
  %3219 = vmatpush.bf16.msra.mxu0 0
  %3220 = vmatpush.bf16.msra.mxu0 0
  %3221 = vmatpush.bf16.msra.mxu0 0
  %3222 = vmatpush.bf16.msra.mxu0 0
  %3223 = vmatpush.bf16.msra.mxu0 0
  %3224 = vmatpush.bf16.msra.mxu0 %v3153
  %3225 = vmatmul.bf16.gmra.mxu0 %v1760
  %v3226 = vpop.f32.mrf.mxu0
  %v3227 = vadd.f32 0.0, %v3226
  %v3228 = vpop.f32.mrf.mxu0
  %3229 = vdwg.mxu0
  %v3230 = vpack.c.bf16 %v3227, %v3227
  %v3232 = vsel %vm119, %v3230, 0
  %3234 = vmatpush.bf16.msra.mxu0 0
  %3235 = vmatpush.bf16.msra.mxu0 0
  %3236 = vmatpush.bf16.msra.mxu0 0
  %3237 = vmatpush.bf16.msra.mxu0 0
  %3238 = vmatpush.bf16.msra.mxu0 %v1804
  %3239 = vmatpush.bf16.msra.mxu0 %v1803
  %3240 = vmatpush.bf16.msra.mxu0 %v1802
  %3241 = vmatpush.bf16.msra.mxu0 %v1801
  %3242 = vmatmul.bf16.gmra.mxu0 %v3232
  %v3243 = vpop.f32.mrf.mxu0
  %v3244 = vadd.f32 0.0, %v3243
  %v3245 = vpop.f32.mrf.mxu0
  %3246 = vdwg.mxu0
  %v3247 = vadd.f32 %v3216, %v3244
  %3248 = vmatpush.bf16.msra.mxu0 0
  %3249 = vmatpush.bf16.msra.mxu0 0
  %3250 = vmatpush.bf16.msra.mxu0 0
  %3251 = vmatpush.bf16.msra.mxu0 0
  %3252 = vmatpush.bf16.msra.mxu0 0
  %3253 = vmatpush.bf16.msra.mxu0 0
  %3254 = vmatpush.bf16.msra.mxu0 0
  %3255 = vmatpush.bf16.msra.mxu0 %v3153
  %3256 = vmatmul.bf16.gmra.mxu0 %v1829
  %v3257 = vpop.f32.mrf.mxu0
  %v3258 = vadd.f32 0.0, %v3257
  %v3259 = vpop.f32.mrf.mxu0
  %3260 = vdwg.mxu0
  %v3261 = vpack.c.bf16 %v3258, %v3258
  %v3263 = vsel %vm119, %v3261, 0
  %3265 = vmatpush.bf16.msra.mxu0 0
  %3266 = vmatpush.bf16.msra.mxu0 0
  %3267 = vmatpush.bf16.msra.mxu0 0
  %3268 = vmatpush.bf16.msra.mxu0 0
  %3269 = vmatpush.bf16.msra.mxu0 %v1873
  %3270 = vmatpush.bf16.msra.mxu0 %v1872
  %3271 = vmatpush.bf16.msra.mxu0 %v1871
  %3272 = vmatpush.bf16.msra.mxu0 %v1870
  %3273 = vmatmul.bf16.gmra.mxu0 %v3263
  %v3274 = vpop.f32.mrf.mxu0
  %v3275 = vadd.f32 0.0, %v3274
  %v3276 = vpop.f32.mrf.mxu0
  %3277 = vdwg.mxu0
  %v3278 = vadd.f32 %v3247, %v3275
  %3279 = vmatpush.bf16.msra.mxu0 0
  %3280 = vmatpush.bf16.msra.mxu0 0
  %3281 = vmatpush.bf16.msra.mxu0 0
  %3282 = vmatpush.bf16.msra.mxu0 0
  %3283 = vmatpush.bf16.msra.mxu0 0
  %3284 = vmatpush.bf16.msra.mxu0 0
  %3285 = vmatpush.bf16.msra.mxu0 0
  %3286 = vmatpush.bf16.msra.mxu0 %v3153
  %3287 = vmatmul.bf16.gmra.mxu0 %v1898
  %v3288 = vpop.f32.mrf.mxu0
  %v3289 = vadd.f32 0.0, %v3288
  %v3290 = vpop.f32.mrf.mxu0
  %3291 = vdwg.mxu0
  %v3292 = vpack.c.bf16 %v3289, %v3289
  %v3294 = vsel %vm119, %v3292, 0
  %3296 = vmatpush.bf16.msra.mxu0 0
  %3297 = vmatpush.bf16.msra.mxu0 0
  %3298 = vmatpush.bf16.msra.mxu0 0
  %3299 = vmatpush.bf16.msra.mxu0 0
  %3300 = vmatpush.bf16.msra.mxu0 %v1942
  %3301 = vmatpush.bf16.msra.mxu0 %v1941
  %3302 = vmatpush.bf16.msra.mxu0 %v1940
  %3303 = vmatpush.bf16.msra.mxu0 %v1939
  %3304 = vmatmul.bf16.gmra.mxu0 %v3294
  %v3305 = vpop.f32.mrf.mxu0
  %v3306 = vadd.f32 0.0, %v3305
  %v3307 = vpop.f32.mrf.mxu0
  %3308 = vdwg.mxu0
  %v3309 = vadd.f32 %v3278, %v3306
  %3310 = vmatpush.bf16.msra.mxu0 0
  %3311 = vmatpush.bf16.msra.mxu0 0
  %3312 = vmatpush.bf16.msra.mxu0 0
  %3313 = vmatpush.bf16.msra.mxu0 0
  %3314 = vmatpush.bf16.msra.mxu0 0
  %3315 = vmatpush.bf16.msra.mxu0 0
  %3316 = vmatpush.bf16.msra.mxu0 0
  %3317 = vmatpush.bf16.msra.mxu0 %v3153
  %3318 = vmatmul.bf16.gmra.mxu0 %v1967
  %v3319 = vpop.f32.mrf.mxu0
  %v3320 = vadd.f32 0.0, %v3319
  %v3321 = vpop.f32.mrf.mxu0
  %3322 = vdwg.mxu0
  %v3323 = vpack.c.bf16 %v3320, %v3320
  %v3325 = vsel %vm119, %v3323, 0
  %3327 = vmatpush.bf16.msra.mxu0 0
  %3328 = vmatpush.bf16.msra.mxu0 0
  %3329 = vmatpush.bf16.msra.mxu0 0
  %3330 = vmatpush.bf16.msra.mxu0 0
  %3331 = vmatpush.bf16.msra.mxu0 %v2011
  %3332 = vmatpush.bf16.msra.mxu0 %v2010
  %3333 = vmatpush.bf16.msra.mxu0 %v2009
  %3334 = vmatpush.bf16.msra.mxu0 %v2008
  %3335 = vmatmul.bf16.gmra.mxu0 %v3325
  %v3336 = vpop.f32.mrf.mxu0
  %v3337 = vadd.f32 0.0, %v3336
  %v3338 = vpop.f32.mrf.mxu0
  %3339 = vdwg.mxu0
  %v3340 = vadd.f32 %v3309, %v3337
  %3341 = vmatpush.bf16.msra.mxu0 0
  %3342 = vmatpush.bf16.msra.mxu0 0
  %3343 = vmatpush.bf16.msra.mxu0 0
  %3344 = vmatpush.bf16.msra.mxu0 0
  %3345 = vmatpush.bf16.msra.mxu0 0
  %3346 = vmatpush.bf16.msra.mxu0 0
  %3347 = vmatpush.bf16.msra.mxu0 0
  %3348 = vmatpush.bf16.msra.mxu0 %v3153
  %3349 = vmatmul.bf16.gmra.mxu0 %v2036
  %v3350 = vpop.f32.mrf.mxu0
  %v3351 = vadd.f32 0.0, %v3350
  %v3352 = vpop.f32.mrf.mxu0
  %3353 = vdwg.mxu0
  %v3354 = vpack.c.bf16 %v3351, %v3351
  %v3356 = vsel %vm119, %v3354, 0
  %3358 = vmatpush.bf16.msra.mxu0 0
  %3359 = vmatpush.bf16.msra.mxu0 0
  %3360 = vmatpush.bf16.msra.mxu0 0
  %3361 = vmatpush.bf16.msra.mxu0 0
  %3362 = vmatpush.bf16.msra.mxu0 %v2080
  %3363 = vmatpush.bf16.msra.mxu0 %v2079
  %3364 = vmatpush.bf16.msra.mxu0 %v2078
  %3365 = vmatpush.bf16.msra.mxu0 %v2077
  %3366 = vmatmul.bf16.gmra.mxu0 %v3356
  %v3367 = vpop.f32.mrf.mxu0
  %v3368 = vadd.f32 0.0, %v3367
  %v3369 = vpop.f32.mrf.mxu0
  %3370 = vdwg.mxu0
  %v3371 = vadd.f32 %v3340, %v3368
  %3372 = vmatpush.bf16.msra.mxu0 0
  %3373 = vmatpush.bf16.msra.mxu0 0
  %3374 = vmatpush.bf16.msra.mxu0 0
  %3375 = vmatpush.bf16.msra.mxu0 0
  %3376 = vmatpush.bf16.msra.mxu0 0
  %3377 = vmatpush.bf16.msra.mxu0 0
  %3378 = vmatpush.bf16.msra.mxu0 0
  %3379 = vmatpush.bf16.msra.mxu0 %v3153
  %3380 = vmatmul.bf16.gmra.mxu0 %v2105
  %v3381 = vpop.f32.mrf.mxu0
  %v3382 = vadd.f32 0.0, %v3381
  %v3383 = vpop.f32.mrf.mxu0
  %3384 = vdwg.mxu0
  %v3385 = vpack.c.bf16 %v3382, %v3382
  %v3387 = vsel %vm119, %v3385, 0
  %3389 = vmatpush.bf16.msra.mxu0 0
  %3390 = vmatpush.bf16.msra.mxu0 0
  %3391 = vmatpush.bf16.msra.mxu0 0
  %3392 = vmatpush.bf16.msra.mxu0 0
  %3393 = vmatpush.bf16.msra.mxu0 %v2149
  %3394 = vmatpush.bf16.msra.mxu0 %v2148
  %3395 = vmatpush.bf16.msra.mxu0 %v2147
  %3396 = vmatpush.bf16.msra.mxu0 %v2146
  %3397 = vmatmul.bf16.gmra.mxu0 %v3387
  %v3398 = vpop.f32.mrf.mxu0
  %v3399 = vadd.f32 0.0, %v3398
  %v3400 = vpop.f32.mrf.mxu0
  %3401 = vdwg.mxu0
  %v3402 = vadd.f32 %v3371, %v3399
  %3403 = vmatpush.bf16.msra.mxu0 0
  %3404 = vmatpush.bf16.msra.mxu0 0
  %3405 = vmatpush.bf16.msra.mxu0 0
  %3406 = vmatpush.bf16.msra.mxu0 0
  %3407 = vmatpush.bf16.msra.mxu0 0
  %3408 = vmatpush.bf16.msra.mxu0 0
  %3409 = vmatpush.bf16.msra.mxu0 0
  %3410 = vmatpush.bf16.msra.mxu0 %v3153
  %3411 = vmatmul.bf16.gmra.mxu0 %v2174
  %v3412 = vpop.f32.mrf.mxu0
  %v3413 = vadd.f32 0.0, %v3412
  %v3414 = vpop.f32.mrf.mxu0
  %3415 = vdwg.mxu0
  %v3416 = vpack.c.bf16 %v3413, %v3413
  %v3418 = vsel %vm119, %v3416, 0
  %3420 = vmatpush.bf16.msra.mxu0 0
  %3421 = vmatpush.bf16.msra.mxu0 0
  %3422 = vmatpush.bf16.msra.mxu0 0
  %3423 = vmatpush.bf16.msra.mxu0 0
  %3424 = vmatpush.bf16.msra.mxu0 %v2218
  %3425 = vmatpush.bf16.msra.mxu0 %v2217
  %3426 = vmatpush.bf16.msra.mxu0 %v2216
  %3427 = vmatpush.bf16.msra.mxu0 %v2215
  %3428 = vmatmul.bf16.gmra.mxu0 %v3418
  %v3429 = vpop.f32.mrf.mxu0
  %v3430 = vadd.f32 0.0, %v3429
  %v3431 = vpop.f32.mrf.mxu0
  %3432 = vdwg.mxu0
  %v3433 = vadd.f32 %v3402, %v3430
  %v3434 = vmax.f32 %v3433, 0.0
  %v3435 = vpack.c.bf16 %v3434, %v3434
  %v3437 = vunpack.c.l.b16 %v3435
  %v3438 = vpack.c.b16 %v3437, %v3437
  %v3440 = vshll.u32 %v3438, 16
  %vm3443 = vcmask 1040384
  %vm3444 = vsmask.f32 256
  %vm3445 = vmand %vm3443, %vm3444
  %v3446 = vsel %vm3445, %v2241, %v3440
  %v3447 = vld [vmem:[%s10] sm:$0xff]
  %v3448 = vld [vmem:[%s10 + $0x8] sm:$0xff]
  %v3449 = vld [vmem:[%s10 + $0x10] sm:$0xff]
  %v3450 = vld [vmem:[%s10 + $0x18] sm:$0xff]
  %v3451 = vld [vmem:[%s10 + $0x20] sm:$0xff]
  %v3452 = vld [vmem:[%s10 + $0x28] sm:$0xff]
  %v3453 = vld [vmem:[%s10 + $0x30] sm:$0xff]
  %v3454 = vld [vmem:[%s10 + $0x38] sm:$0xff]
  %v3455 = vld [vmem:[%s10 + $0x40] sm:$0xff]
  %v3456 = vld [vmem:[%s10 + $0x48] sm:$0xff]
  %v3457 = vld [vmem:[%s10 + $0x50] sm:$0xff]
  %v3458 = vld [vmem:[%s10 + $0x58] sm:$0xff]
  %v3459 = vld [vmem:[%s10 + $0x60] sm:$0xff]
  %v3460 = vld [vmem:[%s10 + $0x68] sm:$0xff]
  %v3461 = vld [vmem:[%s10 + $0x70] sm:$0xff]
  %v3462 = vld [vmem:[%s10 + $0x78] sm:$0xff]
  %v3463 = vld [vmem:[%s10 + $0x80] sm:$0xff]
  %v3464 = vld [vmem:[%s10 + $0x88] sm:$0xff]
  %v3465 = vld [vmem:[%s10 + $0x90] sm:$0xff]
  %v3466 = vld [vmem:[%s10 + $0x98] sm:$0xff]
  %v3467 = vld [vmem:[%s10 + $0xa0] sm:$0xff]
  %v3468 = vld [vmem:[%s10 + $0xa8] sm:$0xff]
  %v3469 = vld [vmem:[%s10 + $0xb0] sm:$0xff]
  %v3470 = vld [vmem:[%s10 + $0xb8] sm:$0xff]
  %v3471 = vld [vmem:[%s10 + $0xc0] sm:$0xff]
  %v3472 = vld [vmem:[%s10 + $0xc8] sm:$0xff]
  %v3473 = vld [vmem:[%s10 + $0xd0] sm:$0xff]
  %v3474 = vld [vmem:[%s10 + $0xd8] sm:$0xff]
  %v3475 = vld [vmem:[%s10 + $0xe0] sm:$0xff]
  %v3476 = vld [vmem:[%s10 + $0xe8] sm:$0xff]
  %v3477 = vld [vmem:[%s10 + $0xf0] sm:$0xff]
  %v3478 = vld [vmem:[%s10 + $0xf8] sm:$0xff]
  %v3479 = vld [vmem:[%s11] sm:$0xff]
  %v3481 = vperm.slane %v3479, 0
  %v3482 = vperm.slane %v3479, 1
  %v3483 = vperm.slane %v3479, 2
  %v3484 = vperm.slane %v3479, 3
  %v3485 = vperm.slane %v3479, 4
  %v3486 = vperm.slane %v3479, 5
  %v3487 = vperm.slane %v3479, 6
  %v3488 = vperm.slane %v3479, 7
  %v3529 = vunpack.c.l.b16 %v3447
  %v3530 = vunpack.c.h.b16 %v3447
  %v3531 = vunpack.c.l.b16 %v3448
  %v3532 = vunpack.c.h.b16 %v3448
  %v3533 = vunpack.c.l.b16 %v3449
  %v3534 = vunpack.c.h.b16 %v3449
  %v3535 = vunpack.c.l.b16 %v3450
  %v3536 = vunpack.c.h.b16 %v3450
  %v3537 = vunpack.c.l.b16 %v3451
  %v3538 = vunpack.c.h.b16 %v3451
  %v3539 = vunpack.c.l.b16 %v3452
  %v3540 = vunpack.c.h.b16 %v3452
  %v3541 = vunpack.c.l.b16 %v3453
  %v3542 = vunpack.c.h.b16 %v3453
  %v3543 = vunpack.c.l.b16 %v3454
  %v3544 = vunpack.c.h.b16 %v3454
  %v3545 = vunpack.c.l.b16 %v3455
  %v3546 = vunpack.c.h.b16 %v3455
  %v3547 = vunpack.c.l.b16 %v3456
  %v3548 = vunpack.c.h.b16 %v3456
  %v3549 = vunpack.c.l.b16 %v3457
  %v3550 = vunpack.c.h.b16 %v3457
  %v3551 = vunpack.c.l.b16 %v3458
  %v3552 = vunpack.c.h.b16 %v3458
  %v3553 = vunpack.c.l.b16 %v3459
  %v3554 = vunpack.c.h.b16 %v3459
  %v3555 = vunpack.c.l.b16 %v3460
  %v3556 = vunpack.c.h.b16 %v3460
  %v3557 = vunpack.c.l.b16 %v3461
  %v3558 = vunpack.c.h.b16 %v3461
  %v3559 = vunpack.c.l.b16 %v3462
  %v3560 = vunpack.c.h.b16 %v3462
  %v3561 = vunpack.c.l.b16 %v3463
  %v3562 = vunpack.c.h.b16 %v3463
  %v3563 = vunpack.c.l.b16 %v3464
  %v3564 = vunpack.c.h.b16 %v3464
  %v3565 = vunpack.c.l.b16 %v3465
  %v3566 = vunpack.c.h.b16 %v3465
  %v3567 = vunpack.c.l.b16 %v3466
  %v3568 = vunpack.c.h.b16 %v3466
  %v3569 = vunpack.c.l.b16 %v3467
  %v3570 = vunpack.c.h.b16 %v3467
  %v3571 = vunpack.c.l.b16 %v3468
  %v3572 = vunpack.c.h.b16 %v3468
  %v3573 = vunpack.c.l.b16 %v3469
  %v3574 = vunpack.c.h.b16 %v3469
  %v3575 = vunpack.c.l.b16 %v3470
  %v3576 = vunpack.c.h.b16 %v3470
  %v3577 = vunpack.c.l.b16 %v3471
  %v3578 = vunpack.c.h.b16 %v3471
  %v3579 = vunpack.c.l.b16 %v3472
  %v3580 = vunpack.c.h.b16 %v3472
  %v3581 = vunpack.c.l.b16 %v3473
  %v3582 = vunpack.c.h.b16 %v3473
  %v3583 = vunpack.c.l.b16 %v3474
  %v3584 = vunpack.c.h.b16 %v3474
  %v3585 = vunpack.c.l.b16 %v3475
  %v3586 = vunpack.c.h.b16 %v3475
  %v3587 = vunpack.c.l.b16 %v3476
  %v3588 = vunpack.c.h.b16 %v3476
  %v3589 = vunpack.c.l.b16 %v3477
  %v3590 = vunpack.c.h.b16 %v3477
  %v3591 = vunpack.c.l.b16 %v3478
  %v3592 = vunpack.c.h.b16 %v3478
  %v3593 = vpack.c.b16 %v3537, %v3529
  %v3594 = vpack.c.b16 %v3538, %v3530
  %v3595 = vpack.c.b16 %v3539, %v3531
  %v3596 = vpack.c.b16 %v3540, %v3532
  %v3597 = vpack.c.b16 %v3541, %v3533
  %v3598 = vpack.c.b16 %v3542, %v3534
  %v3599 = vpack.c.b16 %v3543, %v3535
  %v3600 = vpack.c.b16 %v3544, %v3536
  %v3601 = vpack.c.b16 %v3553, %v3545
  %v3602 = vpack.c.b16 %v3554, %v3546
  %v3603 = vpack.c.b16 %v3555, %v3547
  %v3604 = vpack.c.b16 %v3556, %v3548
  %v3605 = vpack.c.b16 %v3557, %v3549
  %v3606 = vpack.c.b16 %v3558, %v3550
  %v3607 = vpack.c.b16 %v3559, %v3551
  %v3608 = vpack.c.b16 %v3560, %v3552
  %v3609 = vpack.c.b16 %v3569, %v3561
  %v3610 = vpack.c.b16 %v3570, %v3562
  %v3611 = vpack.c.b16 %v3571, %v3563
  %v3612 = vpack.c.b16 %v3572, %v3564
  %v3613 = vpack.c.b16 %v3573, %v3565
  %v3614 = vpack.c.b16 %v3574, %v3566
  %v3615 = vpack.c.b16 %v3575, %v3567
  %v3616 = vpack.c.b16 %v3576, %v3568
  %v3617 = vpack.c.b16 %v3585, %v3577
  %v3618 = vpack.c.b16 %v3586, %v3578
  %v3619 = vpack.c.b16 %v3587, %v3579
  %v3620 = vpack.c.b16 %v3588, %v3580
  %v3621 = vpack.c.b16 %v3589, %v3581
  %v3622 = vpack.c.b16 %v3590, %v3582
  %v3623 = vpack.c.b16 %v3591, %v3583
  %v3624 = vpack.c.b16 %v3592, %v3584
  %v3658 = vsel %vm119, %v3446, 0
  %3660 = vmatpush.bf16.msra.mxu0 0
  %3661 = vmatpush.bf16.msra.mxu0 0
  %3662 = vmatpush.bf16.msra.mxu0 0
  %3663 = vmatpush.bf16.msra.mxu0 0
  %3664 = vmatpush.bf16.msra.mxu0 %v3617
  %3665 = vmatpush.bf16.msra.mxu0 %v3609
  %3666 = vmatpush.bf16.msra.mxu0 %v3601
  %3667 = vmatpush.bf16.msra.mxu0 %v3593
  %3668 = vmatmul.bf16.gmra.mxu0 %v3658
  %v3669 = vpop.f32.mrf.mxu0
  %v3670 = vadd.f32 %v3481, %v3669
  %v3671 = vpop.f32.mrf.mxu0
  %3672 = vdwg.mxu0
  %3673 = vmatpush.bf16.msra.mxu0 0
  %3674 = vmatpush.bf16.msra.mxu0 0
  %3675 = vmatpush.bf16.msra.mxu0 0
  %3676 = vmatpush.bf16.msra.mxu0 0
  %3677 = vmatpush.bf16.msra.mxu0 %v3618
  %3678 = vmatpush.bf16.msra.mxu0 %v3610
  %3679 = vmatpush.bf16.msra.mxu0 %v3602
  %3680 = vmatpush.bf16.msra.mxu0 %v3594
  %3681 = vmatmul.bf16.gmra.mxu0 %v3658
  %v3682 = vpop.f32.mrf.mxu0
  %v3683 = vadd.f32 %v3482, %v3682
  %v3684 = vpop.f32.mrf.mxu0
  %3685 = vdwg.mxu0
  %3686 = vmatpush.bf16.msra.mxu0 0
  %3687 = vmatpush.bf16.msra.mxu0 0
  %3688 = vmatpush.bf16.msra.mxu0 0
  %3689 = vmatpush.bf16.msra.mxu0 0
  %3690 = vmatpush.bf16.msra.mxu0 %v3619
  %3691 = vmatpush.bf16.msra.mxu0 %v3611
  %3692 = vmatpush.bf16.msra.mxu0 %v3603
  %3693 = vmatpush.bf16.msra.mxu0 %v3595
  %3694 = vmatmul.bf16.gmra.mxu0 %v3658
  %v3695 = vpop.f32.mrf.mxu0
  %v3696 = vadd.f32 %v3483, %v3695
  %v3697 = vpop.f32.mrf.mxu0
  %3698 = vdwg.mxu0
  %3699 = vmatpush.bf16.msra.mxu0 0
  %3700 = vmatpush.bf16.msra.mxu0 0
  %3701 = vmatpush.bf16.msra.mxu0 0
  %3702 = vmatpush.bf16.msra.mxu0 0
  %3703 = vmatpush.bf16.msra.mxu0 %v3620
  %3704 = vmatpush.bf16.msra.mxu0 %v3612
  %3705 = vmatpush.bf16.msra.mxu0 %v3604
  %3706 = vmatpush.bf16.msra.mxu0 %v3596
  %3707 = vmatmul.bf16.gmra.mxu0 %v3658
  %v3708 = vpop.f32.mrf.mxu0
  %v3709 = vadd.f32 %v3484, %v3708
  %v3710 = vpop.f32.mrf.mxu0
  %3711 = vdwg.mxu0
  %3712 = vmatpush.bf16.msra.mxu0 0
  %3713 = vmatpush.bf16.msra.mxu0 0
  %3714 = vmatpush.bf16.msra.mxu0 0
  %3715 = vmatpush.bf16.msra.mxu0 0
  %3716 = vmatpush.bf16.msra.mxu0 %v3621
  %3717 = vmatpush.bf16.msra.mxu0 %v3613
  %3718 = vmatpush.bf16.msra.mxu0 %v3605
  %3719 = vmatpush.bf16.msra.mxu0 %v3597
  %3720 = vmatmul.bf16.gmra.mxu0 %v3658
  %v3721 = vpop.f32.mrf.mxu0
  %v3722 = vadd.f32 %v3485, %v3721
  %v3723 = vpop.f32.mrf.mxu0
  %3724 = vdwg.mxu0
  %3725 = vmatpush.bf16.msra.mxu0 0
  %3726 = vmatpush.bf16.msra.mxu0 0
  %3727 = vmatpush.bf16.msra.mxu0 0
  %3728 = vmatpush.bf16.msra.mxu0 0
  %3729 = vmatpush.bf16.msra.mxu0 %v3622
  %3730 = vmatpush.bf16.msra.mxu0 %v3614
  %3731 = vmatpush.bf16.msra.mxu0 %v3606
  %3732 = vmatpush.bf16.msra.mxu0 %v3598
  %3733 = vmatmul.bf16.gmra.mxu0 %v3658
  %v3734 = vpop.f32.mrf.mxu0
  %v3735 = vadd.f32 %v3486, %v3734
  %v3736 = vpop.f32.mrf.mxu0
  %3737 = vdwg.mxu0
  %3738 = vmatpush.bf16.msra.mxu0 0
  %3739 = vmatpush.bf16.msra.mxu0 0
  %3740 = vmatpush.bf16.msra.mxu0 0
  %3741 = vmatpush.bf16.msra.mxu0 0
  %3742 = vmatpush.bf16.msra.mxu0 %v3623
  %3743 = vmatpush.bf16.msra.mxu0 %v3615
  %3744 = vmatpush.bf16.msra.mxu0 %v3607
  %3745 = vmatpush.bf16.msra.mxu0 %v3599
  %3746 = vmatmul.bf16.gmra.mxu0 %v3658
  %v3747 = vpop.f32.mrf.mxu0
  %v3748 = vadd.f32 %v3487, %v3747
  %v3749 = vpop.f32.mrf.mxu0
  %3750 = vdwg.mxu0
  %3751 = vmatpush.bf16.msra.mxu0 0
  %3752 = vmatpush.bf16.msra.mxu0 0
  %3753 = vmatpush.bf16.msra.mxu0 0
  %3754 = vmatpush.bf16.msra.mxu0 0
  %3755 = vmatpush.bf16.msra.mxu0 %v3624
  %3756 = vmatpush.bf16.msra.mxu0 %v3616
  %3757 = vmatpush.bf16.msra.mxu0 %v3608
  %3758 = vmatpush.bf16.msra.mxu0 %v3600
  %3759 = vmatmul.bf16.gmra.mxu0 %v3658
  %v3760 = vpop.f32.mrf.mxu0
  %v3761 = vadd.f32 %v3488, %v3760
  %v3762 = vpop.f32.mrf.mxu0
  %3763 = vdwg.mxu0
  %v3764 = vmax.f32 %v3670, 0.0
  %v3765 = vmax.f32 %v3683, 0.0
  %v3766 = vmax.f32 %v3696, 0.0
  %v3767 = vmax.f32 %v3709, 0.0
  %v3768 = vmax.f32 %v3722, 0.0
  %v3769 = vmax.f32 %v3735, 0.0
  %v3770 = vmax.f32 %v3748, 0.0
  %v3771 = vmax.f32 %v3761, 0.0
  %v3772 = vpack.c.bf16 %v3764, %v3764
  %v3773 = vpack.c.bf16 %v3765, %v3765
  %v3774 = vpack.c.bf16 %v3766, %v3766
  %v3775 = vpack.c.bf16 %v3767, %v3767
  %v3776 = vpack.c.bf16 %v3768, %v3768
  %v3777 = vpack.c.bf16 %v3769, %v3769
  %v3778 = vpack.c.bf16 %v3770, %v3770
  %v3779 = vpack.c.bf16 %v3771, %v3771
  %v3780 = vld [vmem:[%s12] sm:$0xff]
  %v3781 = vld [vmem:[%s12 + $0x8] sm:$0xff]
  %v3782 = vld [vmem:[%s12 + $0x10] sm:$0xff]
  %v3783 = vld [vmem:[%s12 + $0x18] sm:$0xff]
  %v3784 = vld [vmem:[%s12 + $0x20] sm:$0xff]
  %v3785 = vld [vmem:[%s12 + $0x28] sm:$0xff]
  %v3786 = vld [vmem:[%s12 + $0x30] sm:$0xff]
  %v3787 = vld [vmem:[%s12 + $0x38] sm:$0xff]
  %v3788 = vld [vmem:[%s12 + $0x40] sm:$0xff]
  %v3789 = vld [vmem:[%s12 + $0x48] sm:$0xff]
  %v3790 = vld [vmem:[%s12 + $0x50] sm:$0xff]
  %v3791 = vld [vmem:[%s12 + $0x58] sm:$0xff]
  %v3792 = vld [vmem:[%s12 + $0x60] sm:$0xff]
  %v3793 = vld [vmem:[%s12 + $0x68] sm:$0xff]
  %v3794 = vld [vmem:[%s12 + $0x70] sm:$0xff]
  %v3795 = vld [vmem:[%s12 + $0x78] sm:$0xff]
  %v3796 = vld [vmem:[%s12 + $0x80] sm:$0xff]
  %v3797 = vld [vmem:[%s12 + $0x88] sm:$0xff]
  %v3798 = vld [vmem:[%s12 + $0x90] sm:$0xff]
  %v3799 = vld [vmem:[%s12 + $0x98] sm:$0xff]
  %v3800 = vld [vmem:[%s12 + $0xa0] sm:$0xff]
  %v3801 = vld [vmem:[%s12 + $0xa8] sm:$0xff]
  %v3802 = vld [vmem:[%s12 + $0xb0] sm:$0xff]
  %v3803 = vld [vmem:[%s12 + $0xb8] sm:$0xff]
  %v3804 = vld [vmem:[%s12 + $0xc0] sm:$0xff]
  %v3805 = vld [vmem:[%s12 + $0xc8] sm:$0xff]
  %v3806 = vld [vmem:[%s12 + $0xd0] sm:$0xff]
  %v3807 = vld [vmem:[%s12 + $0xd8] sm:$0xff]
  %v3808 = vld [vmem:[%s12 + $0xe0] sm:$0xff]
  %v3809 = vld [vmem:[%s12 + $0xe8] sm:$0xff]
  %v3810 = vld [vmem:[%s12 + $0xf0] sm:$0xff]
  %v3811 = vld [vmem:[%s12 + $0xf8] sm:$0xff]
  %v3812 = vld [vmem:[%s12 + $0x100] sm:$0xff]
  %v3813 = vld [vmem:[%s12 + $0x108] sm:$0xff]
  %v3814 = vld [vmem:[%s12 + $0x110] sm:$0xff]
  %v3815 = vld [vmem:[%s12 + $0x118] sm:$0xff]
  %v3816 = vld [vmem:[%s12 + $0x120] sm:$0xff]
  %v3817 = vld [vmem:[%s12 + $0x128] sm:$0xff]
  %v3818 = vld [vmem:[%s12 + $0x130] sm:$0xff]
  %v3819 = vld [vmem:[%s12 + $0x138] sm:$0xff]
  %v3820 = vld [vmem:[%s12 + $0x140] sm:$0xff]
  %v3821 = vld [vmem:[%s12 + $0x148] sm:$0xff]
  %v3822 = vld [vmem:[%s12 + $0x150] sm:$0xff]
  %v3823 = vld [vmem:[%s12 + $0x158] sm:$0xff]
  %v3824 = vld [vmem:[%s12 + $0x160] sm:$0xff]
  %v3825 = vld [vmem:[%s12 + $0x168] sm:$0xff]
  %v3826 = vld [vmem:[%s12 + $0x170] sm:$0xff]
  %v3827 = vld [vmem:[%s12 + $0x178] sm:$0xff]
  %v3828 = vld [vmem:[%s12 + $0x180] sm:$0xff]
  %v3829 = vld [vmem:[%s12 + $0x188] sm:$0xff]
  %v3830 = vld [vmem:[%s12 + $0x190] sm:$0xff]
  %v3831 = vld [vmem:[%s12 + $0x198] sm:$0xff]
  %v3832 = vld [vmem:[%s12 + $0x1a0] sm:$0xff]
  %v3833 = vld [vmem:[%s12 + $0x1a8] sm:$0xff]
  %v3834 = vld [vmem:[%s12 + $0x1b0] sm:$0xff]
  %v3835 = vld [vmem:[%s12 + $0x1b8] sm:$0xff]
  %v3836 = vld [vmem:[%s12 + $0x1c0] sm:$0xff]
  %v3837 = vld [vmem:[%s12 + $0x1c8] sm:$0xff]
  %v3838 = vld [vmem:[%s12 + $0x1d0] sm:$0xff]
  %v3839 = vld [vmem:[%s12 + $0x1d8] sm:$0xff]
  %v3840 = vld [vmem:[%s12 + $0x1e0] sm:$0xff]
  %v3841 = vld [vmem:[%s12 + $0x1e8] sm:$0xff]
  %v3842 = vld [vmem:[%s12 + $0x1f0] sm:$0xff]
  %v3843 = vld [vmem:[%s12 + $0x1f8] sm:$0xff]
  %v3844 = vld [vmem:[%s12 + $0x200] sm:$0xff]
  %v3845 = vld [vmem:[%s12 + $0x208] sm:$0xff]
  %v3846 = vld [vmem:[%s12 + $0x210] sm:$0xff]
  %v3847 = vld [vmem:[%s12 + $0x218] sm:$0xff]
  %v3848 = vld [vmem:[%s12 + $0x220] sm:$0xff]
  %v3849 = vld [vmem:[%s12 + $0x228] sm:$0xff]
  %v3850 = vld [vmem:[%s12 + $0x230] sm:$0xff]
  %v3851 = vld [vmem:[%s12 + $0x238] sm:$0xff]
  %v3852 = vld [vmem:[%s12 + $0x240] sm:$0xff]
  %v3853 = vld [vmem:[%s12 + $0x248] sm:$0xff]
  %v3854 = vld [vmem:[%s12 + $0x250] sm:$0xff]
  %v3855 = vld [vmem:[%s12 + $0x258] sm:$0xff]
  %v3856 = vld [vmem:[%s12 + $0x260] sm:$0xff]
  %v3857 = vld [vmem:[%s12 + $0x268] sm:$0xff]
  %v3858 = vld [vmem:[%s12 + $0x270] sm:$0xff]
  %v3859 = vld [vmem:[%s12 + $0x278] sm:$0xff]
  %v3860 = vld [vmem:[%s12 + $0x280] sm:$0xff]
  %v3861 = vld [vmem:[%s12 + $0x288] sm:$0xff]
  %v3862 = vld [vmem:[%s12 + $0x290] sm:$0xff]
  %v3863 = vld [vmem:[%s12 + $0x298] sm:$0xff]
  %v3864 = vld [vmem:[%s12 + $0x2a0] sm:$0xff]
  %v3865 = vld [vmem:[%s12 + $0x2a8] sm:$0xff]
  %v3866 = vld [vmem:[%s12 + $0x2b0] sm:$0xff]
  %v3867 = vld [vmem:[%s12 + $0x2b8] sm:$0xff]
  %v3868 = vld [vmem:[%s12 + $0x2c0] sm:$0xff]
  %v3869 = vld [vmem:[%s12 + $0x2c8] sm:$0xff]
  %v3870 = vld [vmem:[%s12 + $0x2d0] sm:$0xff]
  %v3871 = vld [vmem:[%s12 + $0x2d8] sm:$0xff]
  %v3872 = vld [vmem:[%s12 + $0x2e0] sm:$0xff]
  %v3873 = vld [vmem:[%s12 + $0x2e8] sm:$0xff]
  %v3874 = vld [vmem:[%s12 + $0x2f0] sm:$0xff]
  %v3875 = vld [vmem:[%s12 + $0x2f8] sm:$0xff]
  %v3876 = vld [vmem:[%s12 + $0x300] sm:$0xff]
  %v3877 = vld [vmem:[%s12 + $0x308] sm:$0xff]
  %v3878 = vld [vmem:[%s12 + $0x310] sm:$0xff]
  %v3879 = vld [vmem:[%s12 + $0x318] sm:$0xff]
  %v3880 = vld [vmem:[%s12 + $0x320] sm:$0xff]
  %v3881 = vld [vmem:[%s12 + $0x328] sm:$0xff]
  %v3882 = vld [vmem:[%s12 + $0x330] sm:$0xff]
  %v3883 = vld [vmem:[%s12 + $0x338] sm:$0xff]
  %v3884 = vld [vmem:[%s12 + $0x340] sm:$0xff]
  %v3885 = vld [vmem:[%s12 + $0x348] sm:$0xff]
  %v3886 = vld [vmem:[%s12 + $0x350] sm:$0xff]
  %v3887 = vld [vmem:[%s12 + $0x358] sm:$0xff]
  %v3888 = vld [vmem:[%s12 + $0x360] sm:$0xff]
  %v3889 = vld [vmem:[%s12 + $0x368] sm:$0xff]
  %v3890 = vld [vmem:[%s12 + $0x370] sm:$0xff]
  %v3891 = vld [vmem:[%s12 + $0x378] sm:$0xff]
  %v3892 = vld [vmem:[%s12 + $0x380] sm:$0xff]
  %v3893 = vld [vmem:[%s12 + $0x388] sm:$0xff]
  %v3894 = vld [vmem:[%s12 + $0x390] sm:$0xff]
  %v3895 = vld [vmem:[%s12 + $0x398] sm:$0xff]
  %v3896 = vld [vmem:[%s12 + $0x3a0] sm:$0xff]
  %v3897 = vld [vmem:[%s12 + $0x3a8] sm:$0xff]
  %v3898 = vld [vmem:[%s12 + $0x3b0] sm:$0xff]
  %v3899 = vld [vmem:[%s12 + $0x3b8] sm:$0xff]
  %v3900 = vld [vmem:[%s12 + $0x3c0] sm:$0xff]
  %v3901 = vld [vmem:[%s12 + $0x3c8] sm:$0xff]
  %v3902 = vld [vmem:[%s12 + $0x3d0] sm:$0xff]
  %v3903 = vld [vmem:[%s12 + $0x3d8] sm:$0xff]
  %v3904 = vld [vmem:[%s12 + $0x3e0] sm:$0xff]
  %v3905 = vld [vmem:[%s12 + $0x3e8] sm:$0xff]
  %v3906 = vld [vmem:[%s12 + $0x3f0] sm:$0xff]
  %v3907 = vld [vmem:[%s12 + $0x3f8] sm:$0xff]
  %v3908 = vld [vmem:[%s13] sm:$0x3]
  %v3910 = vperm.slane %v3908, 0
  %v3911 = vperm.slane %v3908, 1
  %v4042 = vunpack.c.l.b16 %v3780
  %v4043 = vunpack.c.h.b16 %v3780
  %v4044 = vunpack.c.l.b16 %v3781
  %v4045 = vunpack.c.h.b16 %v3781
  %v4046 = vunpack.c.l.b16 %v3782
  %v4047 = vunpack.c.h.b16 %v3782
  %v4048 = vunpack.c.l.b16 %v3783
  %v4049 = vunpack.c.h.b16 %v3783
  %v4050 = vunpack.c.l.b16 %v3784
  %v4051 = vunpack.c.h.b16 %v3784
  %v4052 = vunpack.c.l.b16 %v3785
  %v4053 = vunpack.c.h.b16 %v3785
  %v4054 = vunpack.c.l.b16 %v3786
  %v4055 = vunpack.c.h.b16 %v3786
  %v4056 = vunpack.c.l.b16 %v3787
  %v4057 = vunpack.c.h.b16 %v3787
  %v4058 = vunpack.c.l.b16 %v3788
  %v4059 = vunpack.c.h.b16 %v3788
  %v4060 = vunpack.c.l.b16 %v3789
  %v4061 = vunpack.c.h.b16 %v3789
  %v4062 = vunpack.c.l.b16 %v3790
  %v4063 = vunpack.c.h.b16 %v3790
  %v4064 = vunpack.c.l.b16 %v3791
  %v4065 = vunpack.c.h.b16 %v3791
  %v4066 = vunpack.c.l.b16 %v3792
  %v4067 = vunpack.c.h.b16 %v3792
  %v4068 = vunpack.c.l.b16 %v3793
  %v4069 = vunpack.c.h.b16 %v3793
  %v4070 = vunpack.c.l.b16 %v3794
  %v4071 = vunpack.c.h.b16 %v3794
  %v4072 = vunpack.c.l.b16 %v3795
  %v4073 = vunpack.c.h.b16 %v3795
  %v4074 = vunpack.c.l.b16 %v3796
  %v4075 = vunpack.c.h.b16 %v3796
  %v4076 = vunpack.c.l.b16 %v3797
  %v4077 = vunpack.c.h.b16 %v3797
  %v4078 = vunpack.c.l.b16 %v3798
  %v4079 = vunpack.c.h.b16 %v3798
  %v4080 = vunpack.c.l.b16 %v3799
  %v4081 = vunpack.c.h.b16 %v3799
  %v4082 = vunpack.c.l.b16 %v3800
  %v4083 = vunpack.c.h.b16 %v3800
  %v4084 = vunpack.c.l.b16 %v3801
  %v4085 = vunpack.c.h.b16 %v3801
  %v4086 = vunpack.c.l.b16 %v3802
  %v4087 = vunpack.c.h.b16 %v3802
  %v4088 = vunpack.c.l.b16 %v3803
  %v4089 = vunpack.c.h.b16 %v3803
  %v4090 = vunpack.c.l.b16 %v3804
  %v4091 = vunpack.c.h.b16 %v3804
  %v4092 = vunpack.c.l.b16 %v3805
  %v4093 = vunpack.c.h.b16 %v3805
  %v4094 = vunpack.c.l.b16 %v3806
  %v4095 = vunpack.c.h.b16 %v3806
  %v4096 = vunpack.c.l.b16 %v3807
  %v4097 = vunpack.c.h.b16 %v3807
  %v4098 = vunpack.c.l.b16 %v3808
  %v4099 = vunpack.c.h.b16 %v3808
  %v4100 = vunpack.c.l.b16 %v3809
  %v4101 = vunpack.c.h.b16 %v3809
  %v4102 = vunpack.c.l.b16 %v3810
  %v4103 = vunpack.c.h.b16 %v3810
  %v4104 = vunpack.c.l.b16 %v3811
  %v4105 = vunpack.c.h.b16 %v3811
  %v4106 = vunpack.c.l.b16 %v3812
  %v4107 = vunpack.c.h.b16 %v3812
  %v4108 = vunpack.c.l.b16 %v3813
  %v4109 = vunpack.c.h.b16 %v3813
  %v4110 = vunpack.c.l.b16 %v3814
  %v4111 = vunpack.c.h.b16 %v3814
  %v4112 = vunpack.c.l.b16 %v3815
  %v4113 = vunpack.c.h.b16 %v3815
  %v4114 = vunpack.c.l.b16 %v3816
  %v4115 = vunpack.c.h.b16 %v3816
  %v4116 = vunpack.c.l.b16 %v3817
  %v4117 = vunpack.c.h.b16 %v3817
  %v4118 = vunpack.c.l.b16 %v3818
  %v4119 = vunpack.c.h.b16 %v3818
  %v4120 = vunpack.c.l.b16 %v3819
  %v4121 = vunpack.c.h.b16 %v3819
  %v4122 = vunpack.c.l.b16 %v3820
  %v4123 = vunpack.c.h.b16 %v3820
  %v4124 = vunpack.c.l.b16 %v3821
  %v4125 = vunpack.c.h.b16 %v3821
  %v4126 = vunpack.c.l.b16 %v3822
  %v4127 = vunpack.c.h.b16 %v3822
  %v4128 = vunpack.c.l.b16 %v3823
  %v4129 = vunpack.c.h.b16 %v3823
  %v4130 = vunpack.c.l.b16 %v3824
  %v4131 = vunpack.c.h.b16 %v3824
  %v4132 = vunpack.c.l.b16 %v3825
  %v4133 = vunpack.c.h.b16 %v3825
  %v4134 = vunpack.c.l.b16 %v3826
  %v4135 = vunpack.c.h.b16 %v3826
  %v4136 = vunpack.c.l.b16 %v3827
  %v4137 = vunpack.c.h.b16 %v3827
  %v4138 = vunpack.c.l.b16 %v3828
  %v4139 = vunpack.c.h.b16 %v3828
  %v4140 = vunpack.c.l.b16 %v3829
  %v4141 = vunpack.c.h.b16 %v3829
  %v4142 = vunpack.c.l.b16 %v3830
  %v4143 = vunpack.c.h.b16 %v3830
  %v4144 = vunpack.c.l.b16 %v3831
  %v4145 = vunpack.c.h.b16 %v3831
  %v4146 = vunpack.c.l.b16 %v3832
  %v4147 = vunpack.c.h.b16 %v3832
  %v4148 = vunpack.c.l.b16 %v3833
  %v4149 = vunpack.c.h.b16 %v3833
  %v4150 = vunpack.c.l.b16 %v3834
  %v4151 = vunpack.c.h.b16 %v3834
  %v4152 = vunpack.c.l.b16 %v3835
  %v4153 = vunpack.c.h.b16 %v3835
  %v4154 = vunpack.c.l.b16 %v3836
  %v4155 = vunpack.c.h.b16 %v3836
  %v4156 = vunpack.c.l.b16 %v3837
  %v4157 = vunpack.c.h.b16 %v3837
  %v4158 = vunpack.c.l.b16 %v3838
  %v4159 = vunpack.c.h.b16 %v3838
  %v4160 = vunpack.c.l.b16 %v3839
  %v4161 = vunpack.c.h.b16 %v3839
  %v4162 = vunpack.c.l.b16 %v3840
  %v4163 = vunpack.c.h.b16 %v3840
  %v4164 = vunpack.c.l.b16 %v3841
  %v4165 = vunpack.c.h.b16 %v3841
  %v4166 = vunpack.c.l.b16 %v3842
  %v4167 = vunpack.c.h.b16 %v3842
  %v4168 = vunpack.c.l.b16 %v3843
  %v4169 = vunpack.c.h.b16 %v3843
  %v4170 = vunpack.c.l.b16 %v3844
  %v4171 = vunpack.c.h.b16 %v3844
  %v4172 = vunpack.c.l.b16 %v3845
  %v4173 = vunpack.c.h.b16 %v3845
  %v4174 = vunpack.c.l.b16 %v3846
  %v4175 = vunpack.c.h.b16 %v3846
  %v4176 = vunpack.c.l.b16 %v3847
  %v4177 = vunpack.c.h.b16 %v3847
  %v4178 = vunpack.c.l.b16 %v3848
  %v4179 = vunpack.c.h.b16 %v3848
  %v4180 = vunpack.c.l.b16 %v3849
  %v4181 = vunpack.c.h.b16 %v3849
  %v4182 = vunpack.c.l.b16 %v3850
  %v4183 = vunpack.c.h.b16 %v3850
  %v4184 = vunpack.c.l.b16 %v3851
  %v4185 = vunpack.c.h.b16 %v3851
  %v4186 = vunpack.c.l.b16 %v3852
  %v4187 = vunpack.c.h.b16 %v3852
  %v4188 = vunpack.c.l.b16 %v3853
  %v4189 = vunpack.c.h.b16 %v3853
  %v4190 = vunpack.c.l.b16 %v3854
  %v4191 = vunpack.c.h.b16 %v3854
  %v4192 = vunpack.c.l.b16 %v3855
  %v4193 = vunpack.c.h.b16 %v3855
  %v4194 = vunpack.c.l.b16 %v3856
  %v4195 = vunpack.c.h.b16 %v3856
  %v4196 = vunpack.c.l.b16 %v3857
  %v4197 = vunpack.c.h.b16 %v3857
  %v4198 = vunpack.c.l.b16 %v3858
  %v4199 = vunpack.c.h.b16 %v3858
  %v4200 = vunpack.c.l.b16 %v3859
  %v4201 = vunpack.c.h.b16 %v3859
  %v4202 = vunpack.c.l.b16 %v3860
  %v4203 = vunpack.c.h.b16 %v3860
  %v4204 = vunpack.c.l.b16 %v3861
  %v4205 = vunpack.c.h.b16 %v3861
  %v4206 = vunpack.c.l.b16 %v3862
  %v4207 = vunpack.c.h.b16 %v3862
  %v4208 = vunpack.c.l.b16 %v3863
  %v4209 = vunpack.c.h.b16 %v3863
  %v4210 = vunpack.c.l.b16 %v3864
  %v4211 = vunpack.c.h.b16 %v3864
  %v4212 = vunpack.c.l.b16 %v3865
  %v4213 = vunpack.c.h.b16 %v3865
  %v4214 = vunpack.c.l.b16 %v3866
  %v4215 = vunpack.c.h.b16 %v3866
  %v4216 = vunpack.c.l.b16 %v3867
  %v4217 = vunpack.c.h.b16 %v3867
  %v4218 = vunpack.c.l.b16 %v3868
  %v4219 = vunpack.c.h.b16 %v3868
  %v4220 = vunpack.c.l.b16 %v3869
  %v4221 = vunpack.c.h.b16 %v3869
  %v4222 = vunpack.c.l.b16 %v3870
  %v4223 = vunpack.c.h.b16 %v3870
  %v4224 = vunpack.c.l.b16 %v3871
  %v4225 = vunpack.c.h.b16 %v3871
  %v4226 = vunpack.c.l.b16 %v3872
  %v4227 = vunpack.c.h.b16 %v3872
  %v4228 = vunpack.c.l.b16 %v3873
  %v4229 = vunpack.c.h.b16 %v3873
  %v4230 = vunpack.c.l.b16 %v3874
  %v4231 = vunpack.c.h.b16 %v3874
  %v4232 = vunpack.c.l.b16 %v3875
  %v4233 = vunpack.c.h.b16 %v3875
  %v4234 = vunpack.c.l.b16 %v3876
  %v4235 = vunpack.c.h.b16 %v3876
  %v4236 = vunpack.c.l.b16 %v3877
  %v4237 = vunpack.c.h.b16 %v3877
  %v4238 = vunpack.c.l.b16 %v3878
  %v4239 = vunpack.c.h.b16 %v3878
  %v4240 = vunpack.c.l.b16 %v3879
  %v4241 = vunpack.c.h.b16 %v3879
  %v4242 = vunpack.c.l.b16 %v3880
  %v4243 = vunpack.c.h.b16 %v3880
  %v4244 = vunpack.c.l.b16 %v3881
  %v4245 = vunpack.c.h.b16 %v3881
  %v4246 = vunpack.c.l.b16 %v3882
  %v4247 = vunpack.c.h.b16 %v3882
  %v4248 = vunpack.c.l.b16 %v3883
  %v4249 = vunpack.c.h.b16 %v3883
  %v4250 = vunpack.c.l.b16 %v3884
  %v4251 = vunpack.c.h.b16 %v3884
  %v4252 = vunpack.c.l.b16 %v3885
  %v4253 = vunpack.c.h.b16 %v3885
  %v4254 = vunpack.c.l.b16 %v3886
  %v4255 = vunpack.c.h.b16 %v3886
  %v4256 = vunpack.c.l.b16 %v3887
  %v4257 = vunpack.c.h.b16 %v3887
  %v4258 = vunpack.c.l.b16 %v3888
  %v4259 = vunpack.c.h.b16 %v3888
  %v4260 = vunpack.c.l.b16 %v3889
  %v4261 = vunpack.c.h.b16 %v3889
  %v4262 = vunpack.c.l.b16 %v3890
  %v4263 = vunpack.c.h.b16 %v3890
  %v4264 = vunpack.c.l.b16 %v3891
  %v4265 = vunpack.c.h.b16 %v3891
  %v4266 = vunpack.c.l.b16 %v3892
  %v4267 = vunpack.c.h.b16 %v3892
  %v4268 = vunpack.c.l.b16 %v3893
  %v4269 = vunpack.c.h.b16 %v3893
  %v4270 = vunpack.c.l.b16 %v3894
  %v4271 = vunpack.c.h.b16 %v3894
  %v4272 = vunpack.c.l.b16 %v3895
  %v4273 = vunpack.c.h.b16 %v3895
  %v4274 = vunpack.c.l.b16 %v3896
  %v4275 = vunpack.c.h.b16 %v3896
  %v4276 = vunpack.c.l.b16 %v3897
  %v4277 = vunpack.c.h.b16 %v3897
  %v4278 = vunpack.c.l.b16 %v3898
  %v4279 = vunpack.c.h.b16 %v3898
  %v4280 = vunpack.c.l.b16 %v3899
  %v4281 = vunpack.c.h.b16 %v3899
  %v4282 = vunpack.c.l.b16 %v3900
  %v4283 = vunpack.c.h.b16 %v3900
  %v4284 = vunpack.c.l.b16 %v3901
  %v4285 = vunpack.c.h.b16 %v3901
  %v4286 = vunpack.c.l.b16 %v3902
  %v4287 = vunpack.c.h.b16 %v3902
  %v4288 = vunpack.c.l.b16 %v3903
  %v4289 = vunpack.c.h.b16 %v3903
  %v4290 = vunpack.c.l.b16 %v3904
  %v4291 = vunpack.c.h.b16 %v3904
  %v4292 = vunpack.c.l.b16 %v3905
  %v4293 = vunpack.c.h.b16 %v3905
  %v4294 = vunpack.c.l.b16 %v3906
  %v4295 = vunpack.c.h.b16 %v3906
  %v4296 = vunpack.c.l.b16 %v3907
  %v4297 = vunpack.c.h.b16 %v3907
  %v4298 = vpack.c.b16 %v4044, %v4042
  %v4299 = vpack.c.b16 %v4045, %v4043
  %v4300 = vpack.c.b16 %v4048, %v4046
  %v4301 = vpack.c.b16 %v4049, %v4047
  %v4302 = vpack.c.b16 %v4052, %v4050
  %v4303 = vpack.c.b16 %v4053, %v4051
  %v4304 = vpack.c.b16 %v4056, %v4054
  %v4305 = vpack.c.b16 %v4057, %v4055
  %v4306 = vpack.c.b16 %v4060, %v4058
  %v4307 = vpack.c.b16 %v4061, %v4059
  %v4308 = vpack.c.b16 %v4064, %v4062
  %v4309 = vpack.c.b16 %v4065, %v4063
  %v4310 = vpack.c.b16 %v4068, %v4066
  %v4311 = vpack.c.b16 %v4069, %v4067
  %v4312 = vpack.c.b16 %v4072, %v4070
  %v4313 = vpack.c.b16 %v4073, %v4071
  %v4314 = vpack.c.b16 %v4076, %v4074
  %v4315 = vpack.c.b16 %v4077, %v4075
  %v4316 = vpack.c.b16 %v4080, %v4078
  %v4317 = vpack.c.b16 %v4081, %v4079
  %v4318 = vpack.c.b16 %v4084, %v4082
  %v4319 = vpack.c.b16 %v4085, %v4083
  %v4320 = vpack.c.b16 %v4088, %v4086
  %v4321 = vpack.c.b16 %v4089, %v4087
  %v4322 = vpack.c.b16 %v4092, %v4090
  %v4323 = vpack.c.b16 %v4093, %v4091
  %v4324 = vpack.c.b16 %v4096, %v4094
  %v4325 = vpack.c.b16 %v4097, %v4095
  %v4326 = vpack.c.b16 %v4100, %v4098
  %v4327 = vpack.c.b16 %v4101, %v4099
  %v4328 = vpack.c.b16 %v4104, %v4102
  %v4329 = vpack.c.b16 %v4105, %v4103
  %v4330 = vpack.c.b16 %v4108, %v4106
  %v4331 = vpack.c.b16 %v4109, %v4107
  %v4332 = vpack.c.b16 %v4112, %v4110
  %v4333 = vpack.c.b16 %v4113, %v4111
  %v4334 = vpack.c.b16 %v4116, %v4114
  %v4335 = vpack.c.b16 %v4117, %v4115
  %v4336 = vpack.c.b16 %v4120, %v4118
  %v4337 = vpack.c.b16 %v4121, %v4119
  %v4338 = vpack.c.b16 %v4124, %v4122
  %v4339 = vpack.c.b16 %v4125, %v4123
  %v4340 = vpack.c.b16 %v4128, %v4126
  %v4341 = vpack.c.b16 %v4129, %v4127
  %v4342 = vpack.c.b16 %v4132, %v4130
  %v4343 = vpack.c.b16 %v4133, %v4131
  %v4344 = vpack.c.b16 %v4136, %v4134
  %v4345 = vpack.c.b16 %v4137, %v4135
  %v4346 = vpack.c.b16 %v4140, %v4138
  %v4347 = vpack.c.b16 %v4141, %v4139
  %v4348 = vpack.c.b16 %v4144, %v4142
  %v4349 = vpack.c.b16 %v4145, %v4143
  %v4350 = vpack.c.b16 %v4148, %v4146
  %v4351 = vpack.c.b16 %v4149, %v4147
  %v4352 = vpack.c.b16 %v4152, %v4150
  %v4353 = vpack.c.b16 %v4153, %v4151
  %v4354 = vpack.c.b16 %v4156, %v4154
  %v4355 = vpack.c.b16 %v4157, %v4155
  %v4356 = vpack.c.b16 %v4160, %v4158
  %v4357 = vpack.c.b16 %v4161, %v4159
  %v4358 = vpack.c.b16 %v4164, %v4162
  %v4359 = vpack.c.b16 %v4165, %v4163
  %v4360 = vpack.c.b16 %v4168, %v4166
  %v4361 = vpack.c.b16 %v4169, %v4167
  %v4362 = vpack.c.b16 %v4172, %v4170
  %v4363 = vpack.c.b16 %v4173, %v4171
  %v4364 = vpack.c.b16 %v4176, %v4174
  %v4365 = vpack.c.b16 %v4177, %v4175
  %v4366 = vpack.c.b16 %v4180, %v4178
  %v4367 = vpack.c.b16 %v4181, %v4179
  %v4368 = vpack.c.b16 %v4184, %v4182
  %v4369 = vpack.c.b16 %v4185, %v4183
  %v4370 = vpack.c.b16 %v4188, %v4186
  %v4371 = vpack.c.b16 %v4189, %v4187
  %v4372 = vpack.c.b16 %v4192, %v4190
  %v4373 = vpack.c.b16 %v4193, %v4191
  %v4374 = vpack.c.b16 %v4196, %v4194
  %v4375 = vpack.c.b16 %v4197, %v4195
  %v4376 = vpack.c.b16 %v4200, %v4198
  %v4377 = vpack.c.b16 %v4201, %v4199
  %v4378 = vpack.c.b16 %v4204, %v4202
  %v4379 = vpack.c.b16 %v4205, %v4203
  %v4380 = vpack.c.b16 %v4208, %v4206
  %v4381 = vpack.c.b16 %v4209, %v4207
  %v4382 = vpack.c.b16 %v4212, %v4210
  %v4383 = vpack.c.b16 %v4213, %v4211
  %v4384 = vpack.c.b16 %v4216, %v4214
  %v4385 = vpack.c.b16 %v4217, %v4215
  %v4386 = vpack.c.b16 %v4220, %v4218
  %v4387 = vpack.c.b16 %v4221, %v4219
  %v4388 = vpack.c.b16 %v4224, %v4222
  %v4389 = vpack.c.b16 %v4225, %v4223
  %v4390 = vpack.c.b16 %v4228, %v4226
  %v4391 = vpack.c.b16 %v4229, %v4227
  %v4392 = vpack.c.b16 %v4232, %v4230
  %v4393 = vpack.c.b16 %v4233, %v4231
  %v4394 = vpack.c.b16 %v4236, %v4234
  %v4395 = vpack.c.b16 %v4237, %v4235
  %v4396 = vpack.c.b16 %v4240, %v4238
  %v4397 = vpack.c.b16 %v4241, %v4239
  %v4398 = vpack.c.b16 %v4244, %v4242
  %v4399 = vpack.c.b16 %v4245, %v4243
  %v4400 = vpack.c.b16 %v4248, %v4246
  %v4401 = vpack.c.b16 %v4249, %v4247
  %v4402 = vpack.c.b16 %v4252, %v4250
  %v4403 = vpack.c.b16 %v4253, %v4251
  %v4404 = vpack.c.b16 %v4256, %v4254
  %v4405 = vpack.c.b16 %v4257, %v4255
  %v4406 = vpack.c.b16 %v4260, %v4258
  %v4407 = vpack.c.b16 %v4261, %v4259
  %v4408 = vpack.c.b16 %v4264, %v4262
  %v4409 = vpack.c.b16 %v4265, %v4263
  %v4410 = vpack.c.b16 %v4268, %v4266
  %v4411 = vpack.c.b16 %v4269, %v4267
  %v4412 = vpack.c.b16 %v4272, %v4270
  %v4413 = vpack.c.b16 %v4273, %v4271
  %v4414 = vpack.c.b16 %v4276, %v4274
  %v4415 = vpack.c.b16 %v4277, %v4275
  %v4416 = vpack.c.b16 %v4280, %v4278
  %v4417 = vpack.c.b16 %v4281, %v4279
  %v4418 = vpack.c.b16 %v4284, %v4282
  %v4419 = vpack.c.b16 %v4285, %v4283
  %v4420 = vpack.c.b16 %v4288, %v4286
  %v4421 = vpack.c.b16 %v4289, %v4287
  %v4422 = vpack.c.b16 %v4292, %v4290
  %v4423 = vpack.c.b16 %v4293, %v4291
  %v4424 = vpack.c.b16 %v4296, %v4294
  %v4425 = vpack.c.b16 %v4297, %v4295
  %4554 = vmatpush.bf16.msra.mxu0 %v4312
  %4555 = vmatpush.bf16.msra.mxu0 %v4310
  %4556 = vmatpush.bf16.msra.mxu0 %v4308
  %4557 = vmatpush.bf16.msra.mxu0 %v4306
  %4558 = vmatpush.bf16.msra.mxu0 %v4304
  %4559 = vmatpush.bf16.msra.mxu0 %v4302
  %4560 = vmatpush.bf16.msra.mxu0 %v4300
  %4561 = vmatpush.bf16.msra.mxu0 %v4298
  %4562 = vmatmul.bf16.gmra.mxu0 %v3772
  %v4563 = vpop.f32.mrf.mxu0
  %v4564 = vadd.f32 %v3910, %v4563
  %v4565 = vpop.f32.mrf.mxu0
  %4566 = vdwg.mxu0
  %4567 = vmatpush.bf16.msra.mxu0 %v4328
  %4568 = vmatpush.bf16.msra.mxu0 %v4326
  %4569 = vmatpush.bf16.msra.mxu0 %v4324
  %4570 = vmatpush.bf16.msra.mxu0 %v4322
  %4571 = vmatpush.bf16.msra.mxu0 %v4320
  %4572 = vmatpush.bf16.msra.mxu0 %v4318
  %4573 = vmatpush.bf16.msra.mxu0 %v4316
  %4574 = vmatpush.bf16.msra.mxu0 %v4314
  %4575 = vmatmul.bf16.gmra.mxu0 %v3773
  %v4576 = vpop.f32.mrf.mxu0
  %v4577 = vadd.f32 %v4564, %v4576
  %v4578 = vpop.f32.mrf.mxu0
  %4579 = vdwg.mxu0
  %4580 = vmatpush.bf16.msra.mxu0 %v4344
  %4581 = vmatpush.bf16.msra.mxu0 %v4342
  %4582 = vmatpush.bf16.msra.mxu0 %v4340
  %4583 = vmatpush.bf16.msra.mxu0 %v4338
  %4584 = vmatpush.bf16.msra.mxu0 %v4336
  %4585 = vmatpush.bf16.msra.mxu0 %v4334
  %4586 = vmatpush.bf16.msra.mxu0 %v4332
  %4587 = vmatpush.bf16.msra.mxu0 %v4330
  %4588 = vmatmul.bf16.gmra.mxu0 %v3774
  %v4589 = vpop.f32.mrf.mxu0
  %v4590 = vadd.f32 %v4577, %v4589
  %v4591 = vpop.f32.mrf.mxu0
  %4592 = vdwg.mxu0
  %4593 = vmatpush.bf16.msra.mxu0 %v4360
  %4594 = vmatpush.bf16.msra.mxu0 %v4358
  %4595 = vmatpush.bf16.msra.mxu0 %v4356
  %4596 = vmatpush.bf16.msra.mxu0 %v4354
  %4597 = vmatpush.bf16.msra.mxu0 %v4352
  %4598 = vmatpush.bf16.msra.mxu0 %v4350
  %4599 = vmatpush.bf16.msra.mxu0 %v4348
  %4600 = vmatpush.bf16.msra.mxu0 %v4346
  %4601 = vmatmul.bf16.gmra.mxu0 %v3775
  %v4602 = vpop.f32.mrf.mxu0
  %v4603 = vadd.f32 %v4590, %v4602
  %v4604 = vpop.f32.mrf.mxu0
  %4605 = vdwg.mxu0
  %4606 = vmatpush.bf16.msra.mxu0 %v4376
  %4607 = vmatpush.bf16.msra.mxu0 %v4374
  %4608 = vmatpush.bf16.msra.mxu0 %v4372
  %4609 = vmatpush.bf16.msra.mxu0 %v4370
  %4610 = vmatpush.bf16.msra.mxu0 %v4368
  %4611 = vmatpush.bf16.msra.mxu0 %v4366
  %4612 = vmatpush.bf16.msra.mxu0 %v4364
  %4613 = vmatpush.bf16.msra.mxu0 %v4362
  %4614 = vmatmul.bf16.gmra.mxu0 %v3776
  %v4615 = vpop.f32.mrf.mxu0
  %v4616 = vadd.f32 %v4603, %v4615
  %v4617 = vpop.f32.mrf.mxu0
  %4618 = vdwg.mxu0
  %4619 = vmatpush.bf16.msra.mxu0 %v4392
  %4620 = vmatpush.bf16.msra.mxu0 %v4390
  %4621 = vmatpush.bf16.msra.mxu0 %v4388
  %4622 = vmatpush.bf16.msra.mxu0 %v4386
  %4623 = vmatpush.bf16.msra.mxu0 %v4384
  %4624 = vmatpush.bf16.msra.mxu0 %v4382
  %4625 = vmatpush.bf16.msra.mxu0 %v4380
  %4626 = vmatpush.bf16.msra.mxu0 %v4378
  %4627 = vmatmul.bf16.gmra.mxu0 %v3777
  %v4628 = vpop.f32.mrf.mxu0
  %v4629 = vadd.f32 %v4616, %v4628
  %v4630 = vpop.f32.mrf.mxu0
  %4631 = vdwg.mxu0
  %4632 = vmatpush.bf16.msra.mxu0 %v4408
  %4633 = vmatpush.bf16.msra.mxu0 %v4406
  %4634 = vmatpush.bf16.msra.mxu0 %v4404
  %4635 = vmatpush.bf16.msra.mxu0 %v4402
  %4636 = vmatpush.bf16.msra.mxu0 %v4400
  %4637 = vmatpush.bf16.msra.mxu0 %v4398
  %4638 = vmatpush.bf16.msra.mxu0 %v4396
  %4639 = vmatpush.bf16.msra.mxu0 %v4394
  %4640 = vmatmul.bf16.gmra.mxu0 %v3778
  %v4641 = vpop.f32.mrf.mxu0
  %v4642 = vadd.f32 %v4629, %v4641
  %v4643 = vpop.f32.mrf.mxu0
  %4644 = vdwg.mxu0
  %4645 = vmatpush.bf16.msra.mxu0 %v4424
  %4646 = vmatpush.bf16.msra.mxu0 %v4422
  %4647 = vmatpush.bf16.msra.mxu0 %v4420
  %4648 = vmatpush.bf16.msra.mxu0 %v4418
  %4649 = vmatpush.bf16.msra.mxu0 %v4416
  %4650 = vmatpush.bf16.msra.mxu0 %v4414
  %4651 = vmatpush.bf16.msra.mxu0 %v4412
  %4652 = vmatpush.bf16.msra.mxu0 %v4410
  %4653 = vmatmul.bf16.gmra.mxu0 %v3779
  %v4654 = vpop.f32.mrf.mxu0
  %v4655 = vadd.f32 %v4642, %v4654
  %v4656 = vpop.f32.mrf.mxu0
  %4657 = vdwg.mxu0
  %4658 = vmatpush.bf16.msra.mxu0 %v4313
  %4659 = vmatpush.bf16.msra.mxu0 %v4311
  %4660 = vmatpush.bf16.msra.mxu0 %v4309
  %4661 = vmatpush.bf16.msra.mxu0 %v4307
  %4662 = vmatpush.bf16.msra.mxu0 %v4305
  %4663 = vmatpush.bf16.msra.mxu0 %v4303
  %4664 = vmatpush.bf16.msra.mxu0 %v4301
  %4665 = vmatpush.bf16.msra.mxu0 %v4299
  %4666 = vmatmul.bf16.gmra.mxu0 %v3772
  %v4667 = vpop.f32.mrf.mxu0
  %v4668 = vadd.f32 %v3911, %v4667
  %v4669 = vpop.f32.mrf.mxu0
  %4670 = vdwg.mxu0
  %4671 = vmatpush.bf16.msra.mxu0 %v4329
  %4672 = vmatpush.bf16.msra.mxu0 %v4327
  %4673 = vmatpush.bf16.msra.mxu0 %v4325
  %4674 = vmatpush.bf16.msra.mxu0 %v4323
  %4675 = vmatpush.bf16.msra.mxu0 %v4321
  %4676 = vmatpush.bf16.msra.mxu0 %v4319
  %4677 = vmatpush.bf16.msra.mxu0 %v4317
  %4678 = vmatpush.bf16.msra.mxu0 %v4315
  %4679 = vmatmul.bf16.gmra.mxu0 %v3773
  %v4680 = vpop.f32.mrf.mxu0
  %v4681 = vadd.f32 %v4668, %v4680
  %v4682 = vpop.f32.mrf.mxu0
  %4683 = vdwg.mxu0
  %4684 = vmatpush.bf16.msra.mxu0 %v4345
  %4685 = vmatpush.bf16.msra.mxu0 %v4343
  %4686 = vmatpush.bf16.msra.mxu0 %v4341
  %4687 = vmatpush.bf16.msra.mxu0 %v4339
  %4688 = vmatpush.bf16.msra.mxu0 %v4337
  %4689 = vmatpush.bf16.msra.mxu0 %v4335
  %4690 = vmatpush.bf16.msra.mxu0 %v4333
  %4691 = vmatpush.bf16.msra.mxu0 %v4331
  %4692 = vmatmul.bf16.gmra.mxu0 %v3774
  %v4693 = vpop.f32.mrf.mxu0
  %v4694 = vadd.f32 %v4681, %v4693
  %v4695 = vpop.f32.mrf.mxu0
  %4696 = vdwg.mxu0
  %4697 = vmatpush.bf16.msra.mxu0 %v4361
  %4698 = vmatpush.bf16.msra.mxu0 %v4359
  %4699 = vmatpush.bf16.msra.mxu0 %v4357
  %4700 = vmatpush.bf16.msra.mxu0 %v4355
  %4701 = vmatpush.bf16.msra.mxu0 %v4353
  %4702 = vmatpush.bf16.msra.mxu0 %v4351
  %4703 = vmatpush.bf16.msra.mxu0 %v4349
  %4704 = vmatpush.bf16.msra.mxu0 %v4347
  %4705 = vmatmul.bf16.gmra.mxu0 %v3775
  %v4706 = vpop.f32.mrf.mxu0
  %v4707 = vadd.f32 %v4694, %v4706
  %v4708 = vpop.f32.mrf.mxu0
  %4709 = vdwg.mxu0
  %4710 = vmatpush.bf16.msra.mxu0 %v4377
  %4711 = vmatpush.bf16.msra.mxu0 %v4375
  %4712 = vmatpush.bf16.msra.mxu0 %v4373
  %4713 = vmatpush.bf16.msra.mxu0 %v4371
  %4714 = vmatpush.bf16.msra.mxu0 %v4369
  %4715 = vmatpush.bf16.msra.mxu0 %v4367
  %4716 = vmatpush.bf16.msra.mxu0 %v4365
  %4717 = vmatpush.bf16.msra.mxu0 %v4363
  %4718 = vmatmul.bf16.gmra.mxu0 %v3776
  %v4719 = vpop.f32.mrf.mxu0
  %v4720 = vadd.f32 %v4707, %v4719
  %v4721 = vpop.f32.mrf.mxu0
  %4722 = vdwg.mxu0
  %4723 = vmatpush.bf16.msra.mxu0 %v4393
  %4724 = vmatpush.bf16.msra.mxu0 %v4391
  %4725 = vmatpush.bf16.msra.mxu0 %v4389
  %4726 = vmatpush.bf16.msra.mxu0 %v4387
  %4727 = vmatpush.bf16.msra.mxu0 %v4385
  %4728 = vmatpush.bf16.msra.mxu0 %v4383
  %4729 = vmatpush.bf16.msra.mxu0 %v4381
  %4730 = vmatpush.bf16.msra.mxu0 %v4379
  %4731 = vmatmul.bf16.gmra.mxu0 %v3777
  %v4732 = vpop.f32.mrf.mxu0
  %v4733 = vadd.f32 %v4720, %v4732
  %v4734 = vpop.f32.mrf.mxu0
  %4735 = vdwg.mxu0
  %4736 = vmatpush.bf16.msra.mxu0 %v4409
  %4737 = vmatpush.bf16.msra.mxu0 %v4407
  %4738 = vmatpush.bf16.msra.mxu0 %v4405
  %4739 = vmatpush.bf16.msra.mxu0 %v4403
  %4740 = vmatpush.bf16.msra.mxu0 %v4401
  %4741 = vmatpush.bf16.msra.mxu0 %v4399
  %4742 = vmatpush.bf16.msra.mxu0 %v4397
  %4743 = vmatpush.bf16.msra.mxu0 %v4395
  %4744 = vmatmul.bf16.gmra.mxu0 %v3778
  %v4745 = vpop.f32.mrf.mxu0
  %v4746 = vadd.f32 %v4733, %v4745
  %v4747 = vpop.f32.mrf.mxu0
  %4748 = vdwg.mxu0
  %4749 = vmatpush.bf16.msra.mxu0 %v4425
  %4750 = vmatpush.bf16.msra.mxu0 %v4423
  %4751 = vmatpush.bf16.msra.mxu0 %v4421
  %4752 = vmatpush.bf16.msra.mxu0 %v4419
  %4753 = vmatpush.bf16.msra.mxu0 %v4417
  %4754 = vmatpush.bf16.msra.mxu0 %v4415
  %4755 = vmatpush.bf16.msra.mxu0 %v4413
  %4756 = vmatpush.bf16.msra.mxu0 %v4411
  %4757 = vmatmul.bf16.gmra.mxu0 %v3779
  %v4758 = vpop.f32.mrf.mxu0
  %v4759 = vadd.f32 %v4746, %v4758
  %v4760 = vpop.f32.mrf.mxu0
  %4761 = vdwg.mxu0
  %vm4762 = vcmask 1041408
  %v4763 = vsel %vm4762, %v4655, -inf
  %4764 = vmax.xlane.f32.xlu0 %v4763
  %v4765 = vpop.xlane.xlu0 %4764
  %v4766 = vsub.f32 %v4655, %v4765
  %v4767 = vmul.f32 %v4766, 1.442695
  %v4768 = vpow.pop %v4767
  %v4769 = vsel %vm4762, %v4768, 0.0
  %4770 = vadd.xlane.f32.xlu0 %v4769
  %v4771 = vpop.xlane.xlu0 %4770
  %v4772 = vrcp.pop %v4771
  %v4773 = vmul.f32 %v4771, %v4772
  %v4774 = vsub.f32 1.0, %v4773
  %v4775 = vmul.f32 %v4772, %v4774
  %v4776 = vadd.f32 %v4772, %v4775
  %vm4777 = vweird.f32 %v4771
  %vm4778 = vweird.f32 %v4772
  %vm4779 = vmor %vm4777, %vm4778
  %v4780 = vsel %vm4779, %v4772, %v4776
  %v4781 = vand.u32 2147483647, %v4771
  %vm4782 = vcmp.eq.f32.partialorder %v4781, 8.507059e+37
  %v4783 = vand.u32 %v4771, 2147483648
  %v4784 = vor.u32 1.1754944e-38, %v4783
  %v4785 = vsel %vm4782, %v4784, %v4780
  %v4786 = vmul.f32 %v4768, %v4785
  %v4789 = vrot.slane %v4759, 6
  %v4790 = vsel %vm4762, %v4786, %v4789
  %4792 = vst [vmem:[%s14] sm:$0xf] %v4790
  // Predicated region
  $region58: #{actor_critic_forward.1} parent=0 // pred_check
    _
  $region59: #{actor_critic_forward.1} parent=0 // pred_check_branch
    %4794 = sbr.rel (0) target = $region61
  $region60: #{actor_critic_forward.1} parent=0 // pred_region
    _
  $region61: #{actor_critic_forward.1} parent=0 // pred_fallthru
    _
  // Predicated region
  $region62: #{actor_critic_forward.1} parent=0 // pred_check
    _
  $region63: #{actor_critic_forward.1} parent=0 // pred_check_branch
    %4796 = sbr.rel (0) target = $region65
  $region64: #{actor_critic_forward.1} parent=0 // pred_region
    _
  $region65: #{actor_critic_forward.1} parent=0 // pred_fallthru
    _

</llo_original>
